<compile_context>
chip_gen: v7x
topology: tpu7x:2x2x1
jax: 0.10.0
libtpu: 0.0.40
codegen_flags: <defaults>
</compile_context>

<pallas_src>
import functools

import jax
import jax.numpy as jnp
from jax import lax
from jax.experimental import pallas as pl
from jax.experimental.pallas import tpu as pltpu

EPS = 1e-5


def _round_up(n, m):
    return ((n + m - 1) // m) * m


def _const_spec(shape):
    """BlockSpec for an operand that is whole-array resident across all tiles."""
    nd = len(shape)
    return pl.BlockSpec(shape, lambda i: (0,) * nd)


# ----------------------------- kernels --------------------------------------


def _fc_relu(a, w_ref, b_ref):
    """relu(a @ W + b): bf16 operands on the MXU, f32 accumulate/elementwise."""
    h = jnp.dot(a.astype(jnp.bfloat16), w_ref[...],
                preferred_element_type=jnp.float32) + b_ref[...]
    return jnp.maximum(h, 0.0)


def _emit_stats(h, sum_ref, ssq_ref, i, tm, batch, masked):
    """Per-tile (sum, sum_sq) over valid rows of h -> sum_ref/ssq_ref (1,1,C)."""

    def write(hm):
        sum_ref[0] = jnp.sum(hm, axis=0, keepdims=True)
        ssq_ref[0] = jnp.sum(hm * hm, axis=0, keepdims=True)

    if masked:
        last = pl.num_programs(0) - 1

        @pl.when(i == last)
        def _():  # only the last tile contains padded rows
            row = i * tm + lax.broadcasted_iota(jnp.int32, (h.shape[0], 1), 0)
            write(jnp.where(row < batch, h, 0.0))

        @pl.when(i != last)
        def _():
            write(h)
    else:
        write(h)


def _stats1_kernel(x_ref, w1_ref, b1_ref, sum_ref, ssq_ref, *, tm, batch, masked):
    """h1 = relu(x @ W1 + b1); emit BN1 per-tile stats (h1 not written to HBM)."""
    i = pl.program_id(0)
    h1 = _fc_relu(x_ref[...], w1_ref, b1_ref)
    _emit_stats(h1, sum_ref, ssq_ref, i, tm, batch, masked)


def _stats2_kernel(x_ref, w1_ref, b1_ref, w2_ref, b2_ref, sum_ref, ssq_ref,
                   *, tm, batch, masked):
    """Recompute h1, then h2 = relu(h1 @ W2' + b2') with BN1 folded into W2'/b2';
    emit BN2 per-tile stats (h2 not written to HBM)."""
    i = pl.program_id(0)
    h1 = _fc_relu(x_ref[...], w1_ref, b1_ref)
    h2 = _fc_relu(h1, w2_ref, b2_ref)
    _emit_stats(h2, sum_ref, ssq_ref, i, tm, batch, masked)


def _out_kernel(x_ref, w1_ref, b1_ref, w2_ref, b2_ref, w3_ref, b3_ref, o_ref):
    """Recompute h1, h2; out = sigmoid(h2 @ W3' + b3') with BN2 folded.
    W3'/b3' are 128-lane padded for the MXU; only the first a_dim columns are
    stored to the narrow output block."""
    h1 = _fc_relu(x_ref[...], w1_ref, b1_ref)
    h2 = _fc_relu(h1, w2_ref, b2_ref)
    y = jnp.dot(h2.astype(jnp.bfloat16), w3_ref[...],
                preferred_element_type=jnp.float32) + b3_ref[...]
    o_ref[...] = jax.nn.sigmoid(y[:, : o_ref.shape[1]])


# ----------------------------- wrapper ---------------------------------------


def _bn_fold(sum_tiles, ssq_tiles, batch, w_next, b_next):
    """Combine per-tile stats; fold BN (gamma=1, beta=0) into the next layer.

    Returns (w_scaled_bf16, b_adj_f32):
      w_scaled = diag(1/std) @ w_next      (rows scaled)
      b_adj    = b_next - (mean/std) @ w_next
    """
    s = jnp.sum(sum_tiles[:, 0, :], axis=0)                 # (C,)
    ss = jnp.sum(ssq_tiles[:, 0, :], axis=0)                 # (C,)
    mean = s / batch
    var = jnp.maximum(ss / batch - mean * mean, 0.0)         # biased; clamp
    inv = lax.rsqrt(var + EPS)
    w_scaled = (w_next * inv[:, None]).astype(jnp.bfloat16)
    b_adj = (b_next - (mean * inv)[None, :] @ w_next).astype(jnp.float32)
    return w_scaled, b_adj


def anet_forward(x, params, *, tm=1024):
    """x: (B, s_dim) float32. params: w1,b1,w2,b2,w3,b3; weights stored (in, out),
    biases (1, out)."""
    B, s_dim = x.shape
    a_dim = params["w3"].shape[1]

    # Tile: multiple of 8, never larger than the batch; for larger batches cap
    # it so there are >= 2 tiles (both v7x TensorCores get work).
    tm = max(8, _round_up(min(tm, B), 8))
    if B >= 512:
        tm = min(tm, _round_up((B + 1) // 2, 8))
    Bp = _round_up(B, tm)
    T = Bp // tm
    masked = Bp != B
    if masked:
        x = jnp.pad(x, ((0, Bp - B), (0, 0)))

    # bf16 weights for the MXU (activations are cast at the dot in-kernel).
    w1b = params["w1"].astype(jnp.bfloat16)
    b1 = params["b1"]

    cparams = pltpu.CompilerParams(dimension_semantics=("parallel",))
    x_spec = pl.BlockSpec((tm, s_dim), lambda i: (i, 0))

    def stats_out(c):
        return (
            (pl.BlockSpec((1, 1, c), lambda i: (i, 0, 0)),
             pl.BlockSpec((1, 1, c), lambda i: (i, 0, 0))),
            (jax.ShapeDtypeStruct((T, 1, c), jnp.float32),
             jax.ShapeDtypeStruct((T, 1, c), jnp.float32)),
        )

    # ---- phase 1: fc1 + relu -> BN1 stats -----------------------------------
    specs1, shapes1 = stats_out(128)
    sum1, ssq1 = pl.pallas_call(
        functools.partial(_stats1_kernel, tm=tm, batch=B, masked=masked),
        grid=(T,),
        in_specs=[x_spec, _const_spec((s_dim, 128)), _const_spec((1, 128))],
        out_specs=specs1,
        out_shape=shapes1,
        compiler_params=cparams,
    )(x, w1b, b1)

    # Fold BN1 into fc2.
    w2s, b2a = _bn_fold(sum1, ssq1, B, params["w2"], params["b2"])

    # ---- phase 2: fc1 -> fc2(+fold1) + relu -> BN2 stats ---------------------
    specs2, shapes2 = stats_out(256)
    sum2, ssq2 = pl.pallas_call(
        functools.partial(_stats2_kernel, tm=tm, batch=B, masked=masked),
        grid=(T,),
        in_specs=[x_spec,
                  _const_spec((s_dim, 128)), _const_spec((1, 128)),
                  _const_spec((128, 256)), _const_spec((1, 256))],
        out_specs=specs2,
        out_shape=shapes2,
        compiler_params=cparams,
    )(x, w1b, b1, w2s, b2a)

    # Fold BN2 into fc3; pad fc3 operands to a 128-lane MXU tile.
    w3s, b3a = _bn_fold(sum2, ssq2, B, params["w3"], params["b3"])
    Np = _round_up(a_dim, 128)
    if Np != a_dim:
        w3s = jnp.pad(w3s, ((0, 0), (0, Np - a_dim)))
        b3a = jnp.pad(b3a, ((0, 0), (0, Np - a_dim)))

    # ---- phase 3: fc1 -> fc2 -> fc3(+fold2) + sigmoid, narrow output --------
    out_p = pl.pallas_call(
        _out_kernel,
        grid=(T,),
        in_specs=[x_spec,
                  _const_spec((s_dim, 128)), _const_spec((1, 128)),
                  _const_spec((128, 256)), _const_spec((1, 256)),
                  _const_spec((256, Np)), _const_spec((1, Np))],
        out_specs=pl.BlockSpec((tm, a_dim), lambda i: (i, 0)),
        out_shape=jax.ShapeDtypeStruct((Bp, a_dim), jnp.float32),
        compiler_params=cparams,
    )(x, w1b, b1, w2s, b2a, w3s, b3a)

    return out_p[:B]


# ----------------------------- init & reference ------------------------------


def init_params(key, s_dim, a_dim):
    """Shapes/init matching the PyTorch module (weights ~ N(0, 0.1),
    Linear-default uniform biases). Weights stored pre-transposed (in, out)."""
    ks = jax.random.split(key, 6)

    def w(k, fan_in, fan_out):
        return (0.1 * jax.random.normal(k, (fan_in, fan_out))).astype(jnp.float32)

    def b(k, fan_in, fan_out):
        bound = 1.0 / jnp.sqrt(fan_in)
        return jax.random.uniform(
            k, (1, fan_out), minval=-bound, maxval=bound
        ).astype(jnp.float32)

    return {
        "w1": w(ks[0], s_dim, 128), "b1": b(ks[1], s_dim, 128),
        "w2": w(ks[2], 128, 256),   "b2": b(ks[3], 128, 256),
        "w3": w(ks[4], 256, a_dim), "b3": b(ks[5], 256, a_dim),
    }


def anet_reference(x, params):
    """Pure-JAX reference replicating the kernels' bf16-dot / folded-BN math."""
    def dot_bf16(a, b):
        return jnp.dot(a.astype(jnp.bfloat16), b.astype(jnp.bfloat16),
                       preferred_element_type=jnp.float32)

    h1 = jnp.maximum(dot_bf16(x, params["w1"]) + params["b1"], 0.0)
    m1 = jnp.mean(h1, axis=0)
    v1 = jnp.maximum(jnp.mean(h1 * h1, axis=0) - m1 * m1, 0.0)
    i1 = lax.rsqrt(v1 + EPS)
    w2s = (params["w2"] * i1[:, None]).astype(jnp.bfloat16)
    b2a = params["b2"] - (m1 * i1)[None, :] @ params["w2"]
    h2 = jnp.maximum(
        jnp.dot(h1.astype(jnp.bfloat16), w2s, preferred_element_type=jnp.float32)
        + b2a, 0.0)

    m2 = jnp.mean(h2, axis=0)
    v2 = jnp.maximum(jnp.mean(h2 * h2, axis=0) - m2 * m2, 0.0)
    i2 = lax.rsqrt(v2 + EPS)
    w3s = (params["w3"] * i2[:, None]).astype(jnp.bfloat16)
    b3a = params["b3"] - (m2 * i2)[None, :] @ params["w3"]
    y = jnp.dot(h2.astype(jnp.bfloat16), w3s, preferred_element_type=jnp.float32) + b3a
    return jax.nn.sigmoid(y)


if __name__ == "__main__":
    # Small demo shapes (B not a multiple of the tile -> exercises masking,
    # two tiles -> exercises the grid / last-tile masking path).
    B, s_dim, a_dim = 200, 16, 4

    key = jax.random.PRNGKey(0)
    k_x, k_p = jax.random.split(key)
    x = jax.random.normal(k_x, (B, s_dim), dtype=jnp.float32)
    params = init_params(k_p, s_dim, a_dim)

    fwd = jax.jit(functools.partial(anet_forward, tm=128))  # small tile for demo
    out = jax.block_until_ready(fwd(x, params))

    ref = anet_reference(x, params)
    assert out.shape == (B, a_dim)
    assert float(jnp.max(jnp.abs(out - ref))) < 2e-3
    print("KERNEL_OK")
</pallas_src>

<mosaic_0001>
module attributes {stable_mosaic.version = 11 : i64} {
  func.func @_stats1_kernel(%arg0: i32, %arg1: memref<128x16xf32, #tpu.memory_space<vmem>>, %arg2: memref<16x128xbf16, #tpu.memory_space<vmem>>, %arg3: memref<1x128xf32, #tpu.memory_space<vmem>>, %arg4: memref<1x1x128xf32, #tpu.memory_space<vmem>>, %arg5: memref<1x1x128xf32, #tpu.memory_space<vmem>>) attributes {dimension_semantics = [#tpu.dimension_semantics<parallel>], iteration_bounds = array<i64: 2>, scalar_prefetch = 0 : i64, scratch_operands = 0 : i64, tpu.core_type = #tpu.core_type<tc>, window_params = [{transform_indices = @transform_0, window_bounds = array<i64: 128, 16>}, {pipeline_mode = #tpu.pipeline_mode<synchronous>, transform_indices = @transform_1, window_bounds = array<i64: 16, 128>}, {pipeline_mode = #tpu.pipeline_mode<synchronous>, transform_indices = @transform_2, window_bounds = array<i64: 1, 128>}, {transform_indices = @transform_3, window_bounds = array<i64: 1, 1, 128>}, {transform_indices = @transform_4, window_bounds = array<i64: 1, 1, 128>}]} {
    %c0 = arith.constant 0 : index
    %c0_0 = arith.constant 0 : index
    %0 = vector.load %arg1[%c0, %c0_0] : memref<128x16xf32, #tpu.memory_space<vmem>>, vector<128x16xf32>
    %1 = arith.truncf %0 : vector<128x16xf32> to vector<128x16xbf16>
    %c0_1 = arith.constant 0 : index
    %c0_2 = arith.constant 0 : index
    %2 = vector.load %arg2[%c0_1, %c0_2] : memref<16x128xbf16, #tpu.memory_space<vmem>>, vector<16x128xbf16>
    %cst = arith.constant dense<0.000000e+00> : vector<128x128xf32>
    %3 = tpu.matmul %1, %2, %cst {dimension_numbers = #tpu.dot_dimension_numbers<[1], [0], [0], [1], [0, 0, 1, 1], [], []>} : vector<128x16xbf16>, vector<16x128xbf16>, vector<128x128xf32> -> vector<128x128xf32>
    %c0_3 = arith.constant 0 : index
    %c0_4 = arith.constant 0 : index
    %4 = vector.load %arg3[%c0_3, %c0_4] : memref<1x128xf32, #tpu.memory_space<vmem>>, vector<1x128xf32>
    %5 = vector.broadcast %4 : vector<1x128xf32> to vector<128x128xf32>
    %6 = arith.addf %3, %5 : vector<128x128xf32>
    %cst_5 = arith.constant 0.000000e+00 : f32
    %7 = vector.broadcast %cst_5 : f32 to vector<128x128xf32>
    %8 = arith.maximumf %6, %7 : vector<128x128xf32>
    %c1_i32 = arith.constant 1 : i32
    %9 = arith.cmpi eq, %arg0, %c1_i32 : i32
    %10 = arith.extui %9 : i1 to i32
    %c0_i32 = arith.constant 0 : i32
    %11 = arith.cmpi ne, %10, %c0_i32 : i32
    scf.if %11 {
      %c128_i32 = arith.constant 128 : i32
      %15 = arith.muli %arg0, %c128_i32 : i32
      %16 = tpu.iota {dimensions = array<i32: 0>} : vector<128x1xi32>
      %17 = vector.broadcast %15 : i32 to vector<128x1xi32>
      %18 = arith.addi %17, %16 : vector<128x1xi32>
      %c200_i32 = arith.constant 200 : i32
      %19 = vector.broadcast %c200_i32 : i32 to vector<128x1xi32>
      %20 = arith.cmpi slt, %18, %19 : vector<128x1xi32>
      %cst_8 = arith.constant 0.000000e+00 : f32
      %21 = vector.shape_cast %20 : vector<128x1xi1> to vector<128x1xi1>
      %22 = vector.broadcast %21 : vector<128x1xi1> to vector<128x128xi1>
      %23 = vector.broadcast %cst_8 : f32 to vector<128x128xf32>
      %24 = arith.select %22, %8, %23 : vector<128x128xi1>, vector<128x128xf32>
      %cst_9 = arith.constant dense<0.000000e+00> : vector<128xf32>
      %25 = vector.multi_reduction <add>, %24, %cst_9 [0] : vector<128x128xf32> to vector<128xf32>
      %26 = vector.shape_cast %25 : vector<128xf32> to vector<1x128xf32>
      %c0_10 = arith.constant 0 : index
      %c0_11 = arith.constant 0 : index
      %c0_12 = arith.constant 0 : index
      %27 = vector.load %arg4[%c0_10, %c0_11, %c0_12] : memref<1x1x128xf32, #tpu.memory_space<vmem>>, vector<1x1x128xf32>
      %28 = vector.shape_cast %27 : vector<1x1x128xf32> to vector<1x128xf32>
      %29 = vector.shape_cast %26 : vector<1x128xf32> to vector<1x1x128xf32>
      tpu.vector_store %arg4[%c0_10, %c0_11, %c0_12], %29 {strides = array<i32>} : memref<1x1x128xf32, #tpu.memory_space<vmem>>, vector<1x1x128xf32>,
      %30 = arith.mulf %24, %24 : vector<128x128xf32>
      %cst_13 = arith.constant dense<0.000000e+00> : vector<128xf32>
      %31 = vector.multi_reduction <add>, %30, %cst_13 [0] : vector<128x128xf32> to vector<128xf32>
      %32 = vector.shape_cast %31 : vector<128xf32> to vector<1x128xf32>
      %c0_14 = arith.constant 0 : index
      %c0_15 = arith.constant 0 : index
      %c0_16 = arith.constant 0 : index
      %33 = vector.load %arg5[%c0_14, %c0_15, %c0_16] : memref<1x1x128xf32, #tpu.memory_space<vmem>>, vector<1x1x128xf32>
      %34 = vector.shape_cast %33 : vector<1x1x128xf32> to vector<1x128xf32>
      %35 = vector.shape_cast %32 : vector<1x128xf32> to vector<1x1x128xf32>
      tpu.vector_store %arg5[%c0_14, %c0_15, %c0_16], %35 {strides = array<i32>} : memref<1x1x128xf32, #tpu.memory_space<vmem>>, vector<1x1x128xf32>,
    } else {
    }
    %c1_i32_6 = arith.constant 1 : i32
    %12 = arith.cmpi ne, %arg0, %c1_i32_6 : i32
    %13 = arith.extui %12 : i1 to i32
    %c0_i32_7 = arith.constant 0 : i32
    %14 = arith.cmpi ne, %13, %c0_i32_7 : i32
    scf.if %14 {
      %cst_8 = arith.constant dense<0.000000e+00> : vector<128xf32>
      %15 = vector.multi_reduction <add>, %8, %cst_8 [0] : vector<128x128xf32> to vector<128xf32>
      %16 = vector.shape_cast %15 : vector<128xf32> to vector<1x128xf32>
      %c0_9 = arith.constant 0 : index
      %c0_10 = arith.constant 0 : index
      %c0_11 = arith.constant 0 : index
      %17 = vector.load %arg4[%c0_9, %c0_10, %c0_11] : memref<1x1x128xf32, #tpu.memory_space<vmem>>, vector<1x1x128xf32>
      %18 = vector.shape_cast %17 : vector<1x1x128xf32> to vector<1x128xf32>
      %19 = vector.shape_cast %16 : vector<1x128xf32> to vector<1x1x128xf32>
      tpu.vector_store %arg4[%c0_9, %c0_10, %c0_11], %19 {strides = array<i32>} : memref<1x1x128xf32, #tpu.memory_space<vmem>>, vector<1x1x128xf32>,
      %20 = arith.mulf %8, %8 : vector<128x128xf32>
      %cst_12 = arith.constant dense<0.000000e+00> : vector<128xf32>
      %21 = vector.multi_reduction <add>, %20, %cst_12 [0] : vector<128x128xf32> to vector<128xf32>
      %22 = vector.shape_cast %21 : vector<128xf32> to vector<1x128xf32>
      %c0_13 = arith.constant 0 : index
      %c0_14 = arith.constant 0 : index
      %c0_15 = arith.constant 0 : index
      %23 = vector.load %arg5[%c0_13, %c0_14, %c0_15] : memref<1x1x128xf32, #tpu.memory_space<vmem>>, vector<1x1x128xf32>
      %24 = vector.shape_cast %23 : vector<1x1x128xf32> to vector<1x128xf32>
      %25 = vector.shape_cast %22 : vector<1x128xf32> to vector<1x1x128xf32>
      tpu.vector_store %arg5[%c0_13, %c0_14, %c0_15], %25 {strides = array<i32>} : memref<1x1x128xf32, #tpu.memory_space<vmem>>, vector<1x1x128xf32>,
    } else {
    }
    return
  }
  func.func @transform_0(%arg0: i32) -> (i32, i32) {
    %c0_i32 = arith.constant 0 : i32
    %c0_i32_0 = arith.constant 0 : i32
    return %arg0, %c0_i32 : i32, i32
  }
  func.func @transform_1(%arg0: i32) -> (i32, i32) {
    %c0_i32 = arith.constant 0 : i32
    %c0_i32_0 = arith.constant 0 : i32
    %c0_i32_1 = arith.constant 0 : i32
    return %c0_i32, %c0_i32_0 : i32, i32
  }
  func.func @transform_2(%arg0: i32) -> (i32, i32) {
    %c0_i32 = arith.constant 0 : i32
    %c0_i32_0 = arith.constant 0 : i32
    %c0_i32_1 = arith.constant 0 : i32
    return %c0_i32, %c0_i32_0 : i32, i32
  }
  func.func @transform_3(%arg0: i32) -> (i32, i32, i32) {
    %c0_i32 = arith.constant 0 : i32
    %c0_i32_0 = arith.constant 0 : i32
    %c0_i32_1 = arith.constant 0 : i32
    return %arg0, %c0_i32, %c0_i32_0 : i32, i32, i32
  }
  func.func @transform_4(%arg0: i32) -> (i32, i32, i32) {
    %c0_i32 = arith.constant 0 : i32
    %c0_i32_0 = arith.constant 0 : i32
    %c0_i32_1 = arith.constant 0 : i32
    return %arg0, %c0_i32, %c0_i32_0 : i32, i32, i32
  }
}

module attributes {stable_mosaic.version = 11 : i64} {
  func.func @_stats2_kernel(%arg0: i32, %arg1: memref<128x16xf32, #tpu.memory_space<vmem>>, %arg2: memref<16x128xbf16, #tpu.memory_space<vmem>>, %arg3: memref<1x128xf32, #tpu.memory_space<vmem>>, %arg4: memref<128x256xbf16, #tpu.memory_space<vmem>>, %arg5: memref<1x256xf32, #tpu.memory_space<vmem>>, %arg6: memref<1x1x256xf32, #tpu.memory_space<vmem>>, %arg7: memref<1x1x256xf32, #tpu.memory_space<vmem>>) attributes {dimension_semantics = [#tpu.dimension_semantics<parallel>], iteration_bounds = array<i64: 2>, scalar_prefetch = 0 : i64, scratch_operands = 0 : i64, tpu.core_type = #tpu.core_type<tc>, window_params = [{transform_indices = @transform_0, window_bounds = array<i64: 128, 16>}, {pipeline_mode = #tpu.pipeline_mode<synchronous>, transform_indices = @transform_1, window_bounds = array<i64: 16, 128>}, {pipeline_mode = #tpu.pipeline_mode<synchronous>, transform_indices = @transform_2, window_bounds = array<i64: 1, 128>}, {pipeline_mode = #tpu.pipeline_mode<synchronous>, transform_indices = @transform_3, window_bounds = array<i64: 128, 256>}, {pipeline_mode = #tpu.pipeline_mode<synchronous>, transform_indices = @transform_4, window_bounds = array<i64: 1, 256>}, {transform_indices = @transform_5, window_bounds = array<i64: 1, 1, 256>}, {transform_indices = @transform_6, window_bounds = array<i64: 1, 1, 256>}]} {
    %c0 = arith.constant 0 : index
    %c0_0 = arith.constant 0 : index
    %0 = vector.load %arg1[%c0, %c0_0] : memref<128x16xf32, #tpu.memory_space<vmem>>, vector<128x16xf32>
    %1 = arith.truncf %0 : vector<128x16xf32> to vector<128x16xbf16>
    %c0_1 = arith.constant 0 : index
    %c0_2 = arith.constant 0 : index
    %2 = vector.load %arg2[%c0_1, %c0_2] : memref<16x128xbf16, #tpu.memory_space<vmem>>, vector<16x128xbf16>
    %cst = arith.constant dense<0.000000e+00> : vector<128x128xf32>
    %3 = tpu.matmul %1, %2, %cst {dimension_numbers = #tpu.dot_dimension_numbers<[1], [0], [0], [1], [0, 0, 1, 1], [], []>} : vector<128x16xbf16>, vector<16x128xbf16>, vector<128x128xf32> -> vector<128x128xf32>
    %c0_3 = arith.constant 0 : index
    %c0_4 = arith.constant 0 : index
    %4 = vector.load %arg3[%c0_3, %c0_4] : memref<1x128xf32, #tpu.memory_space<vmem>>, vector<1x128xf32>
    %5 = vector.broadcast %4 : vector<1x128xf32> to vector<128x128xf32>
    %6 = arith.addf %3, %5 : vector<128x128xf32>
    %cst_5 = arith.constant 0.000000e+00 : f32
    %7 = vector.broadcast %cst_5 : f32 to vector<128x128xf32>
    %8 = arith.maximumf %6, %7 : vector<128x128xf32>
    %9 = arith.truncf %8 : vector<128x128xf32> to vector<128x128xbf16>
    %c0_6 = arith.constant 0 : index
    %c0_7 = arith.constant 0 : index
    %10 = vector.load %arg4[%c0_6, %c0_7] : memref<128x256xbf16, #tpu.memory_space<vmem>>, vector<128x256xbf16>
    %cst_8 = arith.constant dense<0.000000e+00> : vector<128x256xf32>
    %11 = tpu.matmul %9, %10, %cst_8 {dimension_numbers = #tpu.dot_dimension_numbers<[1], [0], [0], [1], [0, 0, 1, 1], [], []>} : vector<128x128xbf16>, vector<128x256xbf16>, vector<128x256xf32> -> vector<128x256xf32>
    %c0_9 = arith.constant 0 : index
    %c0_10 = arith.constant 0 : index
    %12 = vector.load %arg5[%c0_9, %c0_10] : memref<1x256xf32, #tpu.memory_space<vmem>>, vector<1x256xf32>
    %13 = vector.broadcast %12 : vector<1x256xf32> to vector<128x256xf32>
    %14 = arith.addf %11, %13 : vector<128x256xf32>
    %cst_11 = arith.constant 0.000000e+00 : f32
    %15 = vector.broadcast %cst_11 : f32 to vector<128x256xf32>
    %16 = arith.maximumf %14, %15 : vector<128x256xf32>
    %c1_i32 = arith.constant 1 : i32
    %17 = arith.cmpi eq, %arg0, %c1_i32 : i32
    %18 = arith.extui %17 : i1 to i32
    %c0_i32 = arith.constant 0 : i32
    %19 = arith.cmpi ne, %18, %c0_i32 : i32
    scf.if %19 {
      %c128_i32 = arith.constant 128 : i32
      %23 = arith.muli %arg0, %c128_i32 : i32
      %24 = tpu.iota {dimensions = array<i32: 0>} : vector<128x1xi32>
      %25 = vector.broadcast %23 : i32 to vector<128x1xi32>
      %26 = arith.addi %25, %24 : vector<128x1xi32>
      %c200_i32 = arith.constant 200 : i32
      %27 = vector.broadcast %c200_i32 : i32 to vector<128x1xi32>
      %28 = arith.cmpi slt, %26, %27 : vector<128x1xi32>
      %cst_14 = arith.constant 0.000000e+00 : f32
      %29 = vector.shape_cast %28 : vector<128x1xi1> to vector<128x1xi1>
      %30 = vector.broadcast %29 : vector<128x1xi1> to vector<128x256xi1>
      %31 = vector.broadcast %cst_14 : f32 to vector<128x256xf32>
      %32 = arith.select %30, %16, %31 : vector<128x256xi1>, vector<128x256xf32>
      %cst_15 = arith.constant dense<0.000000e+00> : vector<256xf32>
      %33 = vector.multi_reduction <add>, %32, %cst_15 [0] : vector<128x256xf32> to vector<256xf32>
      %34 = vector.shape_cast %33 : vector<256xf32> to vector<1x256xf32>
      %c0_16 = arith.constant 0 : index
      %c0_17 = arith.constant 0 : index
      %c0_18 = arith.constant 0 : index
      %35 = vector.load %arg6[%c0_16, %c0_17, %c0_18] : memref<1x1x256xf32, #tpu.memory_space<vmem>>, vector<1x1x256xf32>
      %36 = vector.shape_cast %35 : vector<1x1x256xf32> to vector<1x256xf32>
      %37 = vector.shape_cast %34 : vector<1x256xf32> to vector<1x1x256xf32>
      tpu.vector_store %arg6[%c0_16, %c0_17, %c0_18], %37 {strides = array<i32>} : memref<1x1x256xf32, #tpu.memory_space<vmem>>, vector<1x1x256xf32>,
      %38 = arith.mulf %32, %32 : vector<128x256xf32>
      %cst_19 = arith.constant dense<0.000000e+00> : vector<256xf32>
      %39 = vector.multi_reduction <add>, %38, %cst_19 [0] : vector<128x256xf32> to vector<256xf32>
      %40 = vector.shape_cast %39 : vector<256xf32> to vector<1x256xf32>
      %c0_20 = arith.constant 0 : index
      %c0_21 = arith.constant 0 : index
      %c0_22 = arith.constant 0 : index
      %41 = vector.load %arg7[%c0_20, %c0_21, %c0_22] : memref<1x1x256xf32, #tpu.memory_space<vmem>>, vector<1x1x256xf32>
      %42 = vector.shape_cast %41 : vector<1x1x256xf32> to vector<1x256xf32>
      %43 = vector.shape_cast %40 : vector<1x256xf32> to vector<1x1x256xf32>
      tpu.vector_store %arg7[%c0_20, %c0_21, %c0_22], %43 {strides = array<i32>} : memref<1x1x256xf32, #tpu.memory_space<vmem>>, vector<1x1x256xf32>,
    } else {
    }
    %c1_i32_12 = arith.constant 1 : i32
    %20 = arith.cmpi ne, %arg0, %c1_i32_12 : i32
    %21 = arith.extui %20 : i1 to i32
    %c0_i32_13 = arith.constant 0 : i32
    %22 = arith.cmpi ne, %21, %c0_i32_13 : i32
    scf.if %22 {
      %cst_14 = arith.constant dense<0.000000e+00> : vector<256xf32>
      %23 = vector.multi_reduction <add>, %16, %cst_14 [0] : vector<128x256xf32> to vector<256xf32>
      %24 = vector.shape_cast %23 : vector<256xf32> to vector<1x256xf32>
      %c0_15 = arith.constant 0 : index
      %c0_16 = arith.constant 0 : index
      %c0_17 = arith.constant 0 : index
      %25 = vector.load %arg6[%c0_15, %c0_16, %c0_17] : memref<1x1x256xf32, #tpu.memory_space<vmem>>, vector<1x1x256xf32>
      %26 = vector.shape_cast %25 : vector<1x1x256xf32> to vector<1x256xf32>
      %27 = vector.shape_cast %24 : vector<1x256xf32> to vector<1x1x256xf32>
      tpu.vector_store %arg6[%c0_15, %c0_16, %c0_17], %27 {strides = array<i32>} : memref<1x1x256xf32, #tpu.memory_space<vmem>>, vector<1x1x256xf32>,
      %28 = arith.mulf %16, %16 : vector<128x256xf32>
      %cst_18 = arith.constant dense<0.000000e+00> : vector<256xf32>
      %29 = vector.multi_reduction <add>, %28, %cst_18 [0] : vector<128x256xf32> to vector<256xf32>
      %30 = vector.shape_cast %29 : vector<256xf32> to vector<1x256xf32>
      %c0_19 = arith.constant 0 : index
      %c0_20 = arith.constant 0 : index
      %c0_21 = arith.constant 0 : index
      %31 = vector.load %arg7[%c0_19, %c0_20, %c0_21] : memref<1x1x256xf32, #tpu.memory_space<vmem>>, vector<1x1x256xf32>
      %32 = vector.shape_cast %31 : vector<1x1x256xf32> to vector<1x256xf32>
      %33 = vector.shape_cast %30 : vector<1x256xf32> to vector<1x1x256xf32>
      tpu.vector_store %arg7[%c0_19, %c0_20, %c0_21], %33 {strides = array<i32>} : memref<1x1x256xf32, #tpu.memory_space<vmem>>, vector<1x1x256xf32>,
    } else {
    }
    return
  }
  func.func @transform_0(%arg0: i32) -> (i32, i32) {
    %c0_i32 = arith.constant 0 : i32
    %c0_i32_0 = arith.constant 0 : i32
    return %arg0, %c0_i32 : i32, i32
  }
  func.func @transform_1(%arg0: i32) -> (i32, i32) {
    %c0_i32 = arith.constant 0 : i32
    %c0_i32_0 = arith.constant 0 : i32
    %c0_i32_1 = arith.constant 0 : i32
    return %c0_i32, %c0_i32_0 : i32, i32
  }
  func.func @transform_2(%arg0: i32) -> (i32, i32) {
    %c0_i32 = arith.constant 0 : i32
    %c0_i32_0 = arith.constant 0 : i32
    %c0_i32_1 = arith.constant 0 : i32
    return %c0_i32, %c0_i32_0 : i32, i32
  }
  func.func @transform_3(%arg0: i32) -> (i32, i32) {
    %c0_i32 = arith.constant 0 : i32
    %c0_i32_0 = arith.constant 0 : i32
    %c0_i32_1 = arith.constant 0 : i32
    return %c0_i32, %c0_i32_0 : i32, i32
  }
  func.func @transform_4(%arg0: i32) -> (i32, i32) {
    %c0_i32 = arith.constant 0 : i32
    %c0_i32_0 = arith.constant 0 : i32
    %c0_i32_1 = arith.constant 0 : i32
    return %c0_i32, %c0_i32_0 : i32, i32
  }
  func.func @transform_5(%arg0: i32) -> (i32, i32, i32) {
    %c0_i32 = arith.constant 0 : i32
    %c0_i32_0 = arith.constant 0 : i32
    %c0_i32_1 = arith.constant 0 : i32
    return %arg0, %c0_i32, %c0_i32_0 : i32, i32, i32
  }
  func.func @transform_6(%arg0: i32) -> (i32, i32, i32) {
    %c0_i32 = arith.constant 0 : i32
    %c0_i32_0 = arith.constant 0 : i32
    %c0_i32_1 = arith.constant 0 : i32
    return %arg0, %c0_i32, %c0_i32_0 : i32, i32, i32
  }
}

module attributes {stable_mosaic.version = 11 : i64} {
  func.func @_out_kernel(%arg0: i32, %arg1: memref<128x16xf32, #tpu.memory_space<vmem>>, %arg2: memref<16x128xbf16, #tpu.memory_space<vmem>>, %arg3: memref<1x128xf32, #tpu.memory_space<vmem>>, %arg4: memref<128x256xbf16, #tpu.memory_space<vmem>>, %arg5: memref<1x256xf32, #tpu.memory_space<vmem>>, %arg6: memref<256x128xbf16, #tpu.memory_space<vmem>>, %arg7: memref<1x128xf32, #tpu.memory_space<vmem>>, %arg8: memref<128x4xf32, #tpu.memory_space<vmem>>) attributes {dimension_semantics = [#tpu.dimension_semantics<parallel>], iteration_bounds = array<i64: 2>, scalar_prefetch = 0 : i64, scratch_operands = 0 : i64, tpu.core_type = #tpu.core_type<tc>, window_params = [{transform_indices = @transform_0, window_bounds = array<i64: 128, 16>}, {pipeline_mode = #tpu.pipeline_mode<synchronous>, transform_indices = @transform_1, window_bounds = array<i64: 16, 128>}, {pipeline_mode = #tpu.pipeline_mode<synchronous>, transform_indices = @transform_2, window_bounds = array<i64: 1, 128>}, {pipeline_mode = #tpu.pipeline_mode<synchronous>, transform_indices = @transform_3, window_bounds = array<i64: 128, 256>}, {pipeline_mode = #tpu.pipeline_mode<synchronous>, transform_indices = @transform_4, window_bounds = array<i64: 1, 256>}, {pipeline_mode = #tpu.pipeline_mode<synchronous>, transform_indices = @transform_5, window_bounds = array<i64: 256, 128>}, {pipeline_mode = #tpu.pipeline_mode<synchronous>, transform_indices = @transform_6, window_bounds = array<i64: 1, 128>}, {transform_indices = @transform_7, window_bounds = array<i64: 128, 4>}]} {
    %c0 = arith.constant 0 : index
    %c0_0 = arith.constant 0 : index
    %0 = vector.load %arg1[%c0, %c0_0] : memref<128x16xf32, #tpu.memory_space<vmem>>, vector<128x16xf32>
    %1 = arith.truncf %0 : vector<128x16xf32> to vector<128x16xbf16>
    %c0_1 = arith.constant 0 : index
    %c0_2 = arith.constant 0 : index
    %2 = vector.load %arg2[%c0_1, %c0_2] : memref<16x128xbf16, #tpu.memory_space<vmem>>, vector<16x128xbf16>
    %cst = arith.constant dense<0.000000e+00> : vector<128x128xf32>
    %3 = tpu.matmul %1, %2, %cst {dimension_numbers = #tpu.dot_dimension_numbers<[1], [0], [0], [1], [0, 0, 1, 1], [], []>} : vector<128x16xbf16>, vector<16x128xbf16>, vector<128x128xf32> -> vector<128x128xf32>
    %c0_3 = arith.constant 0 : index
    %c0_4 = arith.constant 0 : index
    %4 = vector.load %arg3[%c0_3, %c0_4] : memref<1x128xf32, #tpu.memory_space<vmem>>, vector<1x128xf32>
    %5 = vector.broadcast %4 : vector<1x128xf32> to vector<128x128xf32>
    %6 = arith.addf %3, %5 : vector<128x128xf32>
    %cst_5 = arith.constant 0.000000e+00 : f32
    %7 = vector.broadcast %cst_5 : f32 to vector<128x128xf32>
    %8 = arith.maximumf %6, %7 : vector<128x128xf32>
    %9 = arith.truncf %8 : vector<128x128xf32> to vector<128x128xbf16>
    %c0_6 = arith.constant 0 : index
    %c0_7 = arith.constant 0 : index
    %10 = vector.load %arg4[%c0_6, %c0_7] : memref<128x256xbf16, #tpu.memory_space<vmem>>, vector<128x256xbf16>
    %cst_8 = arith.constant dense<0.000000e+00> : vector<128x256xf32>
    %11 = tpu.matmul %9, %10, %cst_8 {dimension_numbers = #tpu.dot_dimension_numbers<[1], [0], [0], [1], [0, 0, 1, 1], [], []>} : vector<128x128xbf16>, vector<128x256xbf16>, vector<128x256xf32> -> vector<128x256xf32>
    %c0_9 = arith.constant 0 : index
    %c0_10 = arith.constant 0 : index
    %12 = vector.load %arg5[%c0_9, %c0_10] : memref<1x256xf32, #tpu.memory_space<vmem>>, vector<1x256xf32>
    %13 = vector.broadcast %12 : vector<1x256xf32> to vector<128x256xf32>
    %14 = arith.addf %11, %13 : vector<128x256xf32>
    %cst_11 = arith.constant 0.000000e+00 : f32
    %15 = vector.broadcast %cst_11 : f32 to vector<128x256xf32>
    %16 = arith.maximumf %14, %15 : vector<128x256xf32>
    %17 = arith.truncf %16 : vector<128x256xf32> to vector<128x256xbf16>
    %c0_12 = arith.constant 0 : index
    %c0_13 = arith.constant 0 : index
    %18 = vector.load %arg6[%c0_12, %c0_13] : memref<256x128xbf16, #tpu.memory_space<vmem>>, vector<256x128xbf16>
    %cst_14 = arith.constant dense<0.000000e+00> : vector<128x128xf32>
    %19 = tpu.matmul %17, %18, %cst_14 {dimension_numbers = #tpu.dot_dimension_numbers<[1], [0], [0], [1], [0, 0, 1, 1], [], []>} : vector<128x256xbf16>, vector<256x128xbf16>, vector<128x128xf32> -> vector<128x128xf32>
    %c0_15 = arith.constant 0 : index
    %c0_16 = arith.constant 0 : index
    %20 = vector.load %arg7[%c0_15, %c0_16] : memref<1x128xf32, #tpu.memory_space<vmem>>, vector<1x128xf32>
    %21 = vector.broadcast %20 : vector<1x128xf32> to vector<128x128xf32>
    %22 = arith.addf %19, %21 : vector<128x128xf32>
    %23 = vector.extract_strided_slice %22 {offsets = [0, 0], sizes = [128, 4], strides = [1, 1]} : vector<128x128xf32> to vector<128x4xf32>
    %24 = arith.negf %23 : vector<128x4xf32>
    %25 = math.exp %24 : vector<128x4xf32>
    %cst_17 = arith.constant 1.000000e+00 : f32
    %26 = vector.broadcast %cst_17 : f32 to vector<128x4xf32>
    %27 = arith.addf %26, %25 : vector<128x4xf32>
    %28 = arith.divf %26, %27 : vector<128x4xf32>
    %c0_18 = arith.constant 0 : index
    %c0_19 = arith.constant 0 : index
    %29 = vector.load %arg8[%c0_18, %c0_19] : memref<128x4xf32, #tpu.memory_space<vmem>>, vector<128x4xf32>
    tpu.vector_store %arg8[%c0_18, %c0_19], %28 {strides = array<i32>} : memref<128x4xf32, #tpu.memory_space<vmem>>, vector<128x4xf32>,
    return
  }
  func.func @transform_0(%arg0: i32) -> (i32, i32) {
    %c0_i32 = arith.constant 0 : i32
    %c0_i32_0 = arith.constant 0 : i32
    return %arg0, %c0_i32 : i32, i32
  }
  func.func @transform_1(%arg0: i32) -> (i32, i32) {
    %c0_i32 = arith.constant 0 : i32
    %c0_i32_0 = arith.constant 0 : i32
    %c0_i32_1 = arith.constant 0 : i32
    return %c0_i32, %c0_i32_0 : i32, i32
  }
  func.func @transform_2(%arg0: i32) -> (i32, i32) {
    %c0_i32 = arith.constant 0 : i32
    %c0_i32_0 = arith.constant 0 : i32
    %c0_i32_1 = arith.constant 0 : i32
    return %c0_i32, %c0_i32_0 : i32, i32
  }
  func.func @transform_3(%arg0: i32) -> (i32, i32) {
    %c0_i32 = arith.constant 0 : i32
    %c0_i32_0 = arith.constant 0 : i32
    %c0_i32_1 = arith.constant 0 : i32
    return %c0_i32, %c0_i32_0 : i32, i32
  }
  func.func @transform_4(%arg0: i32) -> (i32, i32) {
    %c0_i32 = arith.constant 0 : i32
    %c0_i32_0 = arith.constant 0 : i32
    %c0_i32_1 = arith.constant 0 : i32
    return %c0_i32, %c0_i32_0 : i32, i32
  }
  func.func @transform_5(%arg0: i32) -> (i32, i32) {
    %c0_i32 = arith.constant 0 : i32
    %c0_i32_0 = arith.constant 0 : i32
    %c0_i32_1 = arith.constant 0 : i32
    return %c0_i32, %c0_i32_0 : i32, i32
  }
  func.func @transform_6(%arg0: i32) -> (i32, i32) {
    %c0_i32 = arith.constant 0 : i32
    %c0_i32_0 = arith.constant 0 : i32
    %c0_i32_1 = arith.constant 0 : i32
    return %c0_i32, %c0_i32_0 : i32, i32
  }
  func.func @transform_7(%arg0: i32) -> (i32, i32) {
    %c0_i32 = arith.constant 0 : i32
    %c0_i32_0 = arith.constant 0 : i32
    return %arg0, %c0_i32 : i32, i32
  }
}

</mosaic_0001>

<llo_original>
// kernel: sub.5
$region0: #{sub.5}
  #allocation0 [shape = 's32[1]{0}', space=sflag, size = 0x4, scoped, tag = 'scoped memory for sub.5']
  %s0 = inlined_call_operand.vmem [shape: f32[1,256], index: 0, kind: input, shape index: {}]
  %s1 = inlined_call_operand.vmem [shape: f32[1,256], index: 1, kind: input, shape index: {}]
  %s2 = inlined_call_operand.vmem [shape: f32[1,256], index: 2, kind: output, shape index: {}]
  %v3 = vld [vmem:[%s0] sm:$0x1]
  %v4 = vld [vmem:[%s1] sm:$0x1]
  %5 = xla_tuple %v3, %v4
  %6 = xla_tuple %5
  %v7 = vsub.f32 %v3, %v4
  %8 = xla_tuple %v7
  %9 = vst [vmem:[%s2] sm:$0x1] %v7
  %s10 = scalar_lea.vmem %s0, 1
  %v11 = vld [vmem:[%s10] sm:$0x1]
  %s12 = scalar_lea.vmem %s1, 1
  %v13 = vld [vmem:[%s12] sm:$0x1]
  %14 = xla_tuple %v11, %v13
  %15 = xla_tuple %14
  %v16 = vsub.f32 %v11, %v13
  %17 = xla_tuple %v16
  %s18 = scalar_lea.vmem %s2, 1
  %19 = vst [vmem:[%s18] sm:$0x1] %v16

// kernel: anet_forward.3
$region0: #{anet_forward.3}
  #allocation0 [shape = 'u32[]', space=smem, size = 0x4, offset = 0x4, fixed_abs, tag = 'smem constant byte address 0x4 - core index']
  #allocation1 [shape = 'u32[144,128]{1,0:T(1,128)}', space=vmem, size = 0x12000, scoped, tag = 'internal scratch']
  %s0 = inlined_call_operand.vmem [shape: f32[256,16], index: 0, kind: input, shape index: {}]
  %s1 = inlined_call_operand.vmem [shape: bf16[16,128], index: 1, kind: input, shape index: {}]
  %s2 = inlined_call_operand.vmem [shape: f32[1,128], index: 2, kind: input, shape index: {}]
  %s3 = inlined_call_operand.vmem [shape: f32[2,1,128], index: 3, kind: output, shape index: {0}]
  %s4 = inlined_call_operand.vmem [shape: f32[2,1,128], index: 4, kind: output, shape index: {1}]
  %5 = xla_tuple %s3, %s4
  %s6 = sld [smem:[#allocation0]]
  $region61: #{anet_forward.3} parent=0
    _
  %s8 = ssub.s32 1, %s6
  %s9 = scalar_select 0, %s8, %s6
  loop: start=0, step=1, limit=4
  $region2: #{anet_forward.3} parent=0 // loop_pre_header
    _
  $region3: #{anet_forward.3} parent=0 // loop_header
    %s11 = sphi 0, %s15
    %p12 = scmp.ge.s32.totalorder %s11, 4
    %s21 = sphi 0, %s23
    %s24 = sphi 0, %s21
    %s25 = sphi 0, %s24
    %s41 = sphi 0, %s25
    %s45 = sphi 0, %s45
    %s47 = sphi 0, %s45
    %s48 = sphi 0, %s47
    %s62 = sphi 0, %s48
    %s66 = sphi 0, %s66
    %s68 = sphi 0, %s66
    %s69 = sphi 0, %s68
    %s83 = sphi 0, %s69
    %s89 = sphi 0, %s91
    %s92 = sphi 0, %s89
    %s93 = sphi 0, %s92
    %s109 = sphi 0, %s93
    %s115 = sphi 0, %s117
    %s118 = sphi 0, %s115
    %s119 = sphi 0, %s118
    %s135 = sphi 0, %s119
  $region4: #{anet_forward.3} parent=0 // loop_header_branch
    %14 = sbr.rel (%p12) target = $region8
  $region5: #{anet_forward.3} parent=0 // loop_body
    %s16 = ssub.s32 %s11, 1
    %s17 = ssub.s32 %s11, 2
    %s18 = sadd.s32 %s11, 1
    %s19 = ssub.s32 %s11, %s18
    %p20 = scmp.eq.s32.totalorder %s19, 0
    %s22 = sadd.s32 %s21, 1
    %s23 = scalar_select %p20, %s21, %s22
    %p26 = pneg %p20
    %p27 = scmp.eq.s32.totalorder %s11, 1
    %p28 = por %p26, %p27
    %p29 = scmp.ne.s32.totalorder %s21, %s24
    %p30 = scmp.eq.s32.totalorder %s11, 0
    %p31 = por %p29, %p30
    %p32 = scmp.ne.s32.totalorder %s21, %s24
    %p33 = scmp.eq.s32.totalorder %s16, 1
    %p34 = por %p32, %p33
    %p35 = scmp.ne.s32.totalorder %s24, %s25
    %p36 = scmp.eq.s32.totalorder %s16, 0
    %p37 = por %p35, %p36
    %p38 = scmp.ne.s32.totalorder %s24, %s25
    %p39 = scmp.eq.s32.totalorder %s17, 1
    %p40 = por %p38, %p39
    %p42 = scmp.ne.s32.totalorder %s25, %s41
    %p43 = scmp.eq.s32.totalorder %s17, 0
    %p44 = por %p42, %p43
    %s46 = sadd.s32 %s45, 1
    %p49 = scmp.eq.s32.totalorder %s11, 1
    %p50 = scmp.ne.s32.totalorder %s45, %s47
    %p51 = scmp.eq.s32.totalorder %s11, 0
    %p52 = por %p50, %p51
    %p53 = scmp.ne.s32.totalorder %s45, %s47
    %p54 = scmp.eq.s32.totalorder %s16, 1
    %p55 = por %p53, %p54
    %p56 = scmp.ne.s32.totalorder %s47, %s48
    %p57 = scmp.eq.s32.totalorder %s16, 0
    %p58 = por %p56, %p57
    %p59 = scmp.ne.s32.totalorder %s47, %s48
    %p60 = scmp.eq.s32.totalorder %s17, 1
    %p61 = por %p59, %p60
    %p63 = scmp.ne.s32.totalorder %s48, %s62
    %p64 = scmp.eq.s32.totalorder %s17, 0
    %p65 = por %p63, %p64
    %s67 = sadd.s32 %s66, 1
    %p70 = scmp.eq.s32.totalorder %s11, 1
    %p71 = scmp.ne.s32.totalorder %s66, %s68
    %p72 = scmp.eq.s32.totalorder %s11, 0
    %p73 = por %p71, %p72
    %p74 = scmp.ne.s32.totalorder %s66, %s68
    %p75 = scmp.eq.s32.totalorder %s16, 1
    %p76 = por %p74, %p75
    %p77 = scmp.ne.s32.totalorder %s68, %s69
    %p78 = scmp.eq.s32.totalorder %s16, 0
    %p79 = por %p77, %p78
    %p80 = scmp.ne.s32.totalorder %s68, %s69
    %p81 = scmp.eq.s32.totalorder %s17, 1
    %p82 = por %p80, %p81
    %p84 = scmp.ne.s32.totalorder %s69, %s83
    %p85 = scmp.eq.s32.totalorder %s17, 0
    %p86 = por %p84, %p85
    %s87 = ssub.s32 %s11, %s18
    %p88 = scmp.eq.s32.totalorder %s87, 0
    %s90 = sadd.s32 %s89, 1
    %s91 = scalar_select %p88, %s89, %s90
    %p94 = pneg %p88
    %p95 = scmp.eq.s32.totalorder %s11, 1
    %p96 = por %p94, %p95
    %p97 = scmp.ne.s32.totalorder %s89, %s92
    %p98 = scmp.eq.s32.totalorder %s11, 0
    %p99 = por %p97, %p98
    %p100 = scmp.ne.s32.totalorder %s89, %s92
    %p101 = scmp.eq.s32.totalorder %s16, 1
    %p102 = por %p100, %p101
    %p103 = scmp.ne.s32.totalorder %s92, %s93
    %p104 = scmp.eq.s32.totalorder %s16, 0
    %p105 = por %p103, %p104
    %p106 = scmp.ne.s32.totalorder %s92, %s93
    %p107 = scmp.eq.s32.totalorder %s17, 1
    %p108 = por %p106, %p107
    %p110 = scmp.ne.s32.totalorder %s93, %s109
    %p111 = scmp.eq.s32.totalorder %s17, 0
    %p112 = por %p110, %p111
    %s113 = ssub.s32 %s11, %s18
    %p114 = scmp.eq.s32.totalorder %s113, 0
    %s116 = sadd.s32 %s115, 1
    %s117 = scalar_select %p114, %s115, %s116
    %p120 = pneg %p114
    %p121 = scmp.eq.s32.totalorder %s11, 1
    %p122 = por %p120, %p121
    %p123 = scmp.ne.s32.totalorder %s115, %s118
    %p124 = scmp.eq.s32.totalorder %s11, 0
    %p125 = por %p123, %p124
    %p126 = scmp.ne.s32.totalorder %s115, %s118
    %p127 = scmp.eq.s32.totalorder %s16, 1
    %p128 = por %p126, %p127
    %p129 = scmp.ne.s32.totalorder %s118, %s119
    %p130 = scmp.eq.s32.totalorder %s16, 0
    %p131 = por %p129, %p130
    %p132 = scmp.ne.s32.totalorder %s118, %s119
    %p133 = scmp.eq.s32.totalorder %s17, 1
    %p134 = por %p132, %p133
    %p136 = scmp.ne.s32.totalorder %s119, %s135
    %p137 = scmp.eq.s32.totalorder %s17, 0
    %p138 = por %p136, %p137
    %p139 = scmp.le.s32.totalorder 1, %s11
    %p140 = scmp.lt.s32.totalorder %s11, 3
    %p141 = pnand %p139, %p140
    %p142 = pneg %p141
    // Predicated region
    $region9: #{anet_forward.3} parent=5 // pred_check
      _
    $region10: #{anet_forward.3} parent=5 // pred_check_branch
      %144 = sbr.rel (%p141) target = $region12
    $region11: #{anet_forward.3} parent=5 // pred_region
      %s145 = ssub.s32 %s11, 1
      // Predicated region
      $region13: #{anet_forward.3} parent=11 // pred_check
        %p146 = pneg %p58
      $region14: #{anet_forward.3} parent=11 // pred_check_branch
        %148 = sbr.rel (%p146) target = $region16
      $region15: #{anet_forward.3} parent=11 // pred_region
        _
      $region16: #{anet_forward.3} parent=11 // pred_fallthru
        _
      // Predicated region
      $region17: #{anet_forward.3} parent=11 // pred_check
        %p149 = pneg %p79
      $region18: #{anet_forward.3} parent=11 // pred_check_branch
        %151 = sbr.rel (%p149) target = $region20
      $region19: #{anet_forward.3} parent=11 // pred_region
        _
      $region20: #{anet_forward.3} parent=11 // pred_fallthru
        _
    $region12: #{anet_forward.3} parent=5 // pred_fallthru
      _
    %p152 = scmp.lt.s32.totalorder %s11, 2
    // Predicated region
    $region21: #{anet_forward.3} parent=5 // pred_check
      %p153 = pneg %p152
    $region22: #{anet_forward.3} parent=5 // pred_check_branch
      %155 = sbr.rel (%p153) target = $region24
    $region23: #{anet_forward.3} parent=5 // pred_region
      // Predicated region
      $region25: #{anet_forward.3} parent=23 // pred_check
        %p156 = pneg %p31
      $region26: #{anet_forward.3} parent=23 // pred_check_branch
        %158 = sbr.rel (%p156) target = $region28
      $region27: #{anet_forward.3} parent=23 // pred_region
        %s159 = smul.u32 16, %s11
        %p160 = scmp.lt.s32.totalorder %s159, 31
        %s161 = scalar_select %p160, %s159, 31
        %s162 = smul.addr %s161, 8
        %s163 = scalar_lea.vmem %s0, %s162
        %s164 = smul.u32 16, %s11
      $region28: #{anet_forward.3} parent=23 // pred_fallthru
        _
    $region24: #{anet_forward.3} parent=5 // pred_fallthru
      _
    %p165 = scmp.le.s32.totalorder 1, %s11
    %p166 = scmp.lt.s32.totalorder %s11, 3
    %p167 = pnand %p165, %p166
    %p168 = pneg %p167
    // Predicated region
    $region29: #{anet_forward.3} parent=5 // pred_check
      _
    $region30: #{anet_forward.3} parent=5 // pred_check_branch
      %170 = sbr.rel (%p167) target = $region32
    $region31: #{anet_forward.3} parent=5 // pred_region
      %s171 = ssub.s32 %s11, 1
      %s172 = smul.u32 16, %s16
      %p173 = scmp.lt.s32.totalorder %s172, 31
      %s174 = scalar_select %p173, %s172, 31
      %s175 = smul.addr %s174, 8
      %s176 = scalar_lea.vmem %s0, %s175
      %p177 = pneg %p37
      %p178 = pneg %p34
      %p179 = pneg %p58
      %p180 = pneg %p55
      %p181 = pneg %p79
      %p182 = pneg %p76
      %p183 = pneg %p105
      %p184 = pneg %p102
      %p185 = scmp.lt.s32.totalorder %s16, 1
      %s186 = scalar_select %p185, %s16, 1
      %s187 = scalar_lea.vmem %s3, %s186
      %p188 = pneg %p131
      %p189 = pneg %p128
      %p190 = scmp.lt.s32.totalorder %s16, 1
      %s191 = scalar_select %p190, %s16, 1
      %s192 = scalar_lea.vmem %s4, %s191
      %s193 = smul.u32 16, %s16
      %p194 = scmp.lt.s32.totalorder %s193, 31
      %s195 = scalar_select %p194, %s193, 31
      %s196 = smul.addr %s195, 8
      %s197 = scalar_lea.vmem %s0, %s196
      %s198 = smul.u32 16, %s16
      %p199 = scmp.lt.s32.totalorder %s16, 1
      %s200 = scalar_select %p199, %s16, 1
      %s201 = scalar_lea.vmem %s3, %s200
      %p202 = scmp.lt.s32.totalorder %s16, 1
      %s203 = scalar_select %p202, %s16, 1
      %s204 = scalar_lea.vmem %s4, %s203
      %v206 = vld [vmem:[%s197] sm:$0xff]
      %v207 = vld [vmem:[%s197 + $0x8] sm:$0xff]
      %v208 = vld [vmem:[%s197 + $0x10] sm:$0xff]
      %v209 = vld [vmem:[%s197 + $0x18] sm:$0xff]
      %v210 = vld [vmem:[%s197 + $0x20] sm:$0xff]
      %v211 = vld [vmem:[%s197 + $0x28] sm:$0xff]
      %v212 = vld [vmem:[%s197 + $0x30] sm:$0xff]
      %v213 = vld [vmem:[%s197 + $0x38] sm:$0xff]
      %v214 = vld [vmem:[%s197 + $0x40] sm:$0xff]
      %v215 = vld [vmem:[%s197 + $0x48] sm:$0xff]
      %v216 = vld [vmem:[%s197 + $0x50] sm:$0xff]
      %v217 = vld [vmem:[%s197 + $0x58] sm:$0xff]
      %v218 = vld [vmem:[%s197 + $0x60] sm:$0xff]
      %v219 = vld [vmem:[%s197 + $0x68] sm:$0xff]
      %v220 = vld [vmem:[%s197 + $0x70] sm:$0xff]
      %v221 = vld [vmem:[%s197 + $0x78] sm:$0xff]
      %v222 = vpack.c.bf16 %v207, %v206
      %v223 = vpack.c.bf16 %v209, %v208
      %v224 = vpack.c.bf16 %v211, %v210
      %v225 = vpack.c.bf16 %v213, %v212
      %v226 = vpack.c.bf16 %v215, %v214
      %v227 = vpack.c.bf16 %v217, %v216
      %v228 = vpack.c.bf16 %v219, %v218
      %v229 = vpack.c.bf16 %v221, %v220
      %v230 = vld [vmem:[%s1] sm:$0xf]
      %v231 = vld [vmem:[%s1 + $0x4] sm:$0xf]
      %v232 = vld [vmem:[%s2] sm:$0x1]
      %v234 = vlaneseq
      %v235 = vshrl.u32 %v234, 7
      %v236 = vsub.s32 0, %v235
      %v237 = vrot.slane %v232, %v236
      %v241 = vunpack.c.l.b16 %v230
      %v242 = vunpack.c.l.b16 %v231
      %v243 = vpack.c.b16 %v242, %v241
      %vm245 = vcmask 130048
      %v247 = vsel %vm245, %v222, 0
      %v250 = vsel %vm245, %v223, 0
      %v253 = vsel %vm245, %v224, 0
      %v256 = vsel %vm245, %v225, 0
      %v259 = vsel %vm245, %v226, 0
      %v262 = vsel %vm245, %v227, 0
      %v265 = vsel %vm245, %v228, 0
      %v268 = vsel %vm245, %v229, 0
      %270 = vmatprep.subr.bf16.mxu0 0
      %271 = vmatpush1.bf16.msra.mxu0 %v243
      %272 = vmatprep.subr.bf16.mxu0 0
      %273 = vmatpush1.bf16.msra.mxu0 0
      %274 = vmatprep.subr.bf16.mxu0 0
      %275 = vmatpush1.bf16.msra.mxu0 0
      %276 = vmatprep.subr.bf16.mxu0 0
      %277 = vmatpush1.bf16.msra.mxu0 0
      %278 = vmatprep.subr.bf16.mxu0 0
      %279 = vmatpush1.bf16.msra.mxu0 0
      %280 = vmatprep.subr.bf16.mxu0 0
      %281 = vmatpush1.bf16.msra.mxu0 0
      %282 = vmatprep.subr.bf16.mxu0 0
      %283 = vmatpush1.bf16.msra.mxu0 0
      %284 = vmatprep.subr.bf16.mxu0 0
      %285 = vmatpush1.bf16.msra.mxu0 0
      %286 = vmatprep.subr.bf16.mxu0 0
      %287 = vmatpush1.bf16.msra.mxu0 0
      %288 = vmatprep.subr.bf16.mxu0 0
      %289 = vmatpush1.bf16.msra.mxu0 0
      %290 = vmatprep.subr.bf16.mxu0 0
      %291 = vmatpush1.bf16.msra.mxu0 0
      %292 = vmatprep.subr.bf16.mxu0 0
      %293 = vmatpush1.bf16.msra.mxu0 0
      %294 = vmatprep.subr.bf16.mxu0 0
      %295 = vmatpush1.bf16.msra.mxu0 0
      %296 = vmatprep.subr.bf16.mxu0 0
      %297 = vmatpush1.bf16.msra.mxu0 0
      %298 = vmatprep.subr.bf16.mxu0 0
      %299 = vmatpush1.bf16.msra.mxu0 0
      %300 = vmatprep.subr.bf16.mxu0 0
      %301 = vmatpush1.bf16.msra.mxu0 0
      %302 = vmatprep.mubr.bf16.mxu0 0
      %303 = vmatmul.mubr.bf16.gmra.mrb[0].mxu0 %v247
      %v304 = vpop.f32.mrb[0].mxu0
      %v305 = vadd.f32 %v237, %v304
      %v306 = vpop.f32.mrb[0].mxu0
      %v307 = vpop.f32.mrb[0].mxu0
      %v308 = vadd.f32 %v237, %v307
      %v309 = vpop.f32.mrb[0].mxu0
      %310 = vmatprep.mubr.bf16.mxu0 0
      %311 = vmatmul.mubr.bf16.gmra.mrb[0].mxu0 %v250
      %v312 = vpop.f32.mrb[0].mxu0
      %v313 = vadd.f32 %v237, %v312
      %v314 = vpop.f32.mrb[0].mxu0
      %v315 = vpop.f32.mrb[0].mxu0
      %v316 = vadd.f32 %v237, %v315
      %v317 = vpop.f32.mrb[0].mxu0
      %318 = vmatprep.mubr.bf16.mxu0 0
      %319 = vmatmul.mubr.bf16.gmra.mrb[0].mxu0 %v253
      %v320 = vpop.f32.mrb[0].mxu0
      %v321 = vadd.f32 %v237, %v320
      %v322 = vpop.f32.mrb[0].mxu0
      %v323 = vpop.f32.mrb[0].mxu0
      %v324 = vadd.f32 %v237, %v323
      %v325 = vpop.f32.mrb[0].mxu0
      %326 = vmatprep.mubr.bf16.mxu0 0
      %327 = vmatmul.mubr.bf16.gmra.mrb[0].mxu0 %v256
      %v328 = vpop.f32.mrb[0].mxu0
      %v329 = vadd.f32 %v237, %v328
      %v330 = vpop.f32.mrb[0].mxu0
      %v331 = vpop.f32.mrb[0].mxu0
      %v332 = vadd.f32 %v237, %v331
      %v333 = vpop.f32.mrb[0].mxu0
      %334 = vmatprep.mubr.bf16.mxu0 0
      %335 = vmatmul.mubr.bf16.gmra.mrb[0].mxu0 %v259
      %v336 = vpop.f32.mrb[0].mxu0
      %v337 = vadd.f32 %v237, %v336
      %v338 = vpop.f32.mrb[0].mxu0
      %v339 = vpop.f32.mrb[0].mxu0
      %v340 = vadd.f32 %v237, %v339
      %v341 = vpop.f32.mrb[0].mxu0
      %342 = vmatprep.mubr.bf16.mxu0 0
      %343 = vmatmul.mubr.bf16.gmra.mrb[0].mxu0 %v262
      %v344 = vpop.f32.mrb[0].mxu0
      %v345 = vadd.f32 %v237, %v344
      %v346 = vpop.f32.mrb[0].mxu0
      %v347 = vpop.f32.mrb[0].mxu0
      %v348 = vadd.f32 %v237, %v347
      %v349 = vpop.f32.mrb[0].mxu0
      %350 = vmatprep.mubr.bf16.mxu0 0
      %351 = vmatmul.mubr.bf16.gmra.mrb[0].mxu0 %v265
      %v352 = vpop.f32.mrb[0].mxu0
      %v353 = vadd.f32 %v237, %v352
      %v354 = vpop.f32.mrb[0].mxu0
      %v355 = vpop.f32.mrb[0].mxu0
      %v356 = vadd.f32 %v237, %v355
      %v357 = vpop.f32.mrb[0].mxu0
      %358 = vmatprep.mubr.bf16.mxu0 0
      %359 = vmatmul.mubr.bf16.gmra.mrb[0].mxu0 %v268
      %v360 = vpop.f32.mrb[0].mxu0
      %v361 = vadd.f32 %v237, %v360
      %v362 = vpop.f32.mrb[0].mxu0
      %v363 = vpop.f32.mrb[0].mxu0
      %v364 = vadd.f32 %v237, %v363
      %v365 = vpop.f32.mrb[0].mxu0
      %366 = vdwg.mxu0
      %v367 = vmax.f32 %v305, 0.0
      %v368 = vmax.f32 %v308, 0.0
      %v369 = vmax.f32 %v313, 0.0
      %v370 = vmax.f32 %v316, 0.0
      %v371 = vmax.f32 %v321, 0.0
      %v372 = vmax.f32 %v324, 0.0
      %v373 = vmax.f32 %v329, 0.0
      %v374 = vmax.f32 %v332, 0.0
      %v375 = vmax.f32 %v337, 0.0
      %v376 = vmax.f32 %v340, 0.0
      %v377 = vmax.f32 %v345, 0.0
      %v378 = vmax.f32 %v348, 0.0
      %v379 = vmax.f32 %v353, 0.0
      %v380 = vmax.f32 %v356, 0.0
      %v381 = vmax.f32 %v361, 0.0
      %v382 = vmax.f32 %v364, 0.0
      %p383 = scmp.eq.s32.totalorder %s16, 1
      // Predicated region
      $region33: #{anet_forward.3} parent=31 // pred_check
        %p384 = pneg %p383
      $region34: #{anet_forward.3} parent=31 // pred_check_branch
        %386 = sbr.rel (%p384) target = $region36
      $region35: #{anet_forward.3} parent=31 // pred_region
        %s387 = smul.u32 %s16, 128
        %v388 = vlaneseq
        %v389 = vshrl.u32 %v388, 7
        %v390 = vadd.s32 %v389, 8
        %v391 = vadd.s32 %v389, 16
        %v392 = vadd.s32 %v389, 24
        %v393 = vadd.s32 %v389, 32
        %v394 = vadd.s32 %v389, 40
        %v395 = vadd.s32 %v389, 48
        %v396 = vadd.s32 %v389, 56
        %v397 = vadd.s32 %v389, 64
        %v398 = vadd.s32 %v389, 72
        %v399 = vadd.s32 %v389, 80
        %v400 = vadd.s32 %v389, 88
        %v401 = vadd.s32 %v389, 96
        %v402 = vadd.s32 %v389, 104
        %v403 = vadd.s32 %v389, 112
        %v404 = vadd.s32 %v389, 120
        %v405 = vstv %s387
        %v406 = vadd.s32 %v405, %v389
        %v407 = vadd.s32 %v405, %v390
        %v408 = vadd.s32 %v405, %v391
        %v409 = vadd.s32 %v405, %v392
        %v410 = vadd.s32 %v405, %v393
        %v411 = vadd.s32 %v405, %v394
        %v412 = vadd.s32 %v405, %v395
        %v413 = vadd.s32 %v405, %v396
        %v414 = vadd.s32 %v405, %v397
        %v415 = vadd.s32 %v405, %v398
        %v416 = vadd.s32 %v405, %v399
        %v417 = vadd.s32 %v405, %v400
        %v418 = vadd.s32 %v405, %v401
        %v419 = vadd.s32 %v405, %v402
        %v420 = vadd.s32 %v405, %v403
        %v421 = vadd.s32 %v405, %v404
        %vm422 = vcmp.lt.s32.totalorder %v406, 200
        %vm423 = vcmp.lt.s32.totalorder %v407, 200
        %vm424 = vcmp.lt.s32.totalorder %v408, 200
        %vm425 = vcmp.lt.s32.totalorder %v409, 200
        %vm426 = vcmp.lt.s32.totalorder %v410, 200
        %vm427 = vcmp.lt.s32.totalorder %v411, 200
        %vm428 = vcmp.lt.s32.totalorder %v412, 200
        %vm429 = vcmp.lt.s32.totalorder %v413, 200
        %vm430 = vcmp.lt.s32.totalorder %v414, 200
        %vm431 = vcmp.lt.s32.totalorder %v415, 200
        %vm432 = vcmp.lt.s32.totalorder %v416, 200
        %vm433 = vcmp.lt.s32.totalorder %v417, 200
        %vm434 = vcmp.lt.s32.totalorder %v418, 200
        %vm435 = vcmp.lt.s32.totalorder %v419, 200
        %vm436 = vcmp.lt.s32.totalorder %v420, 200
        %vm437 = vcmp.lt.s32.totalorder %v421, 200
        %v438 = vsel %vm422, 1, 0
        %v439 = vsel %vm423, 1, 0
        %v440 = vsel %vm424, 1, 0
        %v441 = vsel %vm425, 1, 0
        %v442 = vsel %vm426, 1, 0
        %v443 = vsel %vm427, 1, 0
        %v444 = vsel %vm428, 1, 0
        %v445 = vsel %vm429, 1, 0
        %v446 = vsel %vm430, 1, 0
        %v447 = vsel %vm431, 1, 0
        %v448 = vsel %vm432, 1, 0
        %v449 = vsel %vm433, 1, 0
        %v450 = vsel %vm434, 1, 0
        %v451 = vsel %vm435, 1, 0
        %v452 = vsel %vm436, 1, 0
        %v453 = vsel %vm437, 1, 0
        %vm454 = vcmp.eq.s32.totalorder %v438, 1
        %vm455 = vcmp.eq.s32.totalorder %v439, 1
        %vm456 = vcmp.eq.s32.totalorder %v440, 1
        %vm457 = vcmp.eq.s32.totalorder %v441, 1
        %vm458 = vcmp.eq.s32.totalorder %v442, 1
        %vm459 = vcmp.eq.s32.totalorder %v443, 1
        %vm460 = vcmp.eq.s32.totalorder %v444, 1
        %vm461 = vcmp.eq.s32.totalorder %v445, 1
        %vm462 = vcmp.eq.s32.totalorder %v446, 1
        %vm463 = vcmp.eq.s32.totalorder %v447, 1
        %vm464 = vcmp.eq.s32.totalorder %v448, 1
        %vm465 = vcmp.eq.s32.totalorder %v449, 1
        %vm466 = vcmp.eq.s32.totalorder %v450, 1
        %vm467 = vcmp.eq.s32.totalorder %v451, 1
        %vm468 = vcmp.eq.s32.totalorder %v452, 1
        %vm469 = vcmp.eq.s32.totalorder %v453, 1
        %v470 = vsel %vm454, %v367, 0.0
        %v471 = vsel %vm455, %v368, 0.0
        %v472 = vsel %vm456, %v369, 0.0
        %v473 = vsel %vm457, %v370, 0.0
        %v474 = vsel %vm458, %v371, 0.0
        %v475 = vsel %vm459, %v372, 0.0
        %v476 = vsel %vm460, %v373, 0.0
        %v477 = vsel %vm461, %v374, 0.0
        %v478 = vsel %vm462, %v375, 0.0
        %v479 = vsel %vm463, %v376, 0.0
        %v480 = vsel %vm464, %v377, 0.0
        %v481 = vsel %vm465, %v378, 0.0
        %v482 = vsel %vm466, %v379, 0.0
        %v483 = vsel %vm467, %v380, 0.0
        %v484 = vsel %vm468, %v381, 0.0
        %v485 = vsel %vm469, %v382, 0.0
        %v486 = vadd.f32 %v470, %v471
        %v487 = vadd.f32 %v486, %v472
        %v488 = vadd.f32 %v487, %v473
        %v489 = vadd.f32 %v488, %v474
        %v490 = vadd.f32 %v489, %v475
        %v491 = vadd.f32 %v490, %v476
        %v492 = vadd.f32 %v491, %v477
        %v493 = vadd.f32 %v492, %v478
        %v494 = vadd.f32 %v493, %v479
        %v495 = vadd.f32 %v494, %v480
        %v496 = vadd.f32 %v495, %v481
        %v497 = vadd.f32 %v496, %v482
        %v498 = vadd.f32 %v497, %v483
        %v499 = vadd.f32 %v498, %v484
        %v500 = vadd.f32 %v499, %v485
        %v501 = vrot.slane %v500, 4
        %v502 = vadd.f32 %v500, %v501
        %v503 = vrot.slane %v502, 2
        %v504 = vadd.f32 %v502, %v503
        %v505 = vrot.slane %v504, 1
        %v506 = vadd.f32 %v504, %v505
        %507 = vst [vmem:[%s201] sm:$0x1] %v506
        %v508 = vmul.f32 %v470, %v470
        %v509 = vmul.f32 %v471, %v471
        %v510 = vmul.f32 %v472, %v472
        %v511 = vmul.f32 %v473, %v473
        %v512 = vmul.f32 %v474, %v474
        %v513 = vmul.f32 %v475, %v475
        %v514 = vmul.f32 %v476, %v476
        %v515 = vmul.f32 %v477, %v477
        %v516 = vmul.f32 %v478, %v478
        %v517 = vmul.f32 %v479, %v479
        %v518 = vmul.f32 %v480, %v480
        %v519 = vmul.f32 %v481, %v481
        %v520 = vmul.f32 %v482, %v482
        %v521 = vmul.f32 %v483, %v483
        %v522 = vmul.f32 %v484, %v484
        %v523 = vmul.f32 %v485, %v485
        %v524 = vadd.f32 %v508, %v509
        %v525 = vadd.f32 %v524, %v510
        %v526 = vadd.f32 %v525, %v511
        %v527 = vadd.f32 %v526, %v512
        %v528 = vadd.f32 %v527, %v513
        %v529 = vadd.f32 %v528, %v514
        %v530 = vadd.f32 %v529, %v515
        %v531 = vadd.f32 %v530, %v516
        %v532 = vadd.f32 %v531, %v517
        %v533 = vadd.f32 %v532, %v518
        %v534 = vadd.f32 %v533, %v519
        %v535 = vadd.f32 %v534, %v520
        %v536 = vadd.f32 %v535, %v521
        %v537 = vadd.f32 %v536, %v522
        %v538 = vadd.f32 %v537, %v523
        %v539 = vrot.slane %v538, 4
        %v540 = vadd.f32 %v538, %v539
        %v541 = vrot.slane %v540, 2
        %v542 = vadd.f32 %v540, %v541
        %v543 = vrot.slane %v542, 1
        %v544 = vadd.f32 %v542, %v543
        %545 = vst [vmem:[%s204] sm:$0x1] %v544
      $region36: #{anet_forward.3} parent=31 // pred_fallthru
        _
      %p546 = scmp.ne.s32.totalorder %s16, 1
      // Predicated region
      $region37: #{anet_forward.3} parent=31 // pred_check
        %p547 = pneg %p546
      $region38: #{anet_forward.3} parent=31 // pred_check_branch
        %549 = sbr.rel (%p547) target = $region40
      $region39: #{anet_forward.3} parent=31 // pred_region
        %v550 = vadd.f32 %v367, %v368
        %v551 = vadd.f32 %v550, %v369
        %v552 = vadd.f32 %v551, %v370
        %v553 = vadd.f32 %v552, %v371
        %v554 = vadd.f32 %v553, %v372
        %v555 = vadd.f32 %v554, %v373
        %v556 = vadd.f32 %v555, %v374
        %v557 = vadd.f32 %v556, %v375
        %v558 = vadd.f32 %v557, %v376
        %v559 = vadd.f32 %v558, %v377
        %v560 = vadd.f32 %v559, %v378
        %v561 = vadd.f32 %v560, %v379
        %v562 = vadd.f32 %v561, %v380
        %v563 = vadd.f32 %v562, %v381
        %v564 = vadd.f32 %v563, %v382
        %v565 = vrot.slane %v564, 4
        %v566 = vadd.f32 %v564, %v565
        %v567 = vrot.slane %v566, 2
        %v568 = vadd.f32 %v566, %v567
        %v569 = vrot.slane %v568, 1
        %v570 = vadd.f32 %v568, %v569
        %571 = vst [vmem:[%s201] sm:$0x1] %v570
        %v572 = vmul.f32 %v367, %v367
        %v573 = vmul.f32 %v368, %v368
        %v574 = vmul.f32 %v369, %v369
        %v575 = vmul.f32 %v370, %v370
        %v576 = vmul.f32 %v371, %v371
        %v577 = vmul.f32 %v372, %v372
        %v578 = vmul.f32 %v373, %v373
        %v579 = vmul.f32 %v374, %v374
        %v580 = vmul.f32 %v375, %v375
        %v581 = vmul.f32 %v376, %v376
        %v582 = vmul.f32 %v377, %v377
        %v583 = vmul.f32 %v378, %v378
        %v584 = vmul.f32 %v379, %v379
        %v585 = vmul.f32 %v380, %v380
        %v586 = vmul.f32 %v381, %v381
        %v587 = vmul.f32 %v382, %v382
        %v588 = vadd.f32 %v572, %v573
        %v589 = vadd.f32 %v588, %v574
        %v590 = vadd.f32 %v589, %v575
        %v591 = vadd.f32 %v590, %v576
        %v592 = vadd.f32 %v591, %v577
        %v593 = vadd.f32 %v592, %v578
        %v594 = vadd.f32 %v593, %v579
        %v595 = vadd.f32 %v594, %v580
        %v596 = vadd.f32 %v595, %v581
        %v597 = vadd.f32 %v596, %v582
        %v598 = vadd.f32 %v597, %v583
        %v599 = vadd.f32 %v598, %v584
        %v600 = vadd.f32 %v599, %v585
        %v601 = vadd.f32 %v600, %v586
        %v602 = vadd.f32 %v601, %v587
        %v603 = vrot.slane %v602, 4
        %v604 = vadd.f32 %v602, %v603
        %v605 = vrot.slane %v604, 2
        %v606 = vadd.f32 %v604, %v605
        %v607 = vrot.slane %v606, 1
        %v608 = vadd.f32 %v606, %v607
        %609 = vst [vmem:[%s204] sm:$0x1] %v608
      $region40: #{anet_forward.3} parent=31 // pred_fallthru
        _
      %p610 = scmp.lt.s32.totalorder %s16, 1
      %s611 = scalar_select %p610, %s16, 1
      %s612 = scalar_lea.vmem %s3, %s611
      %p613 = scmp.lt.s32.totalorder %s16, 1
      %s614 = scalar_select %p613, %s16, 1
      %s615 = scalar_lea.vmem %s4, %s614
      // Predicated region
      $region41: #{anet_forward.3} parent=31 // pred_check
        %p616 = pneg %p102
      $region42: #{anet_forward.3} parent=31 // pred_check_branch
        %618 = sbr.rel (%p616) target = $region44
      $region43: #{anet_forward.3} parent=31 // pred_region
        _
      $region44: #{anet_forward.3} parent=31 // pred_fallthru
        _
      // Predicated region
      $region45: #{anet_forward.3} parent=31 // pred_check
        %p619 = pneg %p128
      $region46: #{anet_forward.3} parent=31 // pred_check_branch
        %621 = sbr.rel (%p619) target = $region48
      $region47: #{anet_forward.3} parent=31 // pred_region
        _
      $region48: #{anet_forward.3} parent=31 // pred_fallthru
        _
    $region32: #{anet_forward.3} parent=5 // pred_fallthru
      _
    %p622 = scmp.le.s32.totalorder 2, %s11
    // Predicated region
    $region49: #{anet_forward.3} parent=5 // pred_check
      %p623 = pneg %p622
    $region50: #{anet_forward.3} parent=5 // pred_check_branch
      %625 = sbr.rel (%p623) target = $region52
    $region51: #{anet_forward.3} parent=5 // pred_region
      %s626 = ssub.s32 %s11, 2
      // Predicated region
      $region53: #{anet_forward.3} parent=51 // pred_check
        %p627 = pneg %p108
      $region54: #{anet_forward.3} parent=51 // pred_check_branch
        %629 = sbr.rel (%p627) target = $region56
      $region55: #{anet_forward.3} parent=51 // pred_region
        %p630 = scmp.lt.s32.totalorder %s17, 1
        %s631 = scalar_select %p630, %s17, 1
        %s632 = scalar_lea.vmem %s3, %s631
      $region56: #{anet_forward.3} parent=51 // pred_fallthru
        _
      // Predicated region
      $region57: #{anet_forward.3} parent=51 // pred_check
        %p633 = pneg %p134
      $region58: #{anet_forward.3} parent=51 // pred_check_branch
        %635 = sbr.rel (%p633) target = $region60
      $region59: #{anet_forward.3} parent=51 // pred_region
        %p636 = scmp.lt.s32.totalorder %s17, 1
        %s637 = scalar_select %p636, %s17, 1
        %s638 = scalar_lea.vmem %s4, %s637
      $region60: #{anet_forward.3} parent=51 // pred_fallthru
        _
    $region52: #{anet_forward.3} parent=5 // pred_fallthru
      _
  $region6: #{anet_forward.3} parent=0 // loop_footer
    %s15 = sadd.s32 1, %s11
  $region7: #{anet_forward.3} parent=0 // loop_footer_branch
    %10 = sbr.rel target = $region3
  $region8: #{anet_forward.3} parent=0 // loop_exit
    _

// kernel: anet_forward.4
$region0: #{anet_forward.4}
  #allocation0 [shape = 'u32[]', space=smem, size = 0x4, offset = 0x4, fixed_abs, tag = 'smem constant byte address 0x4 - core index']
  #allocation1 [shape = 'u32[144,128]{1,0:T(1,128)}', space=vmem, size = 0x12000, scoped, tag = 'internal scratch']
  %s0 = inlined_call_operand.vmem [shape: f32[256,16], index: 0, kind: input, shape index: {}]
  %s1 = inlined_call_operand.vmem [shape: bf16[16,128], index: 1, kind: input, shape index: {}]
  %s2 = inlined_call_operand.vmem [shape: f32[1,128], index: 2, kind: input, shape index: {}]
  %s3 = inlined_call_operand.vmem [shape: bf16[128,256], index: 3, kind: input, shape index: {}]
  %s4 = inlined_call_operand.vmem [shape: f32[1,256], index: 4, kind: input, shape index: {}]
  %s5 = inlined_call_operand.vmem [shape: f32[2,1,256], index: 5, kind: output, shape index: {0}]
  %s6 = inlined_call_operand.vmem [shape: f32[2,1,256], index: 6, kind: output, shape index: {1}]
  %7 = xla_tuple %s5, %s6
  %s8 = sld [smem:[#allocation0]]
  $region69: #{anet_forward.4} parent=0
    _
  %s10 = ssub.s32 1, %s8
  %s11 = scalar_select 0, %s10, %s8
  loop: start=0, step=1, limit=4
  $region2: #{anet_forward.4} parent=0 // loop_pre_header
    _
  $region3: #{anet_forward.4} parent=0 // loop_header
    %s13 = sphi 0, %s17
    %p14 = scmp.ge.s32.totalorder %s13, 4
    %s23 = sphi 0, %s25
    %s26 = sphi 0, %s23
    %s27 = sphi 0, %s26
    %s43 = sphi 0, %s27
    %s47 = sphi 0, %s47
    %s49 = sphi 0, %s47
    %s50 = sphi 0, %s49
    %s64 = sphi 0, %s50
    %s68 = sphi 0, %s68
    %s70 = sphi 0, %s68
    %s71 = sphi 0, %s70
    %s85 = sphi 0, %s71
    %s89 = sphi 0, %s89
    %s91 = sphi 0, %s89
    %s92 = sphi 0, %s91
    %s106 = sphi 0, %s92
    %s110 = sphi 0, %s110
    %s112 = sphi 0, %s110
    %s113 = sphi 0, %s112
    %s127 = sphi 0, %s113
    %s133 = sphi 0, %s135
    %s136 = sphi 0, %s133
    %s137 = sphi 0, %s136
    %s153 = sphi 0, %s137
    %s159 = sphi 0, %s161
    %s162 = sphi 0, %s159
    %s163 = sphi 0, %s162
    %s179 = sphi 0, %s163
  $region4: #{anet_forward.4} parent=0 // loop_header_branch
    %16 = sbr.rel (%p14) target = $region8
  $region5: #{anet_forward.4} parent=0 // loop_body
    %s18 = ssub.s32 %s13, 1
    %s19 = ssub.s32 %s13, 2
    %s20 = sadd.s32 %s13, 1
    %s21 = ssub.s32 %s13, %s20
    %p22 = scmp.eq.s32.totalorder %s21, 0
    %s24 = sadd.s32 %s23, 1
    %s25 = scalar_select %p22, %s23, %s24
    %p28 = pneg %p22
    %p29 = scmp.eq.s32.totalorder %s13, 1
    %p30 = por %p28, %p29
    %p31 = scmp.ne.s32.totalorder %s23, %s26
    %p32 = scmp.eq.s32.totalorder %s13, 0
    %p33 = por %p31, %p32
    %p34 = scmp.ne.s32.totalorder %s23, %s26
    %p35 = scmp.eq.s32.totalorder %s18, 1
    %p36 = por %p34, %p35
    %p37 = scmp.ne.s32.totalorder %s26, %s27
    %p38 = scmp.eq.s32.totalorder %s18, 0
    %p39 = por %p37, %p38
    %p40 = scmp.ne.s32.totalorder %s26, %s27
    %p41 = scmp.eq.s32.totalorder %s19, 1
    %p42 = por %p40, %p41
    %p44 = scmp.ne.s32.totalorder %s27, %s43
    %p45 = scmp.eq.s32.totalorder %s19, 0
    %p46 = por %p44, %p45
    %s48 = sadd.s32 %s47, 1
    %p51 = scmp.eq.s32.totalorder %s13, 1
    %p52 = scmp.ne.s32.totalorder %s47, %s49
    %p53 = scmp.eq.s32.totalorder %s13, 0
    %p54 = por %p52, %p53
    %p55 = scmp.ne.s32.totalorder %s47, %s49
    %p56 = scmp.eq.s32.totalorder %s18, 1
    %p57 = por %p55, %p56
    %p58 = scmp.ne.s32.totalorder %s49, %s50
    %p59 = scmp.eq.s32.totalorder %s18, 0
    %p60 = por %p58, %p59
    %p61 = scmp.ne.s32.totalorder %s49, %s50
    %p62 = scmp.eq.s32.totalorder %s19, 1
    %p63 = por %p61, %p62
    %p65 = scmp.ne.s32.totalorder %s50, %s64
    %p66 = scmp.eq.s32.totalorder %s19, 0
    %p67 = por %p65, %p66
    %s69 = sadd.s32 %s68, 1
    %p72 = scmp.eq.s32.totalorder %s13, 1
    %p73 = scmp.ne.s32.totalorder %s68, %s70
    %p74 = scmp.eq.s32.totalorder %s13, 0
    %p75 = por %p73, %p74
    %p76 = scmp.ne.s32.totalorder %s68, %s70
    %p77 = scmp.eq.s32.totalorder %s18, 1
    %p78 = por %p76, %p77
    %p79 = scmp.ne.s32.totalorder %s70, %s71
    %p80 = scmp.eq.s32.totalorder %s18, 0
    %p81 = por %p79, %p80
    %p82 = scmp.ne.s32.totalorder %s70, %s71
    %p83 = scmp.eq.s32.totalorder %s19, 1
    %p84 = por %p82, %p83
    %p86 = scmp.ne.s32.totalorder %s71, %s85
    %p87 = scmp.eq.s32.totalorder %s19, 0
    %p88 = por %p86, %p87
    %s90 = sadd.s32 %s89, 1
    %p93 = scmp.eq.s32.totalorder %s13, 1
    %p94 = scmp.ne.s32.totalorder %s89, %s91
    %p95 = scmp.eq.s32.totalorder %s13, 0
    %p96 = por %p94, %p95
    %p97 = scmp.ne.s32.totalorder %s89, %s91
    %p98 = scmp.eq.s32.totalorder %s18, 1
    %p99 = por %p97, %p98
    %p100 = scmp.ne.s32.totalorder %s91, %s92
    %p101 = scmp.eq.s32.totalorder %s18, 0
    %p102 = por %p100, %p101
    %p103 = scmp.ne.s32.totalorder %s91, %s92
    %p104 = scmp.eq.s32.totalorder %s19, 1
    %p105 = por %p103, %p104
    %p107 = scmp.ne.s32.totalorder %s92, %s106
    %p108 = scmp.eq.s32.totalorder %s19, 0
    %p109 = por %p107, %p108
    %s111 = sadd.s32 %s110, 1
    %p114 = scmp.eq.s32.totalorder %s13, 1
    %p115 = scmp.ne.s32.totalorder %s110, %s112
    %p116 = scmp.eq.s32.totalorder %s13, 0
    %p117 = por %p115, %p116
    %p118 = scmp.ne.s32.totalorder %s110, %s112
    %p119 = scmp.eq.s32.totalorder %s18, 1
    %p120 = por %p118, %p119
    %p121 = scmp.ne.s32.totalorder %s112, %s113
    %p122 = scmp.eq.s32.totalorder %s18, 0
    %p123 = por %p121, %p122
    %p124 = scmp.ne.s32.totalorder %s112, %s113
    %p125 = scmp.eq.s32.totalorder %s19, 1
    %p126 = por %p124, %p125
    %p128 = scmp.ne.s32.totalorder %s113, %s127
    %p129 = scmp.eq.s32.totalorder %s19, 0
    %p130 = por %p128, %p129
    %s131 = ssub.s32 %s13, %s20
    %p132 = scmp.eq.s32.totalorder %s131, 0
    %s134 = sadd.s32 %s133, 1
    %s135 = scalar_select %p132, %s133, %s134
    %p138 = pneg %p132
    %p139 = scmp.eq.s32.totalorder %s13, 1
    %p140 = por %p138, %p139
    %p141 = scmp.ne.s32.totalorder %s133, %s136
    %p142 = scmp.eq.s32.totalorder %s13, 0
    %p143 = por %p141, %p142
    %p144 = scmp.ne.s32.totalorder %s133, %s136
    %p145 = scmp.eq.s32.totalorder %s18, 1
    %p146 = por %p144, %p145
    %p147 = scmp.ne.s32.totalorder %s136, %s137
    %p148 = scmp.eq.s32.totalorder %s18, 0
    %p149 = por %p147, %p148
    %p150 = scmp.ne.s32.totalorder %s136, %s137
    %p151 = scmp.eq.s32.totalorder %s19, 1
    %p152 = por %p150, %p151
    %p154 = scmp.ne.s32.totalorder %s137, %s153
    %p155 = scmp.eq.s32.totalorder %s19, 0
    %p156 = por %p154, %p155
    %s157 = ssub.s32 %s13, %s20
    %p158 = scmp.eq.s32.totalorder %s157, 0
    %s160 = sadd.s32 %s159, 1
    %s161 = scalar_select %p158, %s159, %s160
    %p164 = pneg %p158
    %p165 = scmp.eq.s32.totalorder %s13, 1
    %p166 = por %p164, %p165
    %p167 = scmp.ne.s32.totalorder %s159, %s162
    %p168 = scmp.eq.s32.totalorder %s13, 0
    %p169 = por %p167, %p168
    %p170 = scmp.ne.s32.totalorder %s159, %s162
    %p171 = scmp.eq.s32.totalorder %s18, 1
    %p172 = por %p170, %p171
    %p173 = scmp.ne.s32.totalorder %s162, %s163
    %p174 = scmp.eq.s32.totalorder %s18, 0
    %p175 = por %p173, %p174
    %p176 = scmp.ne.s32.totalorder %s162, %s163
    %p177 = scmp.eq.s32.totalorder %s19, 1
    %p178 = por %p176, %p177
    %p180 = scmp.ne.s32.totalorder %s163, %s179
    %p181 = scmp.eq.s32.totalorder %s19, 0
    %p182 = por %p180, %p181
    %p183 = scmp.le.s32.totalorder 1, %s13
    %p184 = scmp.lt.s32.totalorder %s13, 3
    %p185 = pnand %p183, %p184
    %p186 = pneg %p185
    // Predicated region
    $region9: #{anet_forward.4} parent=5 // pred_check
      _
    $region10: #{anet_forward.4} parent=5 // pred_check_branch
      %188 = sbr.rel (%p185) target = $region12
    $region11: #{anet_forward.4} parent=5 // pred_region
      %s189 = ssub.s32 %s13, 1
      // Predicated region
      $region13: #{anet_forward.4} parent=11 // pred_check
        %p190 = pneg %p60
      $region14: #{anet_forward.4} parent=11 // pred_check_branch
        %192 = sbr.rel (%p190) target = $region16
      $region15: #{anet_forward.4} parent=11 // pred_region
        _
      $region16: #{anet_forward.4} parent=11 // pred_fallthru
        _
      // Predicated region
      $region17: #{anet_forward.4} parent=11 // pred_check
        %p193 = pneg %p81
      $region18: #{anet_forward.4} parent=11 // pred_check_branch
        %195 = sbr.rel (%p193) target = $region20
      $region19: #{anet_forward.4} parent=11 // pred_region
        _
      $region20: #{anet_forward.4} parent=11 // pred_fallthru
        _
      // Predicated region
      $region21: #{anet_forward.4} parent=11 // pred_check
        %p196 = pneg %p102
      $region22: #{anet_forward.4} parent=11 // pred_check_branch
        %198 = sbr.rel (%p196) target = $region24
      $region23: #{anet_forward.4} parent=11 // pred_region
        _
      $region24: #{anet_forward.4} parent=11 // pred_fallthru
        _
      // Predicated region
      $region25: #{anet_forward.4} parent=11 // pred_check
        %p199 = pneg %p123
      $region26: #{anet_forward.4} parent=11 // pred_check_branch
        %201 = sbr.rel (%p199) target = $region28
      $region27: #{anet_forward.4} parent=11 // pred_region
        _
      $region28: #{anet_forward.4} parent=11 // pred_fallthru
        _
    $region12: #{anet_forward.4} parent=5 // pred_fallthru
      _
    %p202 = scmp.lt.s32.totalorder %s13, 2
    // Predicated region
    $region29: #{anet_forward.4} parent=5 // pred_check
      %p203 = pneg %p202
    $region30: #{anet_forward.4} parent=5 // pred_check_branch
      %205 = sbr.rel (%p203) target = $region32
    $region31: #{anet_forward.4} parent=5 // pred_region
      // Predicated region
      $region33: #{anet_forward.4} parent=31 // pred_check
        %p206 = pneg %p33
      $region34: #{anet_forward.4} parent=31 // pred_check_branch
        %208 = sbr.rel (%p206) target = $region36
      $region35: #{anet_forward.4} parent=31 // pred_region
        %s209 = smul.u32 16, %s13
        %p210 = scmp.lt.s32.totalorder %s209, 31
        %s211 = scalar_select %p210, %s209, 31
        %s212 = smul.addr %s211, 8
        %s213 = scalar_lea.vmem %s0, %s212
        %s214 = smul.u32 16, %s13
      $region36: #{anet_forward.4} parent=31 // pred_fallthru
        _
    $region32: #{anet_forward.4} parent=5 // pred_fallthru
      _
    %p215 = scmp.le.s32.totalorder 1, %s13
    %p216 = scmp.lt.s32.totalorder %s13, 3
    %p217 = pnand %p215, %p216
    %p218 = pneg %p217
    // Predicated region
    $region37: #{anet_forward.4} parent=5 // pred_check
      _
    $region38: #{anet_forward.4} parent=5 // pred_check_branch
      %220 = sbr.rel (%p217) target = $region40
    $region39: #{anet_forward.4} parent=5 // pred_region
      %s221 = ssub.s32 %s13, 1
      %s222 = smul.u32 16, %s18
      %p223 = scmp.lt.s32.totalorder %s222, 31
      %s224 = scalar_select %p223, %s222, 31
      %s225 = smul.addr %s224, 8
      %s226 = scalar_lea.vmem %s0, %s225
      %p227 = pneg %p39
      %p228 = pneg %p36
      %p229 = pneg %p60
      %p230 = pneg %p57
      %p231 = pneg %p81
      %p232 = pneg %p78
      %p233 = pneg %p102
      %p234 = pneg %p99
      %p235 = pneg %p123
      %p236 = pneg %p120
      %p237 = pneg %p149
      %p238 = pneg %p146
      %p239 = scmp.lt.s32.totalorder %s18, 1
      %s240 = scalar_select %p239, %s18, 1
      %s241 = smul.addr %s240, 2
      %s242 = scalar_lea.vmem %s5, %s241
      %p243 = pneg %p175
      %p244 = pneg %p172
      %p245 = scmp.lt.s32.totalorder %s18, 1
      %s246 = scalar_select %p245, %s18, 1
      %s247 = smul.addr %s246, 2
      %s248 = scalar_lea.vmem %s6, %s247
      %s249 = smul.u32 16, %s18
      %p250 = scmp.lt.s32.totalorder %s249, 31
      %s251 = scalar_select %p250, %s249, 31
      %s252 = smul.addr %s251, 8
      %s253 = scalar_lea.vmem %s0, %s252
      %s254 = smul.u32 16, %s18
      %p255 = scmp.lt.s32.totalorder %s18, 1
      %s256 = scalar_select %p255, %s18, 1
      %s257 = smul.addr %s256, 2
      %s258 = scalar_lea.vmem %s5, %s257
      %p259 = scmp.lt.s32.totalorder %s18, 1
      %s260 = scalar_select %p259, %s18, 1
      %s261 = smul.addr %s260, 2
      %s262 = scalar_lea.vmem %s6, %s261
      %v264 = vld [vmem:[%s253] sm:$0xff]
      %v265 = vld [vmem:[%s253 + $0x8] sm:$0xff]
      %v266 = vld [vmem:[%s253 + $0x10] sm:$0xff]
      %v267 = vld [vmem:[%s253 + $0x18] sm:$0xff]
      %v268 = vld [vmem:[%s253 + $0x20] sm:$0xff]
      %v269 = vld [vmem:[%s253 + $0x28] sm:$0xff]
      %v270 = vld [vmem:[%s253 + $0x30] sm:$0xff]
      %v271 = vld [vmem:[%s253 + $0x38] sm:$0xff]
      %v272 = vld [vmem:[%s253 + $0x40] sm:$0xff]
      %v273 = vld [vmem:[%s253 + $0x48] sm:$0xff]
      %v274 = vld [vmem:[%s253 + $0x50] sm:$0xff]
      %v275 = vld [vmem:[%s253 + $0x58] sm:$0xff]
      %v276 = vld [vmem:[%s253 + $0x60] sm:$0xff]
      %v277 = vld [vmem:[%s253 + $0x68] sm:$0xff]
      %v278 = vld [vmem:[%s253 + $0x70] sm:$0xff]
      %v279 = vld [vmem:[%s253 + $0x78] sm:$0xff]
      %v280 = vpack.c.bf16 %v265, %v264
      %v281 = vpack.c.bf16 %v267, %v266
      %v282 = vpack.c.bf16 %v269, %v268
      %v283 = vpack.c.bf16 %v271, %v270
      %v284 = vpack.c.bf16 %v273, %v272
      %v285 = vpack.c.bf16 %v275, %v274
      %v286 = vpack.c.bf16 %v277, %v276
      %v287 = vpack.c.bf16 %v279, %v278
      %v288 = vld [vmem:[%s1] sm:$0xf]
      %v289 = vld [vmem:[%s1 + $0x4] sm:$0xf]
      %v290 = vld [vmem:[%s2] sm:$0x1]
      %v292 = vlaneseq
      %v293 = vshrl.u32 %v292, 7
      %v294 = vsub.s32 0, %v293
      %v295 = vrot.slane %v290, %v294
      %v299 = vunpack.c.l.b16 %v288
      %v300 = vunpack.c.l.b16 %v289
      %v301 = vpack.c.b16 %v300, %v299
      %vm303 = vcmask 130048
      %v305 = vsel %vm303, %v280, 0
      %v308 = vsel %vm303, %v281, 0
      %v311 = vsel %vm303, %v282, 0
      %v314 = vsel %vm303, %v283, 0
      %v317 = vsel %vm303, %v284, 0
      %v320 = vsel %vm303, %v285, 0
      %v323 = vsel %vm303, %v286, 0
      %v326 = vsel %vm303, %v287, 0
      %328 = vmatprep.subr.bf16.mxu0 0
      %329 = vmatpush1.bf16.msra.mxu0 %v301
      %330 = vmatprep.subr.bf16.mxu0 0
      %331 = vmatpush1.bf16.msra.mxu0 0
      %332 = vmatprep.subr.bf16.mxu0 0
      %333 = vmatpush1.bf16.msra.mxu0 0
      %334 = vmatprep.subr.bf16.mxu0 0
      %335 = vmatpush1.bf16.msra.mxu0 0
      %336 = vmatprep.subr.bf16.mxu0 0
      %337 = vmatpush1.bf16.msra.mxu0 0
      %338 = vmatprep.subr.bf16.mxu0 0
      %339 = vmatpush1.bf16.msra.mxu0 0
      %340 = vmatprep.subr.bf16.mxu0 0
      %341 = vmatpush1.bf16.msra.mxu0 0
      %342 = vmatprep.subr.bf16.mxu0 0
      %343 = vmatpush1.bf16.msra.mxu0 0
      %344 = vmatprep.subr.bf16.mxu0 0
      %345 = vmatpush1.bf16.msra.mxu0 0
      %346 = vmatprep.subr.bf16.mxu0 0
      %347 = vmatpush1.bf16.msra.mxu0 0
      %348 = vmatprep.subr.bf16.mxu0 0
      %349 = vmatpush1.bf16.msra.mxu0 0
      %350 = vmatprep.subr.bf16.mxu0 0
      %351 = vmatpush1.bf16.msra.mxu0 0
      %352 = vmatprep.subr.bf16.mxu0 0
      %353 = vmatpush1.bf16.msra.mxu0 0
      %354 = vmatprep.subr.bf16.mxu0 0
      %355 = vmatpush1.bf16.msra.mxu0 0
      %356 = vmatprep.subr.bf16.mxu0 0
      %357 = vmatpush1.bf16.msra.mxu0 0
      %358 = vmatprep.subr.bf16.mxu0 0
      %359 = vmatpush1.bf16.msra.mxu0 0
      %360 = vmatprep.mubr.bf16.mxu0 0
      %361 = vmatmul.mubr.bf16.gmra.mrb[0].mxu0 %v305
      %v362 = vpop.f32.mrb[0].mxu0
      %v363 = vadd.f32 %v295, %v362
      %v364 = vpop.f32.mrb[0].mxu0
      %v365 = vpop.f32.mrb[0].mxu0
      %v366 = vadd.f32 %v295, %v365
      %v367 = vpop.f32.mrb[0].mxu0
      %368 = vmatprep.mubr.bf16.mxu0 0
      %369 = vmatmul.mubr.bf16.gmra.mrb[0].mxu0 %v308
      %v370 = vpop.f32.mrb[0].mxu0
      %v371 = vadd.f32 %v295, %v370
      %v372 = vpop.f32.mrb[0].mxu0
      %v373 = vpop.f32.mrb[0].mxu0
      %v374 = vadd.f32 %v295, %v373
      %v375 = vpop.f32.mrb[0].mxu0
      %376 = vmatprep.mubr.bf16.mxu0 0
      %377 = vmatmul.mubr.bf16.gmra.mrb[0].mxu0 %v311
      %v378 = vpop.f32.mrb[0].mxu0
      %v379 = vadd.f32 %v295, %v378
      %v380 = vpop.f32.mrb[0].mxu0
      %v381 = vpop.f32.mrb[0].mxu0
      %v382 = vadd.f32 %v295, %v381
      %v383 = vpop.f32.mrb[0].mxu0
      %384 = vmatprep.mubr.bf16.mxu0 0
      %385 = vmatmul.mubr.bf16.gmra.mrb[0].mxu0 %v314
      %v386 = vpop.f32.mrb[0].mxu0
      %v387 = vadd.f32 %v295, %v386
      %v388 = vpop.f32.mrb[0].mxu0
      %v389 = vpop.f32.mrb[0].mxu0
      %v390 = vadd.f32 %v295, %v389
      %v391 = vpop.f32.mrb[0].mxu0
      %392 = vmatprep.mubr.bf16.mxu0 0
      %393 = vmatmul.mubr.bf16.gmra.mrb[0].mxu0 %v317
      %v394 = vpop.f32.mrb[0].mxu0
      %v395 = vadd.f32 %v295, %v394
      %v396 = vpop.f32.mrb[0].mxu0
      %v397 = vpop.f32.mrb[0].mxu0
      %v398 = vadd.f32 %v295, %v397
      %v399 = vpop.f32.mrb[0].mxu0
      %400 = vmatprep.mubr.bf16.mxu0 0
      %401 = vmatmul.mubr.bf16.gmra.mrb[0].mxu0 %v320
      %v402 = vpop.f32.mrb[0].mxu0
      %v403 = vadd.f32 %v295, %v402
      %v404 = vpop.f32.mrb[0].mxu0
      %v405 = vpop.f32.mrb[0].mxu0
      %v406 = vadd.f32 %v295, %v405
      %v407 = vpop.f32.mrb[0].mxu0
      %408 = vmatprep.mubr.bf16.mxu0 0
      %409 = vmatmul.mubr.bf16.gmra.mrb[0].mxu0 %v323
      %v410 = vpop.f32.mrb[0].mxu0
      %v411 = vadd.f32 %v295, %v410
      %v412 = vpop.f32.mrb[0].mxu0
      %v413 = vpop.f32.mrb[0].mxu0
      %v414 = vadd.f32 %v295, %v413
      %v415 = vpop.f32.mrb[0].mxu0
      %416 = vmatprep.mubr.bf16.mxu0 0
      %417 = vmatmul.mubr.bf16.gmra.mrb[0].mxu0 %v326
      %v418 = vpop.f32.mrb[0].mxu0
      %v419 = vadd.f32 %v295, %v418
      %v420 = vpop.f32.mrb[0].mxu0
      %v421 = vpop.f32.mrb[0].mxu0
      %v422 = vadd.f32 %v295, %v421
      %v423 = vpop.f32.mrb[0].mxu0
      %424 = vdwg.mxu0
      %v425 = vmax.f32 %v363, 0.0
      %v426 = vmax.f32 %v366, 0.0
      %v427 = vmax.f32 %v371, 0.0
      %v428 = vmax.f32 %v374, 0.0
      %v429 = vmax.f32 %v379, 0.0
      %v430 = vmax.f32 %v382, 0.0
      %v431 = vmax.f32 %v387, 0.0
      %v432 = vmax.f32 %v390, 0.0
      %v433 = vmax.f32 %v395, 0.0
      %v434 = vmax.f32 %v398, 0.0
      %v435 = vmax.f32 %v403, 0.0
      %v436 = vmax.f32 %v406, 0.0
      %v437 = vmax.f32 %v411, 0.0
      %v438 = vmax.f32 %v414, 0.0
      %v439 = vmax.f32 %v419, 0.0
      %v440 = vmax.f32 %v422, 0.0
      %v441 = vpack.c.bf16 %v426, %v425
      %v442 = vpack.c.bf16 %v428, %v427
      %v443 = vpack.c.bf16 %v430, %v429
      %v444 = vpack.c.bf16 %v432, %v431
      %v445 = vpack.c.bf16 %v434, %v433
      %v446 = vpack.c.bf16 %v436, %v435
      %v447 = vpack.c.bf16 %v438, %v437
      %v448 = vpack.c.bf16 %v440, %v439
      %v449 = vld [vmem:[%s3] sm:$0xff]
      %v450 = vld [vmem:[%s3 + $0x8] sm:$0xff]
      %v451 = vld [vmem:[%s3 + $0x10] sm:$0xff]
      %v452 = vld [vmem:[%s3 + $0x18] sm:$0xff]
      %v453 = vld [vmem:[%s3 + $0x20] sm:$0xff]
      %v454 = vld [vmem:[%s3 + $0x28] sm:$0xff]
      %v455 = vld [vmem:[%s3 + $0x30] sm:$0xff]
      %v456 = vld [vmem:[%s3 + $0x38] sm:$0xff]
      %v457 = vld [vmem:[%s3 + $0x40] sm:$0xff]
      %v458 = vld [vmem:[%s3 + $0x48] sm:$0xff]
      %v459 = vld [vmem:[%s3 + $0x50] sm:$0xff]
      %v460 = vld [vmem:[%s3 + $0x58] sm:$0xff]
      %v461 = vld [vmem:[%s3 + $0x60] sm:$0xff]
      %v462 = vld [vmem:[%s3 + $0x68] sm:$0xff]
      %v463 = vld [vmem:[%s3 + $0x70] sm:$0xff]
      %v464 = vld [vmem:[%s3 + $0x78] sm:$0xff]
      %v465 = vld [vmem:[%s4] sm:$0x3]
      %v467 = vlaneseq
      %v468 = vshrl.u32 %v467, 7
      %v469 = vsub.s32 0, %v468
      %v470 = vrot.slane %v465, %v469
      %v471 = vlaneseq
      %v472 = vshrl.u32 %v471, 7
      %v473 = vsub.s32 1, %v472
      %v474 = vrot.slane %v465, %v473
      %v493 = vunpack.c.l.b16 %v449
      %v494 = vunpack.c.h.b16 %v449
      %v495 = vunpack.c.l.b16 %v450
      %v496 = vunpack.c.h.b16 %v450
      %v497 = vunpack.c.l.b16 %v451
      %v498 = vunpack.c.h.b16 %v451
      %v499 = vunpack.c.l.b16 %v452
      %v500 = vunpack.c.h.b16 %v452
      %v501 = vunpack.c.l.b16 %v453
      %v502 = vunpack.c.h.b16 %v453
      %v503 = vunpack.c.l.b16 %v454
      %v504 = vunpack.c.h.b16 %v454
      %v505 = vunpack.c.l.b16 %v455
      %v506 = vunpack.c.h.b16 %v455
      %v507 = vunpack.c.l.b16 %v456
      %v508 = vunpack.c.h.b16 %v456
      %v509 = vunpack.c.l.b16 %v457
      %v510 = vunpack.c.h.b16 %v457
      %v511 = vunpack.c.l.b16 %v458
      %v512 = vunpack.c.h.b16 %v458
      %v513 = vunpack.c.l.b16 %v459
      %v514 = vunpack.c.h.b16 %v459
      %v515 = vunpack.c.l.b16 %v460
      %v516 = vunpack.c.h.b16 %v460
      %v517 = vunpack.c.l.b16 %v461
      %v518 = vunpack.c.h.b16 %v461
      %v519 = vunpack.c.l.b16 %v462
      %v520 = vunpack.c.h.b16 %v462
      %v521 = vunpack.c.l.b16 %v463
      %v522 = vunpack.c.h.b16 %v463
      %v523 = vunpack.c.l.b16 %v464
      %v524 = vunpack.c.h.b16 %v464
      %v525 = vpack.c.b16 %v495, %v493
      %v526 = vpack.c.b16 %v496, %v494
      %v527 = vpack.c.b16 %v499, %v497
      %v528 = vpack.c.b16 %v500, %v498
      %v529 = vpack.c.b16 %v503, %v501
      %v530 = vpack.c.b16 %v504, %v502
      %v531 = vpack.c.b16 %v507, %v505
      %v532 = vpack.c.b16 %v508, %v506
      %v533 = vpack.c.b16 %v511, %v509
      %v534 = vpack.c.b16 %v512, %v510
      %v535 = vpack.c.b16 %v515, %v513
      %v536 = vpack.c.b16 %v516, %v514
      %v537 = vpack.c.b16 %v519, %v517
      %v538 = vpack.c.b16 %v520, %v518
      %v539 = vpack.c.b16 %v523, %v521
      %v540 = vpack.c.b16 %v524, %v522
      %557 = vmatprep.subr.bf16.mxu0 %v526
      %558 = vmatpush1.bf16.msra.mxu0 %v525
      %559 = vmatprep.subr.bf16.mxu0 %v528
      %560 = vmatpush1.bf16.msra.mxu0 %v527
      %561 = vmatprep.subr.bf16.mxu0 %v530
      %562 = vmatpush1.bf16.msra.mxu0 %v529
      %563 = vmatprep.subr.bf16.mxu0 %v532
      %564 = vmatpush1.bf16.msra.mxu0 %v531
      %565 = vmatprep.subr.bf16.mxu0 %v534
      %566 = vmatpush1.bf16.msra.mxu0 %v533
      %567 = vmatprep.subr.bf16.mxu0 %v536
      %568 = vmatpush1.bf16.msra.mxu0 %v535
      %569 = vmatprep.subr.bf16.mxu0 %v538
      %570 = vmatpush1.bf16.msra.mxu0 %v537
      %571 = vmatprep.subr.bf16.mxu0 %v540
      %572 = vmatpush1.bf16.msra.mxu0 %v539
      %573 = vmatprep.subr.bf16.mxu0 0
      %574 = vmatpush1.bf16.msra.mxu0 0
      %575 = vmatprep.subr.bf16.mxu0 0
      %576 = vmatpush1.bf16.msra.mxu0 0
      %577 = vmatprep.subr.bf16.mxu0 0
      %578 = vmatpush1.bf16.msra.mxu0 0
      %579 = vmatprep.subr.bf16.mxu0 0
      %580 = vmatpush1.bf16.msra.mxu0 0
      %581 = vmatprep.subr.bf16.mxu0 0
      %582 = vmatpush1.bf16.msra.mxu0 0
      %583 = vmatprep.subr.bf16.mxu0 0
      %584 = vmatpush1.bf16.msra.mxu0 0
      %585 = vmatprep.subr.bf16.mxu0 0
      %586 = vmatpush1.bf16.msra.mxu0 0
      %587 = vmatprep.subr.bf16.mxu0 0
      %588 = vmatpush1.bf16.msra.mxu0 0
      %589 = vmatprep.mubr.bf16.mxu0 0
      %590 = vmatmul.mubr.bf16.gmra.mrb[0].mxu0 %v441
      %v591 = vpop.f32.mrb[0].mxu0
      %v592 = vadd.f32 %v470, %v591
      %v593 = vpop.f32.mrb[0].mxu0
      %v594 = vadd.f32 %v474, %v593
      %v595 = vpop.f32.mrb[0].mxu0
      %v596 = vadd.f32 %v470, %v595
      %v597 = vpop.f32.mrb[0].mxu0
      %v598 = vadd.f32 %v474, %v597
      %599 = vmatprep.mubr.bf16.mxu0 0
      %600 = vmatmul.mubr.bf16.gmra.mrb[0].mxu0 %v442
      %v601 = vpop.f32.mrb[0].mxu0
      %v602 = vadd.f32 %v470, %v601
      %v603 = vpop.f32.mrb[0].mxu0
      %v604 = vadd.f32 %v474, %v603
      %v605 = vpop.f32.mrb[0].mxu0
      %v606 = vadd.f32 %v470, %v605
      %v607 = vpop.f32.mrb[0].mxu0
      %v608 = vadd.f32 %v474, %v607
      %609 = vmatprep.mubr.bf16.mxu0 0
      %610 = vmatmul.mubr.bf16.gmra.mrb[0].mxu0 %v443
      %v611 = vpop.f32.mrb[0].mxu0
      %v612 = vadd.f32 %v470, %v611
      %v613 = vpop.f32.mrb[0].mxu0
      %v614 = vadd.f32 %v474, %v613
      %v615 = vpop.f32.mrb[0].mxu0
      %v616 = vadd.f32 %v470, %v615
      %v617 = vpop.f32.mrb[0].mxu0
      %v618 = vadd.f32 %v474, %v617
      %619 = vmatprep.mubr.bf16.mxu0 0
      %620 = vmatmul.mubr.bf16.gmra.mrb[0].mxu0 %v444
      %v621 = vpop.f32.mrb[0].mxu0
      %v622 = vadd.f32 %v470, %v621
      %v623 = vpop.f32.mrb[0].mxu0
      %v624 = vadd.f32 %v474, %v623
      %v625 = vpop.f32.mrb[0].mxu0
      %v626 = vadd.f32 %v470, %v625
      %v627 = vpop.f32.mrb[0].mxu0
      %v628 = vadd.f32 %v474, %v627
      %629 = vmatprep.mubr.bf16.mxu0 0
      %630 = vmatmul.mubr.bf16.gmra.mrb[0].mxu0 %v445
      %v631 = vpop.f32.mrb[0].mxu0
      %v632 = vadd.f32 %v470, %v631
      %v633 = vpop.f32.mrb[0].mxu0
      %v634 = vadd.f32 %v474, %v633
      %v635 = vpop.f32.mrb[0].mxu0
      %v636 = vadd.f32 %v470, %v635
      %v637 = vpop.f32.mrb[0].mxu0
      %v638 = vadd.f32 %v474, %v637
      %639 = vmatprep.mubr.bf16.mxu0 0
      %640 = vmatmul.mubr.bf16.gmra.mrb[0].mxu0 %v446
      %v641 = vpop.f32.mrb[0].mxu0
      %v642 = vadd.f32 %v470, %v641
      %v643 = vpop.f32.mrb[0].mxu0
      %v644 = vadd.f32 %v474, %v643
      %v645 = vpop.f32.mrb[0].mxu0
      %v646 = vadd.f32 %v470, %v645
      %v647 = vpop.f32.mrb[0].mxu0
      %v648 = vadd.f32 %v474, %v647
      %649 = vmatprep.mubr.bf16.mxu0 0
      %650 = vmatmul.mubr.bf16.gmra.mrb[0].mxu0 %v447
      %v651 = vpop.f32.mrb[0].mxu0
      %v652 = vadd.f32 %v470, %v651
      %v653 = vpop.f32.mrb[0].mxu0
      %v654 = vadd.f32 %v474, %v653
      %v655 = vpop.f32.mrb[0].mxu0
      %v656 = vadd.f32 %v470, %v655
      %v657 = vpop.f32.mrb[0].mxu0
      %v658 = vadd.f32 %v474, %v657
      %659 = vmatprep.mubr.bf16.mxu0 0
      %660 = vmatmul.mubr.bf16.gmra.mrb[0].mxu0 %v448
      %v661 = vpop.f32.mrb[0].mxu0
      %v662 = vadd.f32 %v470, %v661
      %v663 = vpop.f32.mrb[0].mxu0
      %v664 = vadd.f32 %v474, %v663
      %v665 = vpop.f32.mrb[0].mxu0
      %v666 = vadd.f32 %v470, %v665
      %v667 = vpop.f32.mrb[0].mxu0
      %v668 = vadd.f32 %v474, %v667
      %669 = vdwg.mxu0
      %v670 = vmax.f32 %v592, 0.0
      %v671 = vmax.f32 %v594, 0.0
      %v672 = vmax.f32 %v596, 0.0
      %v673 = vmax.f32 %v598, 0.0
      %v674 = vmax.f32 %v602, 0.0
      %v675 = vmax.f32 %v604, 0.0
      %v676 = vmax.f32 %v606, 0.0
      %v677 = vmax.f32 %v608, 0.0
      %v678 = vmax.f32 %v612, 0.0
      %v679 = vmax.f32 %v614, 0.0
      %v680 = vmax.f32 %v616, 0.0
      %v681 = vmax.f32 %v618, 0.0
      %v682 = vmax.f32 %v622, 0.0
      %v683 = vmax.f32 %v624, 0.0
      %v684 = vmax.f32 %v626, 0.0
      %v685 = vmax.f32 %v628, 0.0
      %v686 = vmax.f32 %v632, 0.0
      %v687 = vmax.f32 %v634, 0.0
      %v688 = vmax.f32 %v636, 0.0
      %v689 = vmax.f32 %v638, 0.0
      %v690 = vmax.f32 %v642, 0.0
      %v691 = vmax.f32 %v644, 0.0
      %v692 = vmax.f32 %v646, 0.0
      %v693 = vmax.f32 %v648, 0.0
      %v694 = vmax.f32 %v652, 0.0
      %v695 = vmax.f32 %v654, 0.0
      %v696 = vmax.f32 %v656, 0.0
      %v697 = vmax.f32 %v658, 0.0
      %v698 = vmax.f32 %v662, 0.0
      %v699 = vmax.f32 %v664, 0.0
      %v700 = vmax.f32 %v666, 0.0
      %v701 = vmax.f32 %v668, 0.0
      %p702 = scmp.eq.s32.totalorder %s18, 1
      // Predicated region
      $region41: #{anet_forward.4} parent=39 // pred_check
        %p703 = pneg %p702
      $region42: #{anet_forward.4} parent=39 // pred_check_branch
        %705 = sbr.rel (%p703) target = $region44
      $region43: #{anet_forward.4} parent=39 // pred_region
        %s706 = smul.u32 %s18, 128
        %v707 = vlaneseq
        %v708 = vshrl.u32 %v707, 7
        %v709 = vadd.s32 %v708, 8
        %v710 = vadd.s32 %v708, 16
        %v711 = vadd.s32 %v708, 24
        %v712 = vadd.s32 %v708, 32
        %v713 = vadd.s32 %v708, 40
        %v714 = vadd.s32 %v708, 48
        %v715 = vadd.s32 %v708, 56
        %v716 = vadd.s32 %v708, 64
        %v717 = vadd.s32 %v708, 72
        %v718 = vadd.s32 %v708, 80
        %v719 = vadd.s32 %v708, 88
        %v720 = vadd.s32 %v708, 96
        %v721 = vadd.s32 %v708, 104
        %v722 = vadd.s32 %v708, 112
        %v723 = vadd.s32 %v708, 120
        %v724 = vstv %s706
        %v725 = vadd.s32 %v724, %v708
        %v726 = vadd.s32 %v724, %v709
        %v727 = vadd.s32 %v724, %v710
        %v728 = vadd.s32 %v724, %v711
        %v729 = vadd.s32 %v724, %v712
        %v730 = vadd.s32 %v724, %v713
        %v731 = vadd.s32 %v724, %v714
        %v732 = vadd.s32 %v724, %v715
        %v733 = vadd.s32 %v724, %v716
        %v734 = vadd.s32 %v724, %v717
        %v735 = vadd.s32 %v724, %v718
        %v736 = vadd.s32 %v724, %v719
        %v737 = vadd.s32 %v724, %v720
        %v738 = vadd.s32 %v724, %v721
        %v739 = vadd.s32 %v724, %v722
        %v740 = vadd.s32 %v724, %v723
        %vm741 = vcmp.lt.s32.totalorder %v725, 200
        %vm742 = vcmp.lt.s32.totalorder %v726, 200
        %vm743 = vcmp.lt.s32.totalorder %v727, 200
        %vm744 = vcmp.lt.s32.totalorder %v728, 200
        %vm745 = vcmp.lt.s32.totalorder %v729, 200
        %vm746 = vcmp.lt.s32.totalorder %v730, 200
        %vm747 = vcmp.lt.s32.totalorder %v731, 200
        %vm748 = vcmp.lt.s32.totalorder %v732, 200
        %vm749 = vcmp.lt.s32.totalorder %v733, 200
        %vm750 = vcmp.lt.s32.totalorder %v734, 200
        %vm751 = vcmp.lt.s32.totalorder %v735, 200
        %vm752 = vcmp.lt.s32.totalorder %v736, 200
        %vm753 = vcmp.lt.s32.totalorder %v737, 200
        %vm754 = vcmp.lt.s32.totalorder %v738, 200
        %vm755 = vcmp.lt.s32.totalorder %v739, 200
        %vm756 = vcmp.lt.s32.totalorder %v740, 200
        %v757 = vsel %vm741, 1, 0
        %v758 = vsel %vm742, 1, 0
        %v759 = vsel %vm743, 1, 0
        %v760 = vsel %vm744, 1, 0
        %v761 = vsel %vm745, 1, 0
        %v762 = vsel %vm746, 1, 0
        %v763 = vsel %vm747, 1, 0
        %v764 = vsel %vm748, 1, 0
        %v765 = vsel %vm749, 1, 0
        %v766 = vsel %vm750, 1, 0
        %v767 = vsel %vm751, 1, 0
        %v768 = vsel %vm752, 1, 0
        %v769 = vsel %vm753, 1, 0
        %v770 = vsel %vm754, 1, 0
        %v771 = vsel %vm755, 1, 0
        %v772 = vsel %vm756, 1, 0
        %vm773 = vcmp.eq.s32.totalorder %v757, 1
        %vm774 = vcmp.eq.s32.totalorder %v758, 1
        %vm775 = vcmp.eq.s32.totalorder %v759, 1
        %vm776 = vcmp.eq.s32.totalorder %v760, 1
        %vm777 = vcmp.eq.s32.totalorder %v761, 1
        %vm778 = vcmp.eq.s32.totalorder %v762, 1
        %vm779 = vcmp.eq.s32.totalorder %v763, 1
        %vm780 = vcmp.eq.s32.totalorder %v764, 1
        %vm781 = vcmp.eq.s32.totalorder %v765, 1
        %vm782 = vcmp.eq.s32.totalorder %v766, 1
        %vm783 = vcmp.eq.s32.totalorder %v767, 1
        %vm784 = vcmp.eq.s32.totalorder %v768, 1
        %vm785 = vcmp.eq.s32.totalorder %v769, 1
        %vm786 = vcmp.eq.s32.totalorder %v770, 1
        %vm787 = vcmp.eq.s32.totalorder %v771, 1
        %vm788 = vcmp.eq.s32.totalorder %v772, 1
        %v789 = vsel %vm773, %v670, 0.0
        %v790 = vsel %vm773, %v671, 0.0
        %v791 = vsel %vm774, %v672, 0.0
        %v792 = vsel %vm774, %v673, 0.0
        %v793 = vsel %vm775, %v674, 0.0
        %v794 = vsel %vm775, %v675, 0.0
        %v795 = vsel %vm776, %v676, 0.0
        %v796 = vsel %vm776, %v677, 0.0
        %v797 = vsel %vm777, %v678, 0.0
        %v798 = vsel %vm777, %v679, 0.0
        %v799 = vsel %vm778, %v680, 0.0
        %v800 = vsel %vm778, %v681, 0.0
        %v801 = vsel %vm779, %v682, 0.0
        %v802 = vsel %vm779, %v683, 0.0
        %v803 = vsel %vm780, %v684, 0.0
        %v804 = vsel %vm780, %v685, 0.0
        %v805 = vsel %vm781, %v686, 0.0
        %v806 = vsel %vm781, %v687, 0.0
        %v807 = vsel %vm782, %v688, 0.0
        %v808 = vsel %vm782, %v689, 0.0
        %v809 = vsel %vm783, %v690, 0.0
        %v810 = vsel %vm783, %v691, 0.0
        %v811 = vsel %vm784, %v692, 0.0
        %v812 = vsel %vm784, %v693, 0.0
        %v813 = vsel %vm785, %v694, 0.0
        %v814 = vsel %vm785, %v695, 0.0
        %v815 = vsel %vm786, %v696, 0.0
        %v816 = vsel %vm786, %v697, 0.0
        %v817 = vsel %vm787, %v698, 0.0
        %v818 = vsel %vm787, %v699, 0.0
        %v819 = vsel %vm788, %v700, 0.0
        %v820 = vsel %vm788, %v701, 0.0
        %v821 = vadd.f32 %v789, %v791
        %v822 = vadd.f32 %v821, %v793
        %v823 = vadd.f32 %v822, %v795
        %v824 = vadd.f32 %v823, %v797
        %v825 = vadd.f32 %v824, %v799
        %v826 = vadd.f32 %v825, %v801
        %v827 = vadd.f32 %v826, %v803
        %v828 = vadd.f32 %v827, %v805
        %v829 = vadd.f32 %v828, %v807
        %v830 = vadd.f32 %v829, %v809
        %v831 = vadd.f32 %v830, %v811
        %v832 = vadd.f32 %v831, %v813
        %v833 = vadd.f32 %v832, %v815
        %v834 = vadd.f32 %v833, %v817
        %v835 = vadd.f32 %v834, %v819
        %v836 = vrot.slane %v835, 4
        %v837 = vadd.f32 %v835, %v836
        %v838 = vrot.slane %v837, 2
        %v839 = vadd.f32 %v837, %v838
        %v840 = vrot.slane %v839, 1
        %v841 = vadd.f32 %v839, %v840
        %v842 = vadd.f32 %v790, %v792
        %v843 = vadd.f32 %v842, %v794
        %v844 = vadd.f32 %v843, %v796
        %v845 = vadd.f32 %v844, %v798
        %v846 = vadd.f32 %v845, %v800
        %v847 = vadd.f32 %v846, %v802
        %v848 = vadd.f32 %v847, %v804
        %v849 = vadd.f32 %v848, %v806
        %v850 = vadd.f32 %v849, %v808
        %v851 = vadd.f32 %v850, %v810
        %v852 = vadd.f32 %v851, %v812
        %v853 = vadd.f32 %v852, %v814
        %v854 = vadd.f32 %v853, %v816
        %v855 = vadd.f32 %v854, %v818
        %v856 = vadd.f32 %v855, %v820
        %v857 = vrot.slane %v856, 4
        %v858 = vadd.f32 %v856, %v857
        %v859 = vrot.slane %v858, 2
        %v860 = vadd.f32 %v858, %v859
        %v861 = vrot.slane %v860, 1
        %v862 = vadd.f32 %v860, %v861
        %v865 = vcombine.low %v841, %v862
        %v867 = vunpack.c.l.s4 1966171168
        %v868 = vunpack.c.0.s8 %v867
        %v869 = vlaneseq
        %v870 = vshrl.u32 %v869, 7
        %v871 = vsub.s32 %v868, %v870
        %v872 = vrot.slane %v865, %v871
        %v874 = vunpack.c.l.s4 1966171168
        %v875 = vunpack.c.0.s8 %v874
        %v876 = vlaneseq
        %v877 = vshrl.u32 %v876, 7
        %v878 = vsub.s32 %v875, %v877
        %v879 = vrot.slane %v872, %v878
        %v881 = vlaneseq
        %vm882 = vcmp.ge.s32.totalorder %v881, 0
        %vm883 = vcmp.lt.s32.totalorder %v881, 256
        %vm884 = vmand %vm882, %vm883
        %885 = vst.msk [vmem:[%s258] sm:$0x3] %vm884, %v879
        %v886 = vmul.f32 %v789, %v789
        %v887 = vmul.f32 %v790, %v790
        %v888 = vmul.f32 %v791, %v791
        %v889 = vmul.f32 %v792, %v792
        %v890 = vmul.f32 %v793, %v793
        %v891 = vmul.f32 %v794, %v794
        %v892 = vmul.f32 %v795, %v795
        %v893 = vmul.f32 %v796, %v796
        %v894 = vmul.f32 %v797, %v797
        %v895 = vmul.f32 %v798, %v798
        %v896 = vmul.f32 %v799, %v799
        %v897 = vmul.f32 %v800, %v800
        %v898 = vmul.f32 %v801, %v801
        %v899 = vmul.f32 %v802, %v802
        %v900 = vmul.f32 %v803, %v803
        %v901 = vmul.f32 %v804, %v804
        %v902 = vmul.f32 %v805, %v805
        %v903 = vmul.f32 %v806, %v806
        %v904 = vmul.f32 %v807, %v807
        %v905 = vmul.f32 %v808, %v808
        %v906 = vmul.f32 %v809, %v809
        %v907 = vmul.f32 %v810, %v810
        %v908 = vmul.f32 %v811, %v811
        %v909 = vmul.f32 %v812, %v812
        %v910 = vmul.f32 %v813, %v813
        %v911 = vmul.f32 %v814, %v814
        %v912 = vmul.f32 %v815, %v815
        %v913 = vmul.f32 %v816, %v816
        %v914 = vmul.f32 %v817, %v817
        %v915 = vmul.f32 %v818, %v818
        %v916 = vmul.f32 %v819, %v819
        %v917 = vmul.f32 %v820, %v820
        %v918 = vadd.f32 %v886, %v888
        %v919 = vadd.f32 %v918, %v890
        %v920 = vadd.f32 %v919, %v892
        %v921 = vadd.f32 %v920, %v894
        %v922 = vadd.f32 %v921, %v896
        %v923 = vadd.f32 %v922, %v898
        %v924 = vadd.f32 %v923, %v900
        %v925 = vadd.f32 %v924, %v902
        %v926 = vadd.f32 %v925, %v904
        %v927 = vadd.f32 %v926, %v906
        %v928 = vadd.f32 %v927, %v908
        %v929 = vadd.f32 %v928, %v910
        %v930 = vadd.f32 %v929, %v912
        %v931 = vadd.f32 %v930, %v914
        %v932 = vadd.f32 %v931, %v916
        %v933 = vrot.slane %v932, 4
        %v934 = vadd.f32 %v932, %v933
        %v935 = vrot.slane %v934, 2
        %v936 = vadd.f32 %v934, %v935
        %v937 = vrot.slane %v936, 1
        %v938 = vadd.f32 %v936, %v937
        %v939 = vadd.f32 %v887, %v889
        %v940 = vadd.f32 %v939, %v891
        %v941 = vadd.f32 %v940, %v893
        %v942 = vadd.f32 %v941, %v895
        %v943 = vadd.f32 %v942, %v897
        %v944 = vadd.f32 %v943, %v899
        %v945 = vadd.f32 %v944, %v901
        %v946 = vadd.f32 %v945, %v903
        %v947 = vadd.f32 %v946, %v905
        %v948 = vadd.f32 %v947, %v907
        %v949 = vadd.f32 %v948, %v909
        %v950 = vadd.f32 %v949, %v911
        %v951 = vadd.f32 %v950, %v913
        %v952 = vadd.f32 %v951, %v915
        %v953 = vadd.f32 %v952, %v917
        %v954 = vrot.slane %v953, 4
        %v955 = vadd.f32 %v953, %v954
        %v956 = vrot.slane %v955, 2
        %v957 = vadd.f32 %v955, %v956
        %v958 = vrot.slane %v957, 1
        %v959 = vadd.f32 %v957, %v958
        %v962 = vcombine.low %v938, %v959
        %v964 = vunpack.c.l.s4 1966171168
        %v965 = vunpack.c.0.s8 %v964
        %v966 = vlaneseq
        %v967 = vshrl.u32 %v966, 7
        %v968 = vsub.s32 %v965, %v967
        %v969 = vrot.slane %v962, %v968
        %v971 = vunpack.c.l.s4 1966171168
        %v972 = vunpack.c.0.s8 %v971
        %v973 = vlaneseq
        %v974 = vshrl.u32 %v973, 7
        %v975 = vsub.s32 %v972, %v974
        %v976 = vrot.slane %v969, %v975
        %978 = vst.msk [vmem:[%s262] sm:$0x3] %vm884, %v976
      $region44: #{anet_forward.4} parent=39 // pred_fallthru
        _
      %p979 = scmp.ne.s32.totalorder %s18, 1
      // Predicated region
      $region45: #{anet_forward.4} parent=39 // pred_check
        %p980 = pneg %p979
      $region46: #{anet_forward.4} parent=39 // pred_check_branch
        %982 = sbr.rel (%p980) target = $region48
      $region47: #{anet_forward.4} parent=39 // pred_region
        %v983 = vadd.f32 %v670, %v672
        %v984 = vadd.f32 %v983, %v674
        %v985 = vadd.f32 %v984, %v676
        %v986 = vadd.f32 %v985, %v678
        %v987 = vadd.f32 %v986, %v680
        %v988 = vadd.f32 %v987, %v682
        %v989 = vadd.f32 %v988, %v684
        %v990 = vadd.f32 %v989, %v686
        %v991 = vadd.f32 %v990, %v688
        %v992 = vadd.f32 %v991, %v690
        %v993 = vadd.f32 %v992, %v692
        %v994 = vadd.f32 %v993, %v694
        %v995 = vadd.f32 %v994, %v696
        %v996 = vadd.f32 %v995, %v698
        %v997 = vadd.f32 %v996, %v700
        %v998 = vrot.slane %v997, 4
        %v999 = vadd.f32 %v997, %v998
        %v1000 = vrot.slane %v999, 2
        %v1001 = vadd.f32 %v999, %v1000
        %v1002 = vrot.slane %v1001, 1
        %v1003 = vadd.f32 %v1001, %v1002
        %v1004 = vadd.f32 %v671, %v673
        %v1005 = vadd.f32 %v1004, %v675
        %v1006 = vadd.f32 %v1005, %v677
        %v1007 = vadd.f32 %v1006, %v679
        %v1008 = vadd.f32 %v1007, %v681
        %v1009 = vadd.f32 %v1008, %v683
        %v1010 = vadd.f32 %v1009, %v685
        %v1011 = vadd.f32 %v1010, %v687
        %v1012 = vadd.f32 %v1011, %v689
        %v1013 = vadd.f32 %v1012, %v691
        %v1014 = vadd.f32 %v1013, %v693
        %v1015 = vadd.f32 %v1014, %v695
        %v1016 = vadd.f32 %v1015, %v697
        %v1017 = vadd.f32 %v1016, %v699
        %v1018 = vadd.f32 %v1017, %v701
        %v1019 = vrot.slane %v1018, 4
        %v1020 = vadd.f32 %v1018, %v1019
        %v1021 = vrot.slane %v1020, 2
        %v1022 = vadd.f32 %v1020, %v1021
        %v1023 = vrot.slane %v1022, 1
        %v1024 = vadd.f32 %v1022, %v1023
        %v1027 = vcombine.low %v1003, %v1024
        %v1029 = vunpack.c.l.s4 1966171168
        %v1030 = vunpack.c.0.s8 %v1029
        %v1031 = vlaneseq
        %v1032 = vshrl.u32 %v1031, 7
        %v1033 = vsub.s32 %v1030, %v1032
        %v1034 = vrot.slane %v1027, %v1033
        %v1036 = vunpack.c.l.s4 1966171168
        %v1037 = vunpack.c.0.s8 %v1036
        %v1038 = vlaneseq
        %v1039 = vshrl.u32 %v1038, 7
        %v1040 = vsub.s32 %v1037, %v1039
        %v1041 = vrot.slane %v1034, %v1040
        %v1043 = vlaneseq
        %vm1044 = vcmp.ge.s32.totalorder %v1043, 0
        %vm1045 = vcmp.lt.s32.totalorder %v1043, 256
        %vm1046 = vmand %vm1044, %vm1045
        %1047 = vst.msk [vmem:[%s258] sm:$0x3] %vm1046, %v1041
        %v1048 = vmul.f32 %v670, %v670
        %v1049 = vmul.f32 %v671, %v671
        %v1050 = vmul.f32 %v672, %v672
        %v1051 = vmul.f32 %v673, %v673
        %v1052 = vmul.f32 %v674, %v674
        %v1053 = vmul.f32 %v675, %v675
        %v1054 = vmul.f32 %v676, %v676
        %v1055 = vmul.f32 %v677, %v677
        %v1056 = vmul.f32 %v678, %v678
        %v1057 = vmul.f32 %v679, %v679
        %v1058 = vmul.f32 %v680, %v680
        %v1059 = vmul.f32 %v681, %v681
        %v1060 = vmul.f32 %v682, %v682
        %v1061 = vmul.f32 %v683, %v683
        %v1062 = vmul.f32 %v684, %v684
        %v1063 = vmul.f32 %v685, %v685
        %v1064 = vmul.f32 %v686, %v686
        %v1065 = vmul.f32 %v687, %v687
        %v1066 = vmul.f32 %v688, %v688
        %v1067 = vmul.f32 %v689, %v689
        %v1068 = vmul.f32 %v690, %v690
        %v1069 = vmul.f32 %v691, %v691
        %v1070 = vmul.f32 %v692, %v692
        %v1071 = vmul.f32 %v693, %v693
        %v1072 = vmul.f32 %v694, %v694
        %v1073 = vmul.f32 %v695, %v695
        %v1074 = vmul.f32 %v696, %v696
        %v1075 = vmul.f32 %v697, %v697
        %v1076 = vmul.f32 %v698, %v698
        %v1077 = vmul.f32 %v699, %v699
        %v1078 = vmul.f32 %v700, %v700
        %v1079 = vmul.f32 %v701, %v701
        %v1080 = vadd.f32 %v1048, %v1050
        %v1081 = vadd.f32 %v1080, %v1052
        %v1082 = vadd.f32 %v1081, %v1054
        %v1083 = vadd.f32 %v1082, %v1056
        %v1084 = vadd.f32 %v1083, %v1058
        %v1085 = vadd.f32 %v1084, %v1060
        %v1086 = vadd.f32 %v1085, %v1062
        %v1087 = vadd.f32 %v1086, %v1064
        %v1088 = vadd.f32 %v1087, %v1066
        %v1089 = vadd.f32 %v1088, %v1068
        %v1090 = vadd.f32 %v1089, %v1070
        %v1091 = vadd.f32 %v1090, %v1072
        %v1092 = vadd.f32 %v1091, %v1074
        %v1093 = vadd.f32 %v1092, %v1076
        %v1094 = vadd.f32 %v1093, %v1078
        %v1095 = vrot.slane %v1094, 4
        %v1096 = vadd.f32 %v1094, %v1095
        %v1097 = vrot.slane %v1096, 2
        %v1098 = vadd.f32 %v1096, %v1097
        %v1099 = vrot.slane %v1098, 1
        %v1100 = vadd.f32 %v1098, %v1099
        %v1101 = vadd.f32 %v1049, %v1051
        %v1102 = vadd.f32 %v1101, %v1053
        %v1103 = vadd.f32 %v1102, %v1055
        %v1104 = vadd.f32 %v1103, %v1057
        %v1105 = vadd.f32 %v1104, %v1059
        %v1106 = vadd.f32 %v1105, %v1061
        %v1107 = vadd.f32 %v1106, %v1063
        %v1108 = vadd.f32 %v1107, %v1065
        %v1109 = vadd.f32 %v1108, %v1067
        %v1110 = vadd.f32 %v1109, %v1069
        %v1111 = vadd.f32 %v1110, %v1071
        %v1112 = vadd.f32 %v1111, %v1073
        %v1113 = vadd.f32 %v1112, %v1075
        %v1114 = vadd.f32 %v1113, %v1077
        %v1115 = vadd.f32 %v1114, %v1079
        %v1116 = vrot.slane %v1115, 4
        %v1117 = vadd.f32 %v1115, %v1116
        %v1118 = vrot.slane %v1117, 2
        %v1119 = vadd.f32 %v1117, %v1118
        %v1120 = vrot.slane %v1119, 1
        %v1121 = vadd.f32 %v1119, %v1120
        %v1124 = vcombine.low %v1100, %v1121
        %v1126 = vunpack.c.l.s4 1966171168
        %v1127 = vunpack.c.0.s8 %v1126
        %v1128 = vlaneseq
        %v1129 = vshrl.u32 %v1128, 7
        %v1130 = vsub.s32 %v1127, %v1129
        %v1131 = vrot.slane %v1124, %v1130
        %v1133 = vunpack.c.l.s4 1966171168
        %v1134 = vunpack.c.0.s8 %v1133
        %v1135 = vlaneseq
        %v1136 = vshrl.u32 %v1135, 7
        %v1137 = vsub.s32 %v1134, %v1136
        %v1138 = vrot.slane %v1131, %v1137
        %1140 = vst.msk [vmem:[%s262] sm:$0x3] %vm1046, %v1138
      $region48: #{anet_forward.4} parent=39 // pred_fallthru
        _
      %p1141 = scmp.lt.s32.totalorder %s18, 1
      %s1142 = scalar_select %p1141, %s18, 1
      %s1143 = smul.addr %s1142, 2
      %s1144 = scalar_lea.vmem %s5, %s1143
      %p1145 = scmp.lt.s32.totalorder %s18, 1
      %s1146 = scalar_select %p1145, %s18, 1
      %s1147 = smul.addr %s1146, 2
      %s1148 = scalar_lea.vmem %s6, %s1147
      // Predicated region
      $region49: #{anet_forward.4} parent=39 // pred_check
        %p1149 = pneg %p146
      $region50: #{anet_forward.4} parent=39 // pred_check_branch
        %1151 = sbr.rel (%p1149) target = $region52
      $region51: #{anet_forward.4} parent=39 // pred_region
        _
      $region52: #{anet_forward.4} parent=39 // pred_fallthru
        _
      // Predicated region
      $region53: #{anet_forward.4} parent=39 // pred_check
        %p1152 = pneg %p172
      $region54: #{anet_forward.4} parent=39 // pred_check_branch
        %1154 = sbr.rel (%p1152) target = $region56
      $region55: #{anet_forward.4} parent=39 // pred_region
        _
      $region56: #{anet_forward.4} parent=39 // pred_fallthru
        _
    $region40: #{anet_forward.4} parent=5 // pred_fallthru
      _
    %p1155 = scmp.le.s32.totalorder 2, %s13
    // Predicated region
    $region57: #{anet_forward.4} parent=5 // pred_check
      %p1156 = pneg %p1155
    $region58: #{anet_forward.4} parent=5 // pred_check_branch
      %1158 = sbr.rel (%p1156) target = $region60
    $region59: #{anet_forward.4} parent=5 // pred_region
      %s1159 = ssub.s32 %s13, 2
      // Predicated region
      $region61: #{anet_forward.4} parent=59 // pred_check
        %p1160 = pneg %p152
      $region62: #{anet_forward.4} parent=59 // pred_check_branch
        %1162 = sbr.rel (%p1160) target = $region64
      $region63: #{anet_forward.4} parent=59 // pred_region
        %p1163 = scmp.lt.s32.totalorder %s19, 1
        %s1164 = scalar_select %p1163, %s19, 1
        %s1165 = smul.addr %s1164, 2
        %s1166 = scalar_lea.vmem %s5, %s1165
      $region64: #{anet_forward.4} parent=59 // pred_fallthru
        _
      // Predicated region
      $region65: #{anet_forward.4} parent=59 // pred_check
        %p1167 = pneg %p178
      $region66: #{anet_forward.4} parent=59 // pred_check_branch
        %1169 = sbr.rel (%p1167) target = $region68
      $region67: #{anet_forward.4} parent=59 // pred_region
        %p1170 = scmp.lt.s32.totalorder %s19, 1
        %s1171 = scalar_select %p1170, %s19, 1
        %s1172 = smul.addr %s1171, 2
        %s1173 = scalar_lea.vmem %s6, %s1172
      $region68: #{anet_forward.4} parent=59 // pred_fallthru
        _
    $region60: #{anet_forward.4} parent=5 // pred_fallthru
      _
  $region6: #{anet_forward.4} parent=0 // loop_footer
    %s17 = sadd.s32 1, %s13
  $region7: #{anet_forward.4} parent=0 // loop_footer_branch
    %12 = sbr.rel target = $region3
  $region8: #{anet_forward.4} parent=0 // loop_exit
    _

// kernel: anet_forward.5
$region0: #{anet_forward.5}
  #allocation0 [shape = 'u32[]', space=smem, size = 0x4, offset = 0x4, fixed_abs, tag = 'smem constant byte address 0x4 - core index']
  #allocation1 [shape = 'u32[144,128]{1,0:T(1,128)}', space=vmem, size = 0x12000, scoped, tag = 'internal scratch']
  %s0 = inlined_call_operand.vmem [shape: f32[256,16], index: 0, kind: input, shape index: {}]
  %s1 = inlined_call_operand.vmem [shape: bf16[16,128], index: 1, kind: input, shape index: {}]
  %s2 = inlined_call_operand.vmem [shape: f32[1,128], index: 2, kind: input, shape index: {}]
  %s3 = inlined_call_operand.vmem [shape: bf16[128,256], index: 3, kind: input, shape index: {}]
  %s4 = inlined_call_operand.vmem [shape: f32[1,256], index: 4, kind: input, shape index: {}]
  %s5 = inlined_call_operand.vmem [shape: bf16[256,128], index: 5, kind: input, shape index: {}]
  %s6 = inlined_call_operand.vmem [shape: f32[1,128], index: 6, kind: input, shape index: {}]
  %s7 = inlined_call_operand.vmem [shape: f32[256,4], index: 7, kind: output, shape index: {}]
  %s8 = sld [smem:[#allocation0]]
  $region61: #{anet_forward.5} parent=0
    _
  %s10 = ssub.s32 1, %s8
  %s11 = scalar_select 0, %s10, %s8
  loop: start=0, step=1, limit=4
  $region2: #{anet_forward.5} parent=0 // loop_pre_header
    _
  $region3: #{anet_forward.5} parent=0 // loop_header
    %s13 = sphi 0, %s17
    %p14 = scmp.ge.s32.totalorder %s13, 4
    %s23 = sphi 0, %s25
    %s26 = sphi 0, %s23
    %s27 = sphi 0, %s26
    %s43 = sphi 0, %s27
    %s47 = sphi 0, %s47
    %s49 = sphi 0, %s47
    %s50 = sphi 0, %s49
    %s64 = sphi 0, %s50
    %s68 = sphi 0, %s68
    %s70 = sphi 0, %s68
    %s71 = sphi 0, %s70
    %s85 = sphi 0, %s71
    %s89 = sphi 0, %s89
    %s91 = sphi 0, %s89
    %s92 = sphi 0, %s91
    %s106 = sphi 0, %s92
    %s110 = sphi 0, %s110
    %s112 = sphi 0, %s110
    %s113 = sphi 0, %s112
    %s127 = sphi 0, %s113
    %s131 = sphi 0, %s131
    %s133 = sphi 0, %s131
    %s134 = sphi 0, %s133
    %s148 = sphi 0, %s134
    %s152 = sphi 0, %s152
    %s154 = sphi 0, %s152
    %s155 = sphi 0, %s154
    %s169 = sphi 0, %s155
    %s175 = sphi 0, %s177
    %s178 = sphi 0, %s175
    %s179 = sphi 0, %s178
    %s195 = sphi 0, %s179
  $region4: #{anet_forward.5} parent=0 // loop_header_branch
    %16 = sbr.rel (%p14) target = $region8
  $region5: #{anet_forward.5} parent=0 // loop_body
    %s18 = ssub.s32 %s13, 1
    %s19 = ssub.s32 %s13, 2
    %s20 = sadd.s32 %s13, 1
    %s21 = ssub.s32 %s13, %s20
    %p22 = scmp.eq.s32.totalorder %s21, 0
    %s24 = sadd.s32 %s23, 1
    %s25 = scalar_select %p22, %s23, %s24
    %p28 = pneg %p22
    %p29 = scmp.eq.s32.totalorder %s13, 1
    %p30 = por %p28, %p29
    %p31 = scmp.ne.s32.totalorder %s23, %s26
    %p32 = scmp.eq.s32.totalorder %s13, 0
    %p33 = por %p31, %p32
    %p34 = scmp.ne.s32.totalorder %s23, %s26
    %p35 = scmp.eq.s32.totalorder %s18, 1
    %p36 = por %p34, %p35
    %p37 = scmp.ne.s32.totalorder %s26, %s27
    %p38 = scmp.eq.s32.totalorder %s18, 0
    %p39 = por %p37, %p38
    %p40 = scmp.ne.s32.totalorder %s26, %s27
    %p41 = scmp.eq.s32.totalorder %s19, 1
    %p42 = por %p40, %p41
    %p44 = scmp.ne.s32.totalorder %s27, %s43
    %p45 = scmp.eq.s32.totalorder %s19, 0
    %p46 = por %p44, %p45
    %s48 = sadd.s32 %s47, 1
    %p51 = scmp.eq.s32.totalorder %s13, 1
    %p52 = scmp.ne.s32.totalorder %s47, %s49
    %p53 = scmp.eq.s32.totalorder %s13, 0
    %p54 = por %p52, %p53
    %p55 = scmp.ne.s32.totalorder %s47, %s49
    %p56 = scmp.eq.s32.totalorder %s18, 1
    %p57 = por %p55, %p56
    %p58 = scmp.ne.s32.totalorder %s49, %s50
    %p59 = scmp.eq.s32.totalorder %s18, 0
    %p60 = por %p58, %p59
    %p61 = scmp.ne.s32.totalorder %s49, %s50
    %p62 = scmp.eq.s32.totalorder %s19, 1
    %p63 = por %p61, %p62
    %p65 = scmp.ne.s32.totalorder %s50, %s64
    %p66 = scmp.eq.s32.totalorder %s19, 0
    %p67 = por %p65, %p66
    %s69 = sadd.s32 %s68, 1
    %p72 = scmp.eq.s32.totalorder %s13, 1
    %p73 = scmp.ne.s32.totalorder %s68, %s70
    %p74 = scmp.eq.s32.totalorder %s13, 0
    %p75 = por %p73, %p74
    %p76 = scmp.ne.s32.totalorder %s68, %s70
    %p77 = scmp.eq.s32.totalorder %s18, 1
    %p78 = por %p76, %p77
    %p79 = scmp.ne.s32.totalorder %s70, %s71
    %p80 = scmp.eq.s32.totalorder %s18, 0
    %p81 = por %p79, %p80
    %p82 = scmp.ne.s32.totalorder %s70, %s71
    %p83 = scmp.eq.s32.totalorder %s19, 1
    %p84 = por %p82, %p83
    %p86 = scmp.ne.s32.totalorder %s71, %s85
    %p87 = scmp.eq.s32.totalorder %s19, 0
    %p88 = por %p86, %p87
    %s90 = sadd.s32 %s89, 1
    %p93 = scmp.eq.s32.totalorder %s13, 1
    %p94 = scmp.ne.s32.totalorder %s89, %s91
    %p95 = scmp.eq.s32.totalorder %s13, 0
    %p96 = por %p94, %p95
    %p97 = scmp.ne.s32.totalorder %s89, %s91
    %p98 = scmp.eq.s32.totalorder %s18, 1
    %p99 = por %p97, %p98
    %p100 = scmp.ne.s32.totalorder %s91, %s92
    %p101 = scmp.eq.s32.totalorder %s18, 0
    %p102 = por %p100, %p101
    %p103 = scmp.ne.s32.totalorder %s91, %s92
    %p104 = scmp.eq.s32.totalorder %s19, 1
    %p105 = por %p103, %p104
    %p107 = scmp.ne.s32.totalorder %s92, %s106
    %p108 = scmp.eq.s32.totalorder %s19, 0
    %p109 = por %p107, %p108
    %s111 = sadd.s32 %s110, 1
    %p114 = scmp.eq.s32.totalorder %s13, 1
    %p115 = scmp.ne.s32.totalorder %s110, %s112
    %p116 = scmp.eq.s32.totalorder %s13, 0
    %p117 = por %p115, %p116
    %p118 = scmp.ne.s32.totalorder %s110, %s112
    %p119 = scmp.eq.s32.totalorder %s18, 1
    %p120 = por %p118, %p119
    %p121 = scmp.ne.s32.totalorder %s112, %s113
    %p122 = scmp.eq.s32.totalorder %s18, 0
    %p123 = por %p121, %p122
    %p124 = scmp.ne.s32.totalorder %s112, %s113
    %p125 = scmp.eq.s32.totalorder %s19, 1
    %p126 = por %p124, %p125
    %p128 = scmp.ne.s32.totalorder %s113, %s127
    %p129 = scmp.eq.s32.totalorder %s19, 0
    %p130 = por %p128, %p129
    %s132 = sadd.s32 %s131, 1
    %p135 = scmp.eq.s32.totalorder %s13, 1
    %p136 = scmp.ne.s32.totalorder %s131, %s133
    %p137 = scmp.eq.s32.totalorder %s13, 0
    %p138 = por %p136, %p137
    %p139 = scmp.ne.s32.totalorder %s131, %s133
    %p140 = scmp.eq.s32.totalorder %s18, 1
    %p141 = por %p139, %p140
    %p142 = scmp.ne.s32.totalorder %s133, %s134
    %p143 = scmp.eq.s32.totalorder %s18, 0
    %p144 = por %p142, %p143
    %p145 = scmp.ne.s32.totalorder %s133, %s134
    %p146 = scmp.eq.s32.totalorder %s19, 1
    %p147 = por %p145, %p146
    %p149 = scmp.ne.s32.totalorder %s134, %s148
    %p150 = scmp.eq.s32.totalorder %s19, 0
    %p151 = por %p149, %p150
    %s153 = sadd.s32 %s152, 1
    %p156 = scmp.eq.s32.totalorder %s13, 1
    %p157 = scmp.ne.s32.totalorder %s152, %s154
    %p158 = scmp.eq.s32.totalorder %s13, 0
    %p159 = por %p157, %p158
    %p160 = scmp.ne.s32.totalorder %s152, %s154
    %p161 = scmp.eq.s32.totalorder %s18, 1
    %p162 = por %p160, %p161
    %p163 = scmp.ne.s32.totalorder %s154, %s155
    %p164 = scmp.eq.s32.totalorder %s18, 0
    %p165 = por %p163, %p164
    %p166 = scmp.ne.s32.totalorder %s154, %s155
    %p167 = scmp.eq.s32.totalorder %s19, 1
    %p168 = por %p166, %p167
    %p170 = scmp.ne.s32.totalorder %s155, %s169
    %p171 = scmp.eq.s32.totalorder %s19, 0
    %p172 = por %p170, %p171
    %s173 = ssub.s32 %s13, %s20
    %p174 = scmp.eq.s32.totalorder %s173, 0
    %s176 = sadd.s32 %s175, 1
    %s177 = scalar_select %p174, %s175, %s176
    %p180 = pneg %p174
    %p181 = scmp.eq.s32.totalorder %s13, 1
    %p182 = por %p180, %p181
    %p183 = scmp.ne.s32.totalorder %s175, %s178
    %p184 = scmp.eq.s32.totalorder %s13, 0
    %p185 = por %p183, %p184
    %p186 = scmp.ne.s32.totalorder %s175, %s178
    %p187 = scmp.eq.s32.totalorder %s18, 1
    %p188 = por %p186, %p187
    %p189 = scmp.ne.s32.totalorder %s178, %s179
    %p190 = scmp.eq.s32.totalorder %s18, 0
    %p191 = por %p189, %p190
    %p192 = scmp.ne.s32.totalorder %s178, %s179
    %p193 = scmp.eq.s32.totalorder %s19, 1
    %p194 = por %p192, %p193
    %p196 = scmp.ne.s32.totalorder %s179, %s195
    %p197 = scmp.eq.s32.totalorder %s19, 0
    %p198 = por %p196, %p197
    %p199 = scmp.le.s32.totalorder 1, %s13
    %p200 = scmp.lt.s32.totalorder %s13, 3
    %p201 = pnand %p199, %p200
    %p202 = pneg %p201
    // Predicated region
    $region9: #{anet_forward.5} parent=5 // pred_check
      _
    $region10: #{anet_forward.5} parent=5 // pred_check_branch
      %204 = sbr.rel (%p201) target = $region12
    $region11: #{anet_forward.5} parent=5 // pred_region
      %s205 = ssub.s32 %s13, 1
      // Predicated region
      $region13: #{anet_forward.5} parent=11 // pred_check
        %p206 = pneg %p60
      $region14: #{anet_forward.5} parent=11 // pred_check_branch
        %208 = sbr.rel (%p206) target = $region16
      $region15: #{anet_forward.5} parent=11 // pred_region
        _
      $region16: #{anet_forward.5} parent=11 // pred_fallthru
        _
      // Predicated region
      $region17: #{anet_forward.5} parent=11 // pred_check
        %p209 = pneg %p81
      $region18: #{anet_forward.5} parent=11 // pred_check_branch
        %211 = sbr.rel (%p209) target = $region20
      $region19: #{anet_forward.5} parent=11 // pred_region
        _
      $region20: #{anet_forward.5} parent=11 // pred_fallthru
        _
      // Predicated region
      $region21: #{anet_forward.5} parent=11 // pred_check
        %p212 = pneg %p102
      $region22: #{anet_forward.5} parent=11 // pred_check_branch
        %214 = sbr.rel (%p212) target = $region24
      $region23: #{anet_forward.5} parent=11 // pred_region
        _
      $region24: #{anet_forward.5} parent=11 // pred_fallthru
        _
      // Predicated region
      $region25: #{anet_forward.5} parent=11 // pred_check
        %p215 = pneg %p123
      $region26: #{anet_forward.5} parent=11 // pred_check_branch
        %217 = sbr.rel (%p215) target = $region28
      $region27: #{anet_forward.5} parent=11 // pred_region
        _
      $region28: #{anet_forward.5} parent=11 // pred_fallthru
        _
      // Predicated region
      $region29: #{anet_forward.5} parent=11 // pred_check
        %p218 = pneg %p144
      $region30: #{anet_forward.5} parent=11 // pred_check_branch
        %220 = sbr.rel (%p218) target = $region32
      $region31: #{anet_forward.5} parent=11 // pred_region
        _
      $region32: #{anet_forward.5} parent=11 // pred_fallthru
        _
      // Predicated region
      $region33: #{anet_forward.5} parent=11 // pred_check
        %p221 = pneg %p165
      $region34: #{anet_forward.5} parent=11 // pred_check_branch
        %223 = sbr.rel (%p221) target = $region36
      $region35: #{anet_forward.5} parent=11 // pred_region
        _
      $region36: #{anet_forward.5} parent=11 // pred_fallthru
        _
    $region12: #{anet_forward.5} parent=5 // pred_fallthru
      _
    %p224 = scmp.lt.s32.totalorder %s13, 2
    // Predicated region
    $region37: #{anet_forward.5} parent=5 // pred_check
      %p225 = pneg %p224
    $region38: #{anet_forward.5} parent=5 // pred_check_branch
      %227 = sbr.rel (%p225) target = $region40
    $region39: #{anet_forward.5} parent=5 // pred_region
      // Predicated region
      $region41: #{anet_forward.5} parent=39 // pred_check
        %p228 = pneg %p33
      $region42: #{anet_forward.5} parent=39 // pred_check_branch
        %230 = sbr.rel (%p228) target = $region44
      $region43: #{anet_forward.5} parent=39 // pred_region
        %s231 = smul.u32 16, %s13
        %p232 = scmp.lt.s32.totalorder %s231, 31
        %s233 = scalar_select %p232, %s231, 31
        %s234 = smul.addr %s233, 8
        %s235 = scalar_lea.vmem %s0, %s234
        %s236 = smul.u32 16, %s13
      $region44: #{anet_forward.5} parent=39 // pred_fallthru
        _
    $region40: #{anet_forward.5} parent=5 // pred_fallthru
      _
    %p237 = scmp.le.s32.totalorder 1, %s13
    %p238 = scmp.lt.s32.totalorder %s13, 3
    %p239 = pnand %p237, %p238
    %p240 = pneg %p239
    // Predicated region
    $region45: #{anet_forward.5} parent=5 // pred_check
      _
    $region46: #{anet_forward.5} parent=5 // pred_check_branch
      %242 = sbr.rel (%p239) target = $region48
    $region47: #{anet_forward.5} parent=5 // pred_region
      %s243 = ssub.s32 %s13, 1
      %s244 = smul.u32 16, %s18
      %p245 = scmp.lt.s32.totalorder %s244, 31
      %s246 = scalar_select %p245, %s244, 31
      %s247 = smul.addr %s246, 8
      %s248 = scalar_lea.vmem %s0, %s247
      %p249 = pneg %p39
      %p250 = pneg %p36
      %p251 = pneg %p60
      %p252 = pneg %p57
      %p253 = pneg %p81
      %p254 = pneg %p78
      %p255 = pneg %p102
      %p256 = pneg %p99
      %p257 = pneg %p123
      %p258 = pneg %p120
      %p259 = pneg %p144
      %p260 = pneg %p141
      %p261 = pneg %p165
      %p262 = pneg %p162
      %p263 = pneg %p191
      %p264 = pneg %p188
      %s265 = smul.u32 16, %s18
      %p266 = scmp.lt.s32.totalorder %s265, 31
      %s267 = scalar_select %p266, %s265, 31
      %s268 = smul.addr %s267, 8
      %s269 = scalar_lea.vmem %s7, %s268
      %s270 = smul.u32 16, %s18
      %p271 = scmp.lt.s32.totalorder %s270, 31
      %s272 = scalar_select %p271, %s270, 31
      %s273 = smul.addr %s272, 8
      %s274 = scalar_lea.vmem %s0, %s273
      %s275 = smul.u32 16, %s18
      %s276 = smul.u32 16, %s18
      %p277 = scmp.lt.s32.totalorder %s276, 31
      %s278 = scalar_select %p277, %s276, 31
      %s279 = smul.addr %s278, 8
      %s280 = scalar_lea.vmem %s7, %s279
      %s281 = smul.u32 16, %s18
      %v283 = vld [vmem:[%s274] sm:$0xff]
      %v284 = vld [vmem:[%s274 + $0x8] sm:$0xff]
      %v285 = vld [vmem:[%s274 + $0x10] sm:$0xff]
      %v286 = vld [vmem:[%s274 + $0x18] sm:$0xff]
      %v287 = vld [vmem:[%s274 + $0x20] sm:$0xff]
      %v288 = vld [vmem:[%s274 + $0x28] sm:$0xff]
      %v289 = vld [vmem:[%s274 + $0x30] sm:$0xff]
      %v290 = vld [vmem:[%s274 + $0x38] sm:$0xff]
      %v291 = vld [vmem:[%s274 + $0x40] sm:$0xff]
      %v292 = vld [vmem:[%s274 + $0x48] sm:$0xff]
      %v293 = vld [vmem:[%s274 + $0x50] sm:$0xff]
      %v294 = vld [vmem:[%s274 + $0x58] sm:$0xff]
      %v295 = vld [vmem:[%s274 + $0x60] sm:$0xff]
      %v296 = vld [vmem:[%s274 + $0x68] sm:$0xff]
      %v297 = vld [vmem:[%s274 + $0x70] sm:$0xff]
      %v298 = vld [vmem:[%s274 + $0x78] sm:$0xff]
      %v299 = vpack.c.bf16 %v284, %v283
      %v300 = vpack.c.bf16 %v286, %v285
      %v301 = vpack.c.bf16 %v288, %v287
      %v302 = vpack.c.bf16 %v290, %v289
      %v303 = vpack.c.bf16 %v292, %v291
      %v304 = vpack.c.bf16 %v294, %v293
      %v305 = vpack.c.bf16 %v296, %v295
      %v306 = vpack.c.bf16 %v298, %v297
      %v307 = vld [vmem:[%s1] sm:$0xf]
      %v308 = vld [vmem:[%s1 + $0x4] sm:$0xf]
      %v309 = vld [vmem:[%s2] sm:$0x1]
      %v311 = vlaneseq
      %v312 = vshrl.u32 %v311, 7
      %v313 = vsub.s32 0, %v312
      %v314 = vrot.slane %v309, %v313
      %v318 = vunpack.c.l.b16 %v307
      %v319 = vunpack.c.l.b16 %v308
      %v320 = vpack.c.b16 %v319, %v318
      %vm322 = vcmask 130048
      %v324 = vsel %vm322, %v299, 0
      %v327 = vsel %vm322, %v300, 0
      %v330 = vsel %vm322, %v301, 0
      %v333 = vsel %vm322, %v302, 0
      %v336 = vsel %vm322, %v303, 0
      %v339 = vsel %vm322, %v304, 0
      %v342 = vsel %vm322, %v305, 0
      %v345 = vsel %vm322, %v306, 0
      %347 = vmatprep.subr.bf16.mxu0 0
      %348 = vmatpush1.bf16.msra.mxu0 %v320
      %349 = vmatprep.subr.bf16.mxu0 0
      %350 = vmatpush1.bf16.msra.mxu0 0
      %351 = vmatprep.subr.bf16.mxu0 0
      %352 = vmatpush1.bf16.msra.mxu0 0
      %353 = vmatprep.subr.bf16.mxu0 0
      %354 = vmatpush1.bf16.msra.mxu0 0
      %355 = vmatprep.subr.bf16.mxu0 0
      %356 = vmatpush1.bf16.msra.mxu0 0
      %357 = vmatprep.subr.bf16.mxu0 0
      %358 = vmatpush1.bf16.msra.mxu0 0
      %359 = vmatprep.subr.bf16.mxu0 0
      %360 = vmatpush1.bf16.msra.mxu0 0
      %361 = vmatprep.subr.bf16.mxu0 0
      %362 = vmatpush1.bf16.msra.mxu0 0
      %363 = vmatprep.subr.bf16.mxu0 0
      %364 = vmatpush1.bf16.msra.mxu0 0
      %365 = vmatprep.subr.bf16.mxu0 0
      %366 = vmatpush1.bf16.msra.mxu0 0
      %367 = vmatprep.subr.bf16.mxu0 0
      %368 = vmatpush1.bf16.msra.mxu0 0
      %369 = vmatprep.subr.bf16.mxu0 0
      %370 = vmatpush1.bf16.msra.mxu0 0
      %371 = vmatprep.subr.bf16.mxu0 0
      %372 = vmatpush1.bf16.msra.mxu0 0
      %373 = vmatprep.subr.bf16.mxu0 0
      %374 = vmatpush1.bf16.msra.mxu0 0
      %375 = vmatprep.subr.bf16.mxu0 0
      %376 = vmatpush1.bf16.msra.mxu0 0
      %377 = vmatprep.subr.bf16.mxu0 0
      %378 = vmatpush1.bf16.msra.mxu0 0
      %379 = vmatprep.mubr.bf16.mxu0 0
      %380 = vmatmul.mubr.bf16.gmra.mrb[0].mxu0 %v324
      %v381 = vpop.f32.mrb[0].mxu0
      %v382 = vadd.f32 %v314, %v381
      %v383 = vpop.f32.mrb[0].mxu0
      %v384 = vpop.f32.mrb[0].mxu0
      %v385 = vadd.f32 %v314, %v384
      %v386 = vpop.f32.mrb[0].mxu0
      %387 = vmatprep.mubr.bf16.mxu0 0
      %388 = vmatmul.mubr.bf16.gmra.mrb[0].mxu0 %v327
      %v389 = vpop.f32.mrb[0].mxu0
      %v390 = vadd.f32 %v314, %v389
      %v391 = vpop.f32.mrb[0].mxu0
      %v392 = vpop.f32.mrb[0].mxu0
      %v393 = vadd.f32 %v314, %v392
      %v394 = vpop.f32.mrb[0].mxu0
      %395 = vmatprep.mubr.bf16.mxu0 0
      %396 = vmatmul.mubr.bf16.gmra.mrb[0].mxu0 %v330
      %v397 = vpop.f32.mrb[0].mxu0
      %v398 = vadd.f32 %v314, %v397
      %v399 = vpop.f32.mrb[0].mxu0
      %v400 = vpop.f32.mrb[0].mxu0
      %v401 = vadd.f32 %v314, %v400
      %v402 = vpop.f32.mrb[0].mxu0
      %403 = vmatprep.mubr.bf16.mxu0 0
      %404 = vmatmul.mubr.bf16.gmra.mrb[0].mxu0 %v333
      %v405 = vpop.f32.mrb[0].mxu0
      %v406 = vadd.f32 %v314, %v405
      %v407 = vpop.f32.mrb[0].mxu0
      %v408 = vpop.f32.mrb[0].mxu0
      %v409 = vadd.f32 %v314, %v408
      %v410 = vpop.f32.mrb[0].mxu0
      %411 = vmatprep.mubr.bf16.mxu0 0
      %412 = vmatmul.mubr.bf16.gmra.mrb[0].mxu0 %v336
      %v413 = vpop.f32.mrb[0].mxu0
      %v414 = vadd.f32 %v314, %v413
      %v415 = vpop.f32.mrb[0].mxu0
      %v416 = vpop.f32.mrb[0].mxu0
      %v417 = vadd.f32 %v314, %v416
      %v418 = vpop.f32.mrb[0].mxu0
      %419 = vmatprep.mubr.bf16.mxu0 0
      %420 = vmatmul.mubr.bf16.gmra.mrb[0].mxu0 %v339
      %v421 = vpop.f32.mrb[0].mxu0
      %v422 = vadd.f32 %v314, %v421
      %v423 = vpop.f32.mrb[0].mxu0
      %v424 = vpop.f32.mrb[0].mxu0
      %v425 = vadd.f32 %v314, %v424
      %v426 = vpop.f32.mrb[0].mxu0
      %427 = vmatprep.mubr.bf16.mxu0 0
      %428 = vmatmul.mubr.bf16.gmra.mrb[0].mxu0 %v342
      %v429 = vpop.f32.mrb[0].mxu0
      %v430 = vadd.f32 %v314, %v429
      %v431 = vpop.f32.mrb[0].mxu0
      %v432 = vpop.f32.mrb[0].mxu0
      %v433 = vadd.f32 %v314, %v432
      %v434 = vpop.f32.mrb[0].mxu0
      %435 = vmatprep.mubr.bf16.mxu0 0
      %436 = vmatmul.mubr.bf16.gmra.mrb[0].mxu0 %v345
      %v437 = vpop.f32.mrb[0].mxu0
      %v438 = vadd.f32 %v314, %v437
      %v439 = vpop.f32.mrb[0].mxu0
      %v440 = vpop.f32.mrb[0].mxu0
      %v441 = vadd.f32 %v314, %v440
      %v442 = vpop.f32.mrb[0].mxu0
      %443 = vdwg.mxu0
      %v444 = vmax.f32 %v382, 0.0
      %v445 = vmax.f32 %v385, 0.0
      %v446 = vmax.f32 %v390, 0.0
      %v447 = vmax.f32 %v393, 0.0
      %v448 = vmax.f32 %v398, 0.0
      %v449 = vmax.f32 %v401, 0.0
      %v450 = vmax.f32 %v406, 0.0
      %v451 = vmax.f32 %v409, 0.0
      %v452 = vmax.f32 %v414, 0.0
      %v453 = vmax.f32 %v417, 0.0
      %v454 = vmax.f32 %v422, 0.0
      %v455 = vmax.f32 %v425, 0.0
      %v456 = vmax.f32 %v430, 0.0
      %v457 = vmax.f32 %v433, 0.0
      %v458 = vmax.f32 %v438, 0.0
      %v459 = vmax.f32 %v441, 0.0
      %v460 = vpack.c.bf16 %v445, %v444
      %v461 = vpack.c.bf16 %v447, %v446
      %v462 = vpack.c.bf16 %v449, %v448
      %v463 = vpack.c.bf16 %v451, %v450
      %v464 = vpack.c.bf16 %v453, %v452
      %v465 = vpack.c.bf16 %v455, %v454
      %v466 = vpack.c.bf16 %v457, %v456
      %v467 = vpack.c.bf16 %v459, %v458
      %v468 = vld [vmem:[%s3] sm:$0xff]
      %v469 = vld [vmem:[%s3 + $0x8] sm:$0xff]
      %v470 = vld [vmem:[%s3 + $0x10] sm:$0xff]
      %v471 = vld [vmem:[%s3 + $0x18] sm:$0xff]
      %v472 = vld [vmem:[%s3 + $0x20] sm:$0xff]
      %v473 = vld [vmem:[%s3 + $0x28] sm:$0xff]
      %v474 = vld [vmem:[%s3 + $0x30] sm:$0xff]
      %v475 = vld [vmem:[%s3 + $0x38] sm:$0xff]
      %v476 = vld [vmem:[%s3 + $0x40] sm:$0xff]
      %v477 = vld [vmem:[%s3 + $0x48] sm:$0xff]
      %v478 = vld [vmem:[%s3 + $0x50] sm:$0xff]
      %v479 = vld [vmem:[%s3 + $0x58] sm:$0xff]
      %v480 = vld [vmem:[%s3 + $0x60] sm:$0xff]
      %v481 = vld [vmem:[%s3 + $0x68] sm:$0xff]
      %v482 = vld [vmem:[%s3 + $0x70] sm:$0xff]
      %v483 = vld [vmem:[%s3 + $0x78] sm:$0xff]
      %v484 = vld [vmem:[%s4] sm:$0x3]
      %v486 = vlaneseq
      %v487 = vshrl.u32 %v486, 7
      %v488 = vsub.s32 0, %v487
      %v489 = vrot.slane %v484, %v488
      %v490 = vlaneseq
      %v491 = vshrl.u32 %v490, 7
      %v492 = vsub.s32 1, %v491
      %v493 = vrot.slane %v484, %v492
      %v512 = vunpack.c.l.b16 %v468
      %v513 = vunpack.c.h.b16 %v468
      %v514 = vunpack.c.l.b16 %v469
      %v515 = vunpack.c.h.b16 %v469
      %v516 = vunpack.c.l.b16 %v470
      %v517 = vunpack.c.h.b16 %v470
      %v518 = vunpack.c.l.b16 %v471
      %v519 = vunpack.c.h.b16 %v471
      %v520 = vunpack.c.l.b16 %v472
      %v521 = vunpack.c.h.b16 %v472
      %v522 = vunpack.c.l.b16 %v473
      %v523 = vunpack.c.h.b16 %v473
      %v524 = vunpack.c.l.b16 %v474
      %v525 = vunpack.c.h.b16 %v474
      %v526 = vunpack.c.l.b16 %v475
      %v527 = vunpack.c.h.b16 %v475
      %v528 = vunpack.c.l.b16 %v476
      %v529 = vunpack.c.h.b16 %v476
      %v530 = vunpack.c.l.b16 %v477
      %v531 = vunpack.c.h.b16 %v477
      %v532 = vunpack.c.l.b16 %v478
      %v533 = vunpack.c.h.b16 %v478
      %v534 = vunpack.c.l.b16 %v479
      %v535 = vunpack.c.h.b16 %v479
      %v536 = vunpack.c.l.b16 %v480
      %v537 = vunpack.c.h.b16 %v480
      %v538 = vunpack.c.l.b16 %v481
      %v539 = vunpack.c.h.b16 %v481
      %v540 = vunpack.c.l.b16 %v482
      %v541 = vunpack.c.h.b16 %v482
      %v542 = vunpack.c.l.b16 %v483
      %v543 = vunpack.c.h.b16 %v483
      %v544 = vpack.c.b16 %v514, %v512
      %v545 = vpack.c.b16 %v515, %v513
      %v546 = vpack.c.b16 %v518, %v516
      %v547 = vpack.c.b16 %v519, %v517
      %v548 = vpack.c.b16 %v522, %v520
      %v549 = vpack.c.b16 %v523, %v521
      %v550 = vpack.c.b16 %v526, %v524
      %v551 = vpack.c.b16 %v527, %v525
      %v552 = vpack.c.b16 %v530, %v528
      %v553 = vpack.c.b16 %v531, %v529
      %v554 = vpack.c.b16 %v534, %v532
      %v555 = vpack.c.b16 %v535, %v533
      %v556 = vpack.c.b16 %v538, %v536
      %v557 = vpack.c.b16 %v539, %v537
      %v558 = vpack.c.b16 %v542, %v540
      %v559 = vpack.c.b16 %v543, %v541
      %576 = vmatprep.subr.bf16.mxu0 %v545
      %577 = vmatpush1.bf16.msra.mxu0 %v544
      %578 = vmatprep.subr.bf16.mxu0 %v547
      %579 = vmatpush1.bf16.msra.mxu0 %v546
      %580 = vmatprep.subr.bf16.mxu0 %v549
      %581 = vmatpush1.bf16.msra.mxu0 %v548
      %582 = vmatprep.subr.bf16.mxu0 %v551
      %583 = vmatpush1.bf16.msra.mxu0 %v550
      %584 = vmatprep.subr.bf16.mxu0 %v553
      %585 = vmatpush1.bf16.msra.mxu0 %v552
      %586 = vmatprep.subr.bf16.mxu0 %v555
      %587 = vmatpush1.bf16.msra.mxu0 %v554
      %588 = vmatprep.subr.bf16.mxu0 %v557
      %589 = vmatpush1.bf16.msra.mxu0 %v556
      %590 = vmatprep.subr.bf16.mxu0 %v559
      %591 = vmatpush1.bf16.msra.mxu0 %v558
      %592 = vmatprep.subr.bf16.mxu0 0
      %593 = vmatpush1.bf16.msra.mxu0 0
      %594 = vmatprep.subr.bf16.mxu0 0
      %595 = vmatpush1.bf16.msra.mxu0 0
      %596 = vmatprep.subr.bf16.mxu0 0
      %597 = vmatpush1.bf16.msra.mxu0 0
      %598 = vmatprep.subr.bf16.mxu0 0
      %599 = vmatpush1.bf16.msra.mxu0 0
      %600 = vmatprep.subr.bf16.mxu0 0
      %601 = vmatpush1.bf16.msra.mxu0 0
      %602 = vmatprep.subr.bf16.mxu0 0
      %603 = vmatpush1.bf16.msra.mxu0 0
      %604 = vmatprep.subr.bf16.mxu0 0
      %605 = vmatpush1.bf16.msra.mxu0 0
      %606 = vmatprep.subr.bf16.mxu0 0
      %607 = vmatpush1.bf16.msra.mxu0 0
      %608 = vmatprep.mubr.bf16.mxu0 0
      %609 = vmatmul.mubr.bf16.gmra.mrb[0].mxu0 %v460
      %v610 = vpop.f32.mrb[0].mxu0
      %v611 = vadd.f32 %v489, %v610
      %v612 = vpop.f32.mrb[0].mxu0
      %v613 = vadd.f32 %v493, %v612
      %v614 = vpop.f32.mrb[0].mxu0
      %v615 = vadd.f32 %v489, %v614
      %v616 = vpop.f32.mrb[0].mxu0
      %v617 = vadd.f32 %v493, %v616
      %618 = vmatprep.mubr.bf16.mxu0 0
      %619 = vmatmul.mubr.bf16.gmra.mrb[0].mxu0 %v461
      %v620 = vpop.f32.mrb[0].mxu0
      %v621 = vadd.f32 %v489, %v620
      %v622 = vpop.f32.mrb[0].mxu0
      %v623 = vadd.f32 %v493, %v622
      %v624 = vpop.f32.mrb[0].mxu0
      %v625 = vadd.f32 %v489, %v624
      %v626 = vpop.f32.mrb[0].mxu0
      %v627 = vadd.f32 %v493, %v626
      %628 = vmatprep.mubr.bf16.mxu0 0
      %629 = vmatmul.mubr.bf16.gmra.mrb[0].mxu0 %v462
      %v630 = vpop.f32.mrb[0].mxu0
      %v631 = vadd.f32 %v489, %v630
      %v632 = vpop.f32.mrb[0].mxu0
      %v633 = vadd.f32 %v493, %v632
      %v634 = vpop.f32.mrb[0].mxu0
      %v635 = vadd.f32 %v489, %v634
      %v636 = vpop.f32.mrb[0].mxu0
      %v637 = vadd.f32 %v493, %v636
      %638 = vmatprep.mubr.bf16.mxu0 0
      %639 = vmatmul.mubr.bf16.gmra.mrb[0].mxu0 %v463
      %v640 = vpop.f32.mrb[0].mxu0
      %v641 = vadd.f32 %v489, %v640
      %v642 = vpop.f32.mrb[0].mxu0
      %v643 = vadd.f32 %v493, %v642
      %v644 = vpop.f32.mrb[0].mxu0
      %v645 = vadd.f32 %v489, %v644
      %v646 = vpop.f32.mrb[0].mxu0
      %v647 = vadd.f32 %v493, %v646
      %648 = vmatprep.mubr.bf16.mxu0 0
      %649 = vmatmul.mubr.bf16.gmra.mrb[0].mxu0 %v464
      %v650 = vpop.f32.mrb[0].mxu0
      %v651 = vadd.f32 %v489, %v650
      %v652 = vpop.f32.mrb[0].mxu0
      %v653 = vadd.f32 %v493, %v652
      %v654 = vpop.f32.mrb[0].mxu0
      %v655 = vadd.f32 %v489, %v654
      %v656 = vpop.f32.mrb[0].mxu0
      %v657 = vadd.f32 %v493, %v656
      %658 = vmatprep.mubr.bf16.mxu0 0
      %659 = vmatmul.mubr.bf16.gmra.mrb[0].mxu0 %v465
      %v660 = vpop.f32.mrb[0].mxu0
      %v661 = vadd.f32 %v489, %v660
      %v662 = vpop.f32.mrb[0].mxu0
      %v663 = vadd.f32 %v493, %v662
      %v664 = vpop.f32.mrb[0].mxu0
      %v665 = vadd.f32 %v489, %v664
      %v666 = vpop.f32.mrb[0].mxu0
      %v667 = vadd.f32 %v493, %v666
      %668 = vmatprep.mubr.bf16.mxu0 0
      %669 = vmatmul.mubr.bf16.gmra.mrb[0].mxu0 %v466
      %v670 = vpop.f32.mrb[0].mxu0
      %v671 = vadd.f32 %v489, %v670
      %v672 = vpop.f32.mrb[0].mxu0
      %v673 = vadd.f32 %v493, %v672
      %v674 = vpop.f32.mrb[0].mxu0
      %v675 = vadd.f32 %v489, %v674
      %v676 = vpop.f32.mrb[0].mxu0
      %v677 = vadd.f32 %v493, %v676
      %678 = vmatprep.mubr.bf16.mxu0 0
      %679 = vmatmul.mubr.bf16.gmra.mrb[0].mxu0 %v467
      %v680 = vpop.f32.mrb[0].mxu0
      %v681 = vadd.f32 %v489, %v680
      %v682 = vpop.f32.mrb[0].mxu0
      %v683 = vadd.f32 %v493, %v682
      %v684 = vpop.f32.mrb[0].mxu0
      %v685 = vadd.f32 %v489, %v684
      %v686 = vpop.f32.mrb[0].mxu0
      %v687 = vadd.f32 %v493, %v686
      %688 = vdwg.mxu0
      %v689 = vmax.f32 %v611, 0.0
      %v690 = vmax.f32 %v613, 0.0
      %v691 = vmax.f32 %v615, 0.0
      %v692 = vmax.f32 %v617, 0.0
      %v693 = vmax.f32 %v621, 0.0
      %v694 = vmax.f32 %v623, 0.0
      %v695 = vmax.f32 %v625, 0.0
      %v696 = vmax.f32 %v627, 0.0
      %v697 = vmax.f32 %v631, 0.0
      %v698 = vmax.f32 %v633, 0.0
      %v699 = vmax.f32 %v635, 0.0
      %v700 = vmax.f32 %v637, 0.0
      %v701 = vmax.f32 %v641, 0.0
      %v702 = vmax.f32 %v643, 0.0
      %v703 = vmax.f32 %v645, 0.0
      %v704 = vmax.f32 %v647, 0.0
      %v705 = vmax.f32 %v651, 0.0
      %v706 = vmax.f32 %v653, 0.0
      %v707 = vmax.f32 %v655, 0.0
      %v708 = vmax.f32 %v657, 0.0
      %v709 = vmax.f32 %v661, 0.0
      %v710 = vmax.f32 %v663, 0.0
      %v711 = vmax.f32 %v665, 0.0
      %v712 = vmax.f32 %v667, 0.0
      %v713 = vmax.f32 %v671, 0.0
      %v714 = vmax.f32 %v673, 0.0
      %v715 = vmax.f32 %v675, 0.0
      %v716 = vmax.f32 %v677, 0.0
      %v717 = vmax.f32 %v681, 0.0
      %v718 = vmax.f32 %v683, 0.0
      %v719 = vmax.f32 %v685, 0.0
      %v720 = vmax.f32 %v687, 0.0
      %v721 = vpack.c.bf16 %v691, %v689
      %v722 = vpack.c.bf16 %v692, %v690
      %v723 = vpack.c.bf16 %v695, %v693
      %v724 = vpack.c.bf16 %v696, %v694
      %v725 = vpack.c.bf16 %v699, %v697
      %v726 = vpack.c.bf16 %v700, %v698
      %v727 = vpack.c.bf16 %v703, %v701
      %v728 = vpack.c.bf16 %v704, %v702
      %v729 = vpack.c.bf16 %v707, %v705
      %v730 = vpack.c.bf16 %v708, %v706
      %v731 = vpack.c.bf16 %v711, %v709
      %v732 = vpack.c.bf16 %v712, %v710
      %v733 = vpack.c.bf16 %v715, %v713
      %v734 = vpack.c.bf16 %v716, %v714
      %v735 = vpack.c.bf16 %v719, %v717
      %v736 = vpack.c.bf16 %v720, %v718
      %v737 = vld [vmem:[%s5] sm:$0xf]
      %v738 = vld [vmem:[%s5 + $0x4] sm:$0xf]
      %v739 = vld [vmem:[%s5 + $0x8] sm:$0xf]
      %v740 = vld [vmem:[%s5 + $0xc] sm:$0xf]
      %v741 = vld [vmem:[%s5 + $0x10] sm:$0xf]
      %v742 = vld [vmem:[%s5 + $0x14] sm:$0xf]
      %v743 = vld [vmem:[%s5 + $0x18] sm:$0xf]
      %v744 = vld [vmem:[%s5 + $0x1c] sm:$0xf]
      %v745 = vld [vmem:[%s5 + $0x20] sm:$0xf]
      %v746 = vld [vmem:[%s5 + $0x24] sm:$0xf]
      %v747 = vld [vmem:[%s5 + $0x28] sm:$0xf]
      %v748 = vld [vmem:[%s5 + $0x2c] sm:$0xf]
      %v749 = vld [vmem:[%s5 + $0x30] sm:$0xf]
      %v750 = vld [vmem:[%s5 + $0x34] sm:$0xf]
      %v751 = vld [vmem:[%s5 + $0x38] sm:$0xf]
      %v752 = vld [vmem:[%s5 + $0x3c] sm:$0xf]
      %v753 = vld [vmem:[%s5 + $0x40] sm:$0xf]
      %v754 = vld [vmem:[%s5 + $0x44] sm:$0xf]
      %v755 = vld [vmem:[%s5 + $0x48] sm:$0xf]
      %v756 = vld [vmem:[%s5 + $0x4c] sm:$0xf]
      %v757 = vld [vmem:[%s5 + $0x50] sm:$0xf]
      %v758 = vld [vmem:[%s5 + $0x54] sm:$0xf]
      %v759 = vld [vmem:[%s5 + $0x58] sm:$0xf]
      %v760 = vld [vmem:[%s5 + $0x5c] sm:$0xf]
      %v761 = vld [vmem:[%s5 + $0x60] sm:$0xf]
      %v762 = vld [vmem:[%s5 + $0x64] sm:$0xf]
      %v763 = vld [vmem:[%s5 + $0x68] sm:$0xf]
      %v764 = vld [vmem:[%s5 + $0x6c] sm:$0xf]
      %v765 = vld [vmem:[%s5 + $0x70] sm:$0xf]
      %v766 = vld [vmem:[%s5 + $0x74] sm:$0xf]
      %v767 = vld [vmem:[%s5 + $0x78] sm:$0xf]
      %v768 = vld [vmem:[%s5 + $0x7c] sm:$0xf]
      %v769 = vld [vmem:[%s6] sm:$0x1]
      %v771 = vlaneseq
      %v772 = vshrl.u32 %v771, 7
      %v773 = vsub.s32 0, %v772
      %v774 = vrot.slane %v769, %v773
      %v808 = vunpack.c.l.b16 %v737
      %v809 = vunpack.c.l.b16 %v738
      %v810 = vunpack.c.l.b16 %v739
      %v811 = vunpack.c.l.b16 %v740
      %v812 = vunpack.c.l.b16 %v741
      %v813 = vunpack.c.l.b16 %v742
      %v814 = vunpack.c.l.b16 %v743
      %v815 = vunpack.c.l.b16 %v744
      %v816 = vunpack.c.l.b16 %v745
      %v817 = vunpack.c.l.b16 %v746
      %v818 = vunpack.c.l.b16 %v747
      %v819 = vunpack.c.l.b16 %v748
      %v820 = vunpack.c.l.b16 %v749
      %v821 = vunpack.c.l.b16 %v750
      %v822 = vunpack.c.l.b16 %v751
      %v823 = vunpack.c.l.b16 %v752
      %v824 = vunpack.c.l.b16 %v753
      %v825 = vunpack.c.l.b16 %v754
      %v826 = vunpack.c.l.b16 %v755
      %v827 = vunpack.c.l.b16 %v756
      %v828 = vunpack.c.l.b16 %v757
      %v829 = vunpack.c.l.b16 %v758
      %v830 = vunpack.c.l.b16 %v759
      %v831 = vunpack.c.l.b16 %v760
      %v832 = vunpack.c.l.b16 %v761
      %v833 = vunpack.c.l.b16 %v762
      %v834 = vunpack.c.l.b16 %v763
      %v835 = vunpack.c.l.b16 %v764
      %v836 = vunpack.c.l.b16 %v765
      %v837 = vunpack.c.l.b16 %v766
      %v838 = vunpack.c.l.b16 %v767
      %v839 = vunpack.c.l.b16 %v768
      %v840 = vpack.c.b16 %v809, %v808
      %v841 = vpack.c.b16 %v811, %v810
      %v842 = vpack.c.b16 %v813, %v812
      %v843 = vpack.c.b16 %v815, %v814
      %v844 = vpack.c.b16 %v817, %v816
      %v845 = vpack.c.b16 %v819, %v818
      %v846 = vpack.c.b16 %v821, %v820
      %v847 = vpack.c.b16 %v823, %v822
      %v848 = vpack.c.b16 %v825, %v824
      %v849 = vpack.c.b16 %v827, %v826
      %v850 = vpack.c.b16 %v829, %v828
      %v851 = vpack.c.b16 %v831, %v830
      %v852 = vpack.c.b16 %v833, %v832
      %v853 = vpack.c.b16 %v835, %v834
      %v854 = vpack.c.b16 %v837, %v836
      %v855 = vpack.c.b16 %v839, %v838
      %872 = vmatprep.subr.bf16.mxu0 0
      %873 = vmatpush1.bf16.msra.mxu0 %v840
      %874 = vmatprep.subr.bf16.mxu0 0
      %875 = vmatpush1.bf16.msra.mxu0 %v841
      %876 = vmatprep.subr.bf16.mxu0 0
      %877 = vmatpush1.bf16.msra.mxu0 %v842
      %878 = vmatprep.subr.bf16.mxu0 0
      %879 = vmatpush1.bf16.msra.mxu0 %v843
      %880 = vmatprep.subr.bf16.mxu0 0
      %881 = vmatpush1.bf16.msra.mxu0 %v844
      %882 = vmatprep.subr.bf16.mxu0 0
      %883 = vmatpush1.bf16.msra.mxu0 %v845
      %884 = vmatprep.subr.bf16.mxu0 0
      %885 = vmatpush1.bf16.msra.mxu0 %v846
      %886 = vmatprep.subr.bf16.mxu0 0
      %887 = vmatpush1.bf16.msra.mxu0 %v847
      %888 = vmatprep.subr.bf16.mxu0 0
      %889 = vmatpush1.bf16.msra.mxu0 %v848
      %890 = vmatprep.subr.bf16.mxu0 0
      %891 = vmatpush1.bf16.msra.mxu0 %v849
      %892 = vmatprep.subr.bf16.mxu0 0
      %893 = vmatpush1.bf16.msra.mxu0 %v850
      %894 = vmatprep.subr.bf16.mxu0 0
      %895 = vmatpush1.bf16.msra.mxu0 %v851
      %896 = vmatprep.subr.bf16.mxu0 0
      %897 = vmatpush1.bf16.msra.mxu0 %v852
      %898 = vmatprep.subr.bf16.mxu0 0
      %899 = vmatpush1.bf16.msra.mxu0 %v853
      %900 = vmatprep.subr.bf16.mxu0 0
      %901 = vmatpush1.bf16.msra.mxu0 %v854
      %902 = vmatprep.subr.bf16.mxu0 0
      %903 = vmatpush1.bf16.msra.mxu0 %v855
      %904 = vmatprep.mubr.bf16.mxu0 %v722
      %905 = vmatmul.mubr.bf16.gmra.mrb[0].mxu0 %v721
      %v906 = vpop.f32.mrb[0].mxu0
      %v907 = vadd.f32 %v774, %v906
      %v908 = vpop.f32.mrb[0].mxu0
      %v909 = vpop.f32.mrb[0].mxu0
      %v910 = vadd.f32 %v774, %v909
      %v911 = vpop.f32.mrb[0].mxu0
      %912 = vmatprep.mubr.bf16.mxu0 %v724
      %913 = vmatmul.mubr.bf16.gmra.mrb[0].mxu0 %v723
      %v914 = vpop.f32.mrb[0].mxu0
      %v915 = vadd.f32 %v774, %v914
      %v916 = vpop.f32.mrb[0].mxu0
      %v917 = vpop.f32.mrb[0].mxu0
      %v918 = vadd.f32 %v774, %v917
      %v919 = vpop.f32.mrb[0].mxu0
      %920 = vmatprep.mubr.bf16.mxu0 %v726
      %921 = vmatmul.mubr.bf16.gmra.mrb[0].mxu0 %v725
      %v922 = vpop.f32.mrb[0].mxu0
      %v923 = vadd.f32 %v774, %v922
      %v924 = vpop.f32.mrb[0].mxu0
      %v925 = vpop.f32.mrb[0].mxu0
      %v926 = vadd.f32 %v774, %v925
      %v927 = vpop.f32.mrb[0].mxu0
      %928 = vmatprep.mubr.bf16.mxu0 %v728
      %929 = vmatmul.mubr.bf16.gmra.mrb[0].mxu0 %v727
      %v930 = vpop.f32.mrb[0].mxu0
      %v931 = vadd.f32 %v774, %v930
      %v932 = vpop.f32.mrb[0].mxu0
      %v933 = vpop.f32.mrb[0].mxu0
      %v934 = vadd.f32 %v774, %v933
      %v935 = vpop.f32.mrb[0].mxu0
      %936 = vmatprep.mubr.bf16.mxu0 %v730
      %937 = vmatmul.mubr.bf16.gmra.mrb[0].mxu0 %v729
      %v938 = vpop.f32.mrb[0].mxu0
      %v939 = vadd.f32 %v774, %v938
      %v940 = vpop.f32.mrb[0].mxu0
      %v941 = vpop.f32.mrb[0].mxu0
      %v942 = vadd.f32 %v774, %v941
      %v943 = vpop.f32.mrb[0].mxu0
      %944 = vmatprep.mubr.bf16.mxu0 %v732
      %945 = vmatmul.mubr.bf16.gmra.mrb[0].mxu0 %v731
      %v946 = vpop.f32.mrb[0].mxu0
      %v947 = vadd.f32 %v774, %v946
      %v948 = vpop.f32.mrb[0].mxu0
      %v949 = vpop.f32.mrb[0].mxu0
      %v950 = vadd.f32 %v774, %v949
      %v951 = vpop.f32.mrb[0].mxu0
      %952 = vmatprep.mubr.bf16.mxu0 %v734
      %953 = vmatmul.mubr.bf16.gmra.mrb[0].mxu0 %v733
      %v954 = vpop.f32.mrb[0].mxu0
      %v955 = vadd.f32 %v774, %v954
      %v956 = vpop.f32.mrb[0].mxu0
      %v957 = vpop.f32.mrb[0].mxu0
      %v958 = vadd.f32 %v774, %v957
      %v959 = vpop.f32.mrb[0].mxu0
      %960 = vmatprep.mubr.bf16.mxu0 %v736
      %961 = vmatmul.mubr.bf16.gmra.mrb[0].mxu0 %v735
      %v962 = vpop.f32.mrb[0].mxu0
      %v963 = vadd.f32 %v774, %v962
      %v964 = vpop.f32.mrb[0].mxu0
      %v965 = vpop.f32.mrb[0].mxu0
      %v966 = vadd.f32 %v774, %v965
      %v967 = vpop.f32.mrb[0].mxu0
      %968 = vdwg.mxu0
      %v969 = vxor.u32 %v907, 2147483648
      %v970 = vxor.u32 %v910, 2147483648
      %v971 = vxor.u32 %v915, 2147483648
      %v972 = vxor.u32 %v918, 2147483648
      %v973 = vxor.u32 %v923, 2147483648
      %v974 = vxor.u32 %v926, 2147483648
      %v975 = vxor.u32 %v931, 2147483648
      %v976 = vxor.u32 %v934, 2147483648
      %v977 = vxor.u32 %v939, 2147483648
      %v978 = vxor.u32 %v942, 2147483648
      %v979 = vxor.u32 %v947, 2147483648
      %v980 = vxor.u32 %v950, 2147483648
      %v981 = vxor.u32 %v955, 2147483648
      %v982 = vxor.u32 %v958, 2147483648
      %v983 = vxor.u32 %v963, 2147483648
      %v984 = vxor.u32 %v966, 2147483648
      %v985 = vmul.f32 %v969, 1.442695
      %v986 = vpow.pop %v985
      %v987 = vmul.f32 %v970, 1.442695
      %v988 = vpow.pop %v987
      %v989 = vmul.f32 %v971, 1.442695
      %v990 = vpow.pop %v989
      %v991 = vmul.f32 %v972, 1.442695
      %v992 = vpow.pop %v991
      %v993 = vmul.f32 %v973, 1.442695
      %v994 = vpow.pop %v993
      %v995 = vmul.f32 %v974, 1.442695
      %v996 = vpow.pop %v995
      %v997 = vmul.f32 %v975, 1.442695
      %v998 = vpow.pop %v997
      %v999 = vmul.f32 %v976, 1.442695
      %v1000 = vpow.pop %v999
      %v1001 = vmul.f32 %v977, 1.442695
      %v1002 = vpow.pop %v1001
      %v1003 = vmul.f32 %v978, 1.442695
      %v1004 = vpow.pop %v1003
      %v1005 = vmul.f32 %v979, 1.442695
      %v1006 = vpow.pop %v1005
      %v1007 = vmul.f32 %v980, 1.442695
      %v1008 = vpow.pop %v1007
      %v1009 = vmul.f32 %v981, 1.442695
      %v1010 = vpow.pop %v1009
      %v1011 = vmul.f32 %v982, 1.442695
      %v1012 = vpow.pop %v1011
      %v1013 = vmul.f32 %v983, 1.442695
      %v1014 = vpow.pop %v1013
      %v1015 = vmul.f32 %v984, 1.442695
      %v1016 = vpow.pop %v1015
      %v1017 = vadd.f32 %v986, 1.0
      %v1018 = vadd.f32 %v988, 1.0
      %v1019 = vadd.f32 %v990, 1.0
      %v1020 = vadd.f32 %v992, 1.0
      %v1021 = vadd.f32 %v994, 1.0
      %v1022 = vadd.f32 %v996, 1.0
      %v1023 = vadd.f32 %v998, 1.0
      %v1024 = vadd.f32 %v1000, 1.0
      %v1025 = vadd.f32 %v1002, 1.0
      %v1026 = vadd.f32 %v1004, 1.0
      %v1027 = vadd.f32 %v1006, 1.0
      %v1028 = vadd.f32 %v1008, 1.0
      %v1029 = vadd.f32 %v1010, 1.0
      %v1030 = vadd.f32 %v1012, 1.0
      %v1031 = vadd.f32 %v1014, 1.0
      %v1032 = vadd.f32 %v1016, 1.0
      %v1033 = vrcp.pop %v1017
      %v1034 = vmul.f32 1.0, %v1033
      %v1035 = vrcp.pop %v1018
      %v1036 = vmul.f32 1.0, %v1035
      %v1037 = vrcp.pop %v1019
      %v1038 = vmul.f32 1.0, %v1037
      %v1039 = vrcp.pop %v1020
      %v1040 = vmul.f32 1.0, %v1039
      %v1041 = vrcp.pop %v1021
      %v1042 = vmul.f32 1.0, %v1041
      %v1043 = vrcp.pop %v1022
      %v1044 = vmul.f32 1.0, %v1043
      %v1045 = vrcp.pop %v1023
      %v1046 = vmul.f32 1.0, %v1045
      %v1047 = vrcp.pop %v1024
      %v1048 = vmul.f32 1.0, %v1047
      %v1049 = vrcp.pop %v1025
      %v1050 = vmul.f32 1.0, %v1049
      %v1051 = vrcp.pop %v1026
      %v1052 = vmul.f32 1.0, %v1051
      %v1053 = vrcp.pop %v1027
      %v1054 = vmul.f32 1.0, %v1053
      %v1055 = vrcp.pop %v1028
      %v1056 = vmul.f32 1.0, %v1055
      %v1057 = vrcp.pop %v1029
      %v1058 = vmul.f32 1.0, %v1057
      %v1059 = vrcp.pop %v1030
      %v1060 = vmul.f32 1.0, %v1059
      %v1061 = vrcp.pop %v1031
      %v1062 = vmul.f32 1.0, %v1061
      %v1063 = vrcp.pop %v1032
      %v1064 = vmul.f32 1.0, %v1063
      %vm1065 = vcmask 31744
      %1066 = vst.msk [vmem:[%s280] sm:$0xff] %vm1065, %v1034
      %1067 = vst.msk [vmem:[%s280 + $0x8] sm:$0xff] %vm1065, %v1036
      %1068 = vst.msk [vmem:[%s280 + $0x10] sm:$0xff] %vm1065, %v1038
      %1069 = vst.msk [vmem:[%s280 + $0x18] sm:$0xff] %vm1065, %v1040
      %1070 = vst.msk [vmem:[%s280 + $0x20] sm:$0xff] %vm1065, %v1042
      %1071 = vst.msk [vmem:[%s280 + $0x28] sm:$0xff] %vm1065, %v1044
      %1072 = vst.msk [vmem:[%s280 + $0x30] sm:$0xff] %vm1065, %v1046
      %1073 = vst.msk [vmem:[%s280 + $0x38] sm:$0xff] %vm1065, %v1048
      %1074 = vst.msk [vmem:[%s280 + $0x40] sm:$0xff] %vm1065, %v1050
      %1075 = vst.msk [vmem:[%s280 + $0x48] sm:$0xff] %vm1065, %v1052
      %1076 = vst.msk [vmem:[%s280 + $0x50] sm:$0xff] %vm1065, %v1054
      %1077 = vst.msk [vmem:[%s280 + $0x58] sm:$0xff] %vm1065, %v1056
      %1078 = vst.msk [vmem:[%s280 + $0x60] sm:$0xff] %vm1065, %v1058
      %1079 = vst.msk [vmem:[%s280 + $0x68] sm:$0xff] %vm1065, %v1060
      %1080 = vst.msk [vmem:[%s280 + $0x70] sm:$0xff] %vm1065, %v1062
      %1081 = vst.msk [vmem:[%s280 + $0x78] sm:$0xff] %vm1065, %v1064
      %s1082 = smul.u32 16, %s18
      %p1083 = scmp.lt.s32.totalorder %s1082, 31
      %s1084 = scalar_select %p1083, %s1082, 31
      %s1085 = smul.addr %s1084, 8
      %s1086 = scalar_lea.vmem %s7, %s1085
      // Predicated region
      $region49: #{anet_forward.5} parent=47 // pred_check
        %p1087 = pneg %p188
      $region50: #{anet_forward.5} parent=47 // pred_check_branch
        %1089 = sbr.rel (%p1087) target = $region52
      $region51: #{anet_forward.5} parent=47 // pred_region
        %s1090 = smul.u32 16, %s18
      $region52: #{anet_forward.5} parent=47 // pred_fallthru
        _
    $region48: #{anet_forward.5} parent=5 // pred_fallthru
      _
    %p1091 = scmp.le.s32.totalorder 2, %s13
    // Predicated region
    $region53: #{anet_forward.5} parent=5 // pred_check
      %p1092 = pneg %p1091
    $region54: #{anet_forward.5} parent=5 // pred_check_branch
      %1094 = sbr.rel (%p1092) target = $region56
    $region55: #{anet_forward.5} parent=5 // pred_region
      %s1095 = ssub.s32 %s13, 2
      // Predicated region
      $region57: #{anet_forward.5} parent=55 // pred_check
        %p1096 = pneg %p194
      $region58: #{anet_forward.5} parent=55 // pred_check_branch
        %1098 = sbr.rel (%p1096) target = $region60
      $region59: #{anet_forward.5} parent=55 // pred_region
        %s1099 = smul.u32 16, %s19
        %p1100 = scmp.lt.s32.totalorder %s1099, 31
        %s1101 = scalar_select %p1100, %s1099, 31
        %s1102 = smul.addr %s1101, 8
        %s1103 = scalar_lea.vmem %s7, %s1102
      $region60: #{anet_forward.5} parent=55 // pred_fallthru
        _
    $region56: #{anet_forward.5} parent=5 // pred_fallthru
      _
  $region6: #{anet_forward.5} parent=0 // loop_footer
    %s17 = sadd.s32 1, %s13
  $region7: #{anet_forward.5} parent=0 // loop_footer_branch
    %12 = sbr.rel target = $region3
  $region8: #{anet_forward.5} parent=0 // loop_exit
    _

</llo_original>
